<compile_context>
chip_gen: v7x
topology: tpu7x:2x2x1
jax: 0.10.0
libtpu: 0.0.40
codegen_flags: <defaults>
</compile_context>

<pallas_src>
import math
from functools import partial

import numpy as np
import jax
import jax.numpy as jnp
from jax.experimental import pallas as pl
from jax.experimental.pallas import tpu as pltpu

SSD_ANCHOR_OPTIONS = {
    'num_layers': 4, 'min_scale': 0.1484375, 'max_scale': 0.75,
    'input_size_height': 128, 'input_size_width': 128,
    'anchor_offset_x': 0.5, 'anchor_offset_y': 0.5,
    'strides': [8, 16, 16, 16], 'aspect_ratios': [1.0],
    'reduce_boxes_in_lowest_layer': False,
    'interpolated_scale_aspect_ratio': 1.0, 'fixed_anchor_size': True,
}

NUM_CLASSES = 1
NUM_BOXES = 896
NUM_COORDS = 18
X_SCALE = Y_SCALE = W_SCALE = H_SCALE = 128.0
C1, C2 = 32, 64      # surrogate backbone widths
HEAD_N = 128         # lane-dense padded head width
P8, P16 = 256, 64    # positions per head (16x16 and 8x8 maps)
A8, A16 = 2, 6       # anchors per position
CHUNK = 64           # rows per 16x16-map chunk (= one 2x2 offset group)


# ----------------------------------------------------------------------------
# Anchor generation (MediaPipe SsdAnchorsCalculator) -- plain Python glue.
# ----------------------------------------------------------------------------
def _calc_scale(mn, mx, idx, n):
    if n == 1:
        return (mn + mx) * 0.5
    return mn + (mx - mn) * idx / (n - 1.0)


def generate_anchors(opt):
    anchors = []
    nl = opt['num_layers']
    strides = opt['strides']
    layer_id = 0
    while layer_id < nl:
        ar_list, sc_list = [], []
        last = layer_id
        while last < nl and strides[last] == strides[layer_id]:
            scale = _calc_scale(opt['min_scale'], opt['max_scale'], last, nl)
            if last == 0 and opt['reduce_boxes_in_lowest_layer']:
                ar_list += [1.0, 2.0, 0.5]
                sc_list += [0.1, scale, scale]
            else:
                for ar in opt['aspect_ratios']:
                    ar_list.append(ar)
                    sc_list.append(scale)
                if opt['interpolated_scale_aspect_ratio'] > 0.0:
                    nxt = 1.0 if last == nl - 1 else _calc_scale(
                        opt['min_scale'], opt['max_scale'], last + 1, nl)
                    sc_list.append(math.sqrt(scale * nxt))
                    ar_list.append(opt['interpolated_scale_aspect_ratio'])
            last += 1
        aw, ah = [], []
        for s, ar in zip(sc_list, ar_list):
            r = math.sqrt(ar)
            ah.append(s / r)
            aw.append(s * r)
        stride = strides[layer_id]
        fh = int(math.ceil(opt['input_size_height'] / stride))
        fw = int(math.ceil(opt['input_size_width'] / stride))
        for y in range(fh):
            for x in range(fw):
                for a in range(len(aw)):
                    xc = (x + opt['anchor_offset_x']) / fw
                    yc = (y + opt['anchor_offset_y']) / fh
                    if opt['fixed_anchor_size']:
                        anchors.append([xc, yc, 1.0, 1.0])
                    else:
                        anchors.append([xc, yc, aw[a], ah[a]])
        layer_id = last
    return np.asarray(anchors, dtype=np.float32)


# ----------------------------------------------------------------------------
# Precomputed decode / layout constants (built once with numpy, never traced).
# ----------------------------------------------------------------------------
def _head_mul_off(anchors_np, anchor_start, num_pos, anchors_per_pos):
    """Per-position decode tables matching the padded head column layout:
    cols [0:A) raw scores (pass through), cols [A + a*18 + c] reg coords."""
    mul = np.zeros((num_pos, HEAD_N), np.float32)
    off = np.zeros((num_pos, HEAD_N), np.float32)
    mul[:, :anchors_per_pos] = 1.0
    for p in range(num_pos):
        for a in range(anchors_per_pos):
            A = anchor_start + p * anchors_per_pos + a
            ax, ay, aw, ah = anchors_np[A]
            base = anchors_per_pos + a * NUM_COORDS
            for c in range(NUM_COORDS):
                if c == 2:
                    m, o = aw / W_SCALE, 0.0
                elif c == 3:
                    m, o = ah / H_SCALE, 0.0
                elif c % 2 == 0:
                    m, o = aw / X_SCALE, ax
                else:
                    m, o = ah / Y_SCALE, ay
                mul[p, base + c] = m
                off[p, base + c] = o
    return mul, off


def _head_box_matrix(anchors_per_pos):
    """128x128 constant applied on the MXU: identity on score cols and, per
    anchor group, the (xc,yc,w,h,kp..) -> (ymin,xmin,ymax,xmax,kp..) mix.
    Kept f32 so decoded box coordinates stay at f32 precision."""
    T = np.zeros((NUM_COORDS, NUM_COORDS), np.float32)
    T[1, 0], T[3, 0] = 1.0, -0.5      # ymin = yc - h/2
    T[0, 1], T[2, 1] = 1.0, -0.5      # xmin = xc - w/2
    T[1, 2], T[3, 2] = 1.0, 0.5       # ymax = yc + h/2
    T[0, 3], T[2, 3] = 1.0, 0.5       # xmax = xc + w/2
    for c in range(4, NUM_COORDS):
        T[c, c] = 1.0                  # keypoints pass through
    R = np.zeros((HEAD_N, HEAD_N), np.float32)
    for a in range(anchors_per_pos):
        R[a, a] = 1.0
        b0 = anchors_per_pos + a * NUM_COORDS
        R[b0:b0 + NUM_COORDS, b0:b0 + NUM_COORDS] = T
    return R


def _block_major_perm():
    """Row permutation mapping kernel row (k*64 + y*8 + x), k = 2*dy + dx, to
    the original row-major 16x16 position index (2y+dy)*16 + (2x+dx)."""
    perm = np.empty(P8, np.int64)
    for k in range(4):
        dy, dx = k // 2, k % 2
        for y in range(8):
            for x in range(8):
                perm[k * 64 + y * 8 + x] = (2 * y + dy) * 16 + (2 * x + dx)
    return perm


def make_constants(anchors_np):
    mul8, off8 = _head_mul_off(anchors_np, 0, P8, A8)
    perm = _block_major_perm()
    mul8, off8 = mul8[perm], off8[perm]       # rows in the kernel's 2x2-block-major order
    mul16, off16 = _head_mul_off(anchors_np, P8 * A8, P16, A16)
    return {
        'mul8': jnp.asarray(mul8), 'off8': jnp.asarray(off8),
        'r8': jnp.asarray(_head_box_matrix(A8)),
        'mul16': jnp.asarray(mul16), 'off16': jnp.asarray(off16),
        'r16': jnp.asarray(_head_box_matrix(A16)),
    }


# ----------------------------------------------------------------------------
# The single fused Pallas kernel: backbone -> heads -> decode, all in VMEM.
# ----------------------------------------------------------------------------
def _fused_kernel(x1_ref, we_ref, be_ref, wd_ref, bd_ref,
                  wh8_ref, bh8_ref, wh16_ref, bh16_ref,
                  mul8_ref, off8_ref, r8_ref, mul16_ref, off16_ref, r16_ref,
                  out8_ref, out16_ref):
    f32 = jnp.float32
    bf16 = jnp.bfloat16
    BB = x1_ref.shape[0]                      # images folded into this grid step

    # Score-column masks: iota computed once per grid step (hoisted out of decode).
    col = jax.lax.broadcasted_iota(jnp.int32, (1, HEAD_N), 1)
    mask8 = col < A8
    mask16 = col < A16

    # Small bf16 weights / f32 biases hoisted out of all loops (~15 vregs).
    we, wd = we_ref[...], wd_ref[...]
    wh8, wh16 = wh8_ref[...], wh16_ref[...]
    be, bd = be_ref[...], bd_ref[...]
    bh8, bh16 = bh8_ref[...], bh16_ref[...]

    def decode(h, mul, off, r_ref, mask):
        d = h * mul + off                                    # anchor decode (VPU, f32)
        e = jnp.dot(d, r_ref[...], preferred_element_type=f32)  # box corner mix (MXU, f32)
        s = pl.reciprocal(1.0 + jnp.exp(-e), approx=True)    # sigmoid: EUP exp + EUP rcp
        return jnp.where(mask, s, e)                         # sigmoid only on score cols

    for bb in range(BB):                                     # static unroll over batch block
        acc = jnp.zeros((P16, C2), f32)
        # k indexes the 2x2 downsample offset (dy,dx) = (k//2, k%2); rows are
        # contiguous because the wrapper emitted x1 in 2x2-block-major order.
        for k in range(4):                                   # static unroll
            rows = pl.ds(k * CHUNK, CHUNK)
            xk = x1_ref[bb, rows, :]                         # (64,192) bf16
            f1k = jnp.maximum(
                jnp.dot(xk, we, preferred_element_type=f32) + be, 0.0)   # (64,C1) f32
            f1k_b = f1k.astype(bf16)
            # Downsample contribution: one K=C1 accumulating matmul per offset.
            acc = acc + jnp.dot(f1k_b, wd[k * C1:(k + 1) * C1, :],
                                preferred_element_type=f32)
            # 16x16-map head + decode for this 64-row chunk (bounded live set).
            h8k = jnp.dot(f1k_b, wh8, preferred_element_type=f32) + bh8  # (64,128)
            out8_ref[bb, rows, :] = decode(
                h8k, mul8_ref[rows, :], off8_ref[rows, :], r8_ref, mask8)

        f2 = jnp.maximum(acc + bd, 0.0)                      # (64,C2) f32
        h16 = jnp.dot(f2.astype(bf16), wh16, preferred_element_type=f32) + bh16
        out16_ref[bb, :, :] = decode(
            h16, mul16_ref[...], off16_ref[...], r16_ref, mask16)


# ----------------------------------------------------------------------------
# Params (deterministic surrogate backbone weights, heads pre-merged/padded).
# ----------------------------------------------------------------------------
# TODO(synk): the exact BlazePalm backbone (depthwise BlazeBlocks) is imported,
# not defined, in the reference module; we use a deterministic stride-8 /
# stride-16 patch-conv surrogate with the identical head & anchor interface
# (16x16 map * 2 anchors + 8x8 map * 6 anchors = 896 boxes, 18 coords).
def init_params(key):
    ks = jax.random.split(key, 6)

    def w(k, shape, scale=0.05):
        return jax.random.normal(k, shape, jnp.float32) * scale

    w_cls8 = w(ks[2], (C1, A8 * NUM_CLASSES))
    w_reg8 = w(ks[3], (C1, A8 * NUM_COORDS))
    w_cls16 = w(ks[4], (C2, A16 * NUM_CLASSES))
    w_reg16 = w(ks[5], (C2, A16 * NUM_COORDS))
    w_h8 = (jnp.zeros((C1, HEAD_N), jnp.float32)
            .at[:, 0:A8].set(w_cls8)
            .at[:, A8:A8 + A8 * NUM_COORDS].set(w_reg8))
    w_h16 = (jnp.zeros((C2, HEAD_N), jnp.float32)
             .at[:, 0:A16].set(w_cls16)
             .at[:, A16:A16 + A16 * NUM_COORDS].set(w_reg16))
    return {
        'w_embed': w(ks[0], (8 * 8 * 3, C1)),
        'b_embed': jnp.zeros((1, C1), jnp.float32),
        # rows [k*C1:(k+1)*C1] <-> 2x2 patch offset (dy,dx) = (k//2, k%2)
        'w_down': w(ks[1], (2 * 2 * C1, C2)),
        'b_down': jnp.zeros((1, C2), jnp.float32),
        'w_h8': w_h8, 'b_h8': jnp.zeros((1, HEAD_N), jnp.float32),
        'w_h16': w_h16, 'b_h16': jnp.zeros((1, HEAD_N), jnp.float32),
    }


# ----------------------------------------------------------------------------
# Forward: one pallas_call + cheap XLA layout ops for the final (B,896,*) view.
# ----------------------------------------------------------------------------
def hand_detection(params, consts, image):
    # IMAGE_NORMALIZE = False, NO_DECODE = False (per the module constants).
    B = image.shape[0]
    x = jnp.transpose(image, (0, 2, 3, 1))                   # NHWC
    # Stride-8 patches in 2x2-block-major order: row = (2*dy+dx)*64 + y*8 + x
    # maps to patch (2y+dy, 2x+dx); feature = (py*8+px)*3 + c.  Emitted in
    # bf16 so the relayout writes/reads half the bytes.
    x1 = x.reshape(B, 8, 2, 8, 8, 2, 8, 3)                   # b, y,dy,py, x,dx,px, c
    x1 = x1.transpose(0, 2, 5, 1, 4, 3, 6, 7)                # b, dy,dx, y,x, py,px, c
    x1 = x1.reshape(B, P8, 8 * 8 * 3).astype(jnp.bfloat16)

    # At most a 2-wide "parallel" grid over batch halves: both v7x TensorCores
    # stay busy, and v5e/v6e see at most 2 grid steps regardless of B.
    if B % 2 == 0:
        n_steps, bb = 2, B // 2
    else:
        n_steps, bb = B, 1

    # bf16 matmul operands (constant-folded under jit); biases/decode stay f32.
    w_embed = params['w_embed'].astype(jnp.bfloat16)
    w_down = params['w_down'].astype(jnp.bfloat16)
    w_h8 = params['w_h8'].astype(jnp.bfloat16)
    w_h16 = params['w_h16'].astype(jnp.bfloat16)

    out8, out16 = pl.pallas_call(
        _fused_kernel,
        out_shape=(
            jax.ShapeDtypeStruct((B, P8, HEAD_N), jnp.float32),
            jax.ShapeDtypeStruct((B, P16, HEAD_N), jnp.float32),
        ),
        grid=(n_steps,),
        in_specs=[
            pl.BlockSpec((bb, P8, 192), lambda b: (b, 0, 0)),     # x1 patches (bf16)
            pl.BlockSpec((192, C1), lambda b: (0, 0)),            # w_embed (bf16)
            pl.BlockSpec((1, C1), lambda b: (0, 0)),              # b_embed (f32)
            pl.BlockSpec((4 * C1, C2), lambda b: (0, 0)),         # w_down (bf16)
            pl.BlockSpec((1, C2), lambda b: (0, 0)),              # b_down (f32)
            pl.BlockSpec((C1, HEAD_N), lambda b: (0, 0)),         # w_h8 (bf16)
            pl.BlockSpec((1, HEAD_N), lambda b: (0, 0)),          # b_h8 (f32)
            pl.BlockSpec((C2, HEAD_N), lambda b: (0, 0)),         # w_h16 (bf16)
            pl.BlockSpec((1, HEAD_N), lambda b: (0, 0)),          # b_h16 (f32)
            pl.BlockSpec((P8, HEAD_N), lambda b: (0, 0)),         # mul8 (f32, permuted)
            pl.BlockSpec((P8, HEAD_N), lambda b: (0, 0)),         # off8 (f32, permuted)
            pl.BlockSpec((HEAD_N, HEAD_N), lambda b: (0, 0)),     # r8 (f32)
            pl.BlockSpec((P16, HEAD_N), lambda b: (0, 0)),        # mul16 (f32)
            pl.BlockSpec((P16, HEAD_N), lambda b: (0, 0)),        # off16 (f32)
            pl.BlockSpec((HEAD_N, HEAD_N), lambda b: (0, 0)),     # r16 (f32)
        ],
        out_specs=(
            pl.BlockSpec((bb, P8, HEAD_N), lambda b: (b, 0, 0)),
            pl.BlockSpec((bb, P16, HEAD_N), lambda b: (b, 0, 0)),
        ),
        compiler_params=pltpu.CompilerParams(dimension_semantics=("parallel",)),
    )(x1, w_embed, params['b_embed'], w_down, params['b_down'],
      w_h8, params['b_h8'], w_h16, params['b_h16'],
      consts['mul8'], consts['off8'], consts['r8'],
      consts['mul16'], consts['off16'], consts['r16'])

    # Pure-layout XLA ops: un-permute the block-major 16x16-map rows back to
    # row-major position order, then slice padded columns into the anchor-major
    # (B, 896, 1) / (B, 896, 18) outputs (MediaPipe ordering preserved).
    o8 = (out8.reshape(B, 2, 2, 8, 8, HEAD_N)
              .transpose(0, 3, 1, 4, 2, 5)                   # (b, y, dy, x, dx, N)
              .reshape(B, P8, HEAD_N))
    score = jnp.concatenate(
        [o8[:, :, 0:A8].reshape(B, P8 * A8, NUM_CLASSES),
         out16[:, :, 0:A16].reshape(B, P16 * A16, NUM_CLASSES)], axis=1)
    box = jnp.concatenate(
        [o8[:, :, A8:A8 + A8 * NUM_COORDS].reshape(B, P8 * A8, NUM_COORDS),
         out16[:, :, A16:A16 + A16 * NUM_COORDS].reshape(B, P16 * A16, NUM_COORDS)],
        axis=1)
    return score, box


if __name__ == "__main__":
    anchors_np = generate_anchors(SSD_ANCHOR_OPTIONS)
    assert anchors_np.shape == (NUM_BOXES, 4), anchors_np.shape

    consts = make_constants(anchors_np)
    params = init_params(jax.random.PRNGKey(42))

    key = jax.random.PRNGKey(0)
    image = jax.random.uniform(key, (2, 3, 128, 128), jnp.float32, 0.0, 255.0)

    fwd = jax.jit(partial(hand_detection, params, consts))
    score, box = fwd(image)
    jax.block_until_ready((score, box))

    assert score.shape == (2, NUM_BOXES, NUM_CLASSES), score.shape
    assert box.shape == (2, NUM_BOXES, NUM_COORDS), box.shape
    assert bool(jnp.all(jnp.isfinite(score))) and bool(jnp.all(jnp.isfinite(box)))
    print("KERNEL_OK")
</pallas_src>

<mosaic_0001>
module attributes {stable_mosaic.version = 11 : i64} {
  func.func @_fused_kernel(%arg0: i32, %arg1: memref<1x256x192xbf16, #tpu.memory_space<vmem>>, %arg2: memref<192x32xbf16, #tpu.memory_space<vmem>>, %arg3: memref<1x32xf32, #tpu.memory_space<vmem>>, %arg4: memref<128x64xbf16, #tpu.memory_space<vmem>>, %arg5: memref<1x64xf32, #tpu.memory_space<vmem>>, %arg6: memref<32x128xbf16, #tpu.memory_space<vmem>>, %arg7: memref<1x128xf32, #tpu.memory_space<vmem>>, %arg8: memref<64x128xbf16, #tpu.memory_space<vmem>>, %arg9: memref<1x128xf32, #tpu.memory_space<vmem>>, %arg10: memref<256x128xf32, #tpu.memory_space<vmem>>, %arg11: memref<256x128xf32, #tpu.memory_space<vmem>>, %arg12: memref<128x128xf32, #tpu.memory_space<vmem>>, %arg13: memref<64x128xf32, #tpu.memory_space<vmem>>, %arg14: memref<64x128xf32, #tpu.memory_space<vmem>>, %arg15: memref<128x128xf32, #tpu.memory_space<vmem>>, %arg16: memref<1x256x128xf32, #tpu.memory_space<vmem>>, %arg17: memref<1x64x128xf32, #tpu.memory_space<vmem>>) attributes {dimension_semantics = [#tpu.dimension_semantics<parallel>], iteration_bounds = array<i64: 2>, scalar_prefetch = 0 : i64, scratch_operands = 0 : i64, tpu.core_type = #tpu.core_type<tc>, window_params = [{transform_indices = @transform_0, window_bounds = array<i64: 1, 256, 192>}, {pipeline_mode = #tpu.pipeline_mode<synchronous>, transform_indices = @transform_1, window_bounds = array<i64: 192, 32>}, {pipeline_mode = #tpu.pipeline_mode<synchronous>, transform_indices = @transform_2, window_bounds = array<i64: 1, 32>}, {pipeline_mode = #tpu.pipeline_mode<synchronous>, transform_indices = @transform_3, window_bounds = array<i64: 128, 64>}, {pipeline_mode = #tpu.pipeline_mode<synchronous>, transform_indices = @transform_4, window_bounds = array<i64: 1, 64>}, {pipeline_mode = #tpu.pipeline_mode<synchronous>, transform_indices = @transform_5, window_bounds = array<i64: 32, 128>}, {pipeline_mode = #tpu.pipeline_mode<synchronous>, transform_indices = @transform_6, window_bounds = array<i64: 1, 128>}, {pipeline_mode = #tpu.pipeline_mode<synchronous>, transform_indices = @transform_7, window_bounds = array<i64: 64, 128>}, {pipeline_mode = #tpu.pipeline_mode<synchronous>, transform_indices = @transform_8, window_bounds = array<i64: 1, 128>}, {pipeline_mode = #tpu.pipeline_mode<synchronous>, transform_indices = @transform_9, window_bounds = array<i64: 256, 128>}, {pipeline_mode = #tpu.pipeline_mode<synchronous>, transform_indices = @transform_10, window_bounds = array<i64: 256, 128>}, {pipeline_mode = #tpu.pipeline_mode<synchronous>, transform_indices = @transform_11, window_bounds = array<i64: 128, 128>}, {pipeline_mode = #tpu.pipeline_mode<synchronous>, transform_indices = @transform_12, window_bounds = array<i64: 64, 128>}, {pipeline_mode = #tpu.pipeline_mode<synchronous>, transform_indices = @transform_13, window_bounds = array<i64: 64, 128>}, {pipeline_mode = #tpu.pipeline_mode<synchronous>, transform_indices = @transform_14, window_bounds = array<i64: 128, 128>}, {transform_indices = @transform_15, window_bounds = array<i64: 1, 256, 128>}, {transform_indices = @transform_16, window_bounds = array<i64: 1, 64, 128>}]} {
    %0 = tpu.iota {dimensions = array<i32: 1>} : vector<1x128xi32>
    %c2_i32 = arith.constant 2 : i32
    %1 = vector.broadcast %c2_i32 : i32 to vector<1x128xi32>
    %2 = arith.cmpi slt, %0, %1 : vector<1x128xi32>
    %c6_i32 = arith.constant 6 : i32
    %3 = vector.broadcast %c6_i32 : i32 to vector<1x128xi32>
    %4 = arith.cmpi slt, %0, %3 : vector<1x128xi32>
    %c0 = arith.constant 0 : index
    %c0_0 = arith.constant 0 : index
    %5 = vector.load %arg2[%c0, %c0_0] : memref<192x32xbf16, #tpu.memory_space<vmem>>, vector<192x32xbf16>
    %c0_1 = arith.constant 0 : index
    %c0_2 = arith.constant 0 : index
    %6 = vector.load %arg4[%c0_1, %c0_2] : memref<128x64xbf16, #tpu.memory_space<vmem>>, vector<128x64xbf16>
    %c0_3 = arith.constant 0 : index
    %c0_4 = arith.constant 0 : index
    %7 = vector.load %arg6[%c0_3, %c0_4] : memref<32x128xbf16, #tpu.memory_space<vmem>>, vector<32x128xbf16>
    %c0_5 = arith.constant 0 : index
    %c0_6 = arith.constant 0 : index
    %8 = vector.load %arg8[%c0_5, %c0_6] : memref<64x128xbf16, #tpu.memory_space<vmem>>, vector<64x128xbf16>
    %c0_7 = arith.constant 0 : index
    %c0_8 = arith.constant 0 : index
    %9 = vector.load %arg3[%c0_7, %c0_8] : memref<1x32xf32, #tpu.memory_space<vmem>>, vector<1x32xf32>
    %c0_9 = arith.constant 0 : index
    %c0_10 = arith.constant 0 : index
    %10 = vector.load %arg5[%c0_9, %c0_10] : memref<1x64xf32, #tpu.memory_space<vmem>>, vector<1x64xf32>
    %c0_11 = arith.constant 0 : index
    %c0_12 = arith.constant 0 : index
    %11 = vector.load %arg7[%c0_11, %c0_12] : memref<1x128xf32, #tpu.memory_space<vmem>>, vector<1x128xf32>
    %c0_13 = arith.constant 0 : index
    %c0_14 = arith.constant 0 : index
    %12 = vector.load %arg9[%c0_13, %c0_14] : memref<1x128xf32, #tpu.memory_space<vmem>>, vector<1x128xf32>
    %cst = arith.constant 0.000000e+00 : f32
    %13 = vector.broadcast %cst : f32 to vector<64x64xf32>
    %c0_15 = arith.constant 0 : index
    %c0_16 = arith.constant 0 : index
    %c0_17 = arith.constant 0 : index
    %14 = vector.load %arg1[%c0_15, %c0_16, %c0_17] : memref<1x256x192xbf16, #tpu.memory_space<vmem>>, vector<1x64x192xbf16>
    %15 = vector.shape_cast %14 : vector<1x64x192xbf16> to vector<64x192xbf16>
    %cst_18 = arith.constant dense<0.000000e+00> : vector<64x32xf32>
    %16 = tpu.matmul %15, %5, %cst_18 {dimension_numbers = #tpu.dot_dimension_numbers<[1], [0], [0], [1], [0, 0, 1, 1], [], []>} : vector<64x192xbf16>, vector<192x32xbf16>, vector<64x32xf32> -> vector<64x32xf32>
    %17 = vector.broadcast %9 : vector<1x32xf32> to vector<64x32xf32>
    %18 = arith.addf %16, %17 : vector<64x32xf32>
    %cst_19 = arith.constant 0.000000e+00 : f32
    %19 = vector.broadcast %cst_19 : f32 to vector<64x32xf32>
    %20 = arith.maximumf %18, %19 : vector<64x32xf32>
    %21 = arith.truncf %20 : vector<64x32xf32> to vector<64x32xbf16>
    %22 = vector.extract_strided_slice %6 {offsets = [0, 0], sizes = [32, 64], strides = [1, 1]} : vector<128x64xbf16> to vector<32x64xbf16>
    %cst_20 = arith.constant dense<0.000000e+00> : vector<64x64xf32>
    %23 = tpu.matmul %21, %22, %cst_20 {dimension_numbers = #tpu.dot_dimension_numbers<[1], [0], [0], [1], [0, 0, 1, 1], [], []>} : vector<64x32xbf16>, vector<32x64xbf16>, vector<64x64xf32> -> vector<64x64xf32>
    %24 = arith.addf %13, %23 : vector<64x64xf32>
    %cst_21 = arith.constant dense<0.000000e+00> : vector<64x128xf32>
    %25 = tpu.matmul %21, %7, %cst_21 {dimension_numbers = #tpu.dot_dimension_numbers<[1], [0], [0], [1], [0, 0, 1, 1], [], []>} : vector<64x32xbf16>, vector<32x128xbf16>, vector<64x128xf32> -> vector<64x128xf32>
    %26 = vector.broadcast %11 : vector<1x128xf32> to vector<64x128xf32>
    %27 = arith.addf %25, %26 : vector<64x128xf32>
    %c0_22 = arith.constant 0 : index
    %c0_23 = arith.constant 0 : index
    %28 = vector.load %arg10[%c0_22, %c0_23] : memref<256x128xf32, #tpu.memory_space<vmem>>, vector<64x128xf32>
    %c0_24 = arith.constant 0 : index
    %c0_25 = arith.constant 0 : index
    %29 = vector.load %arg11[%c0_24, %c0_25] : memref<256x128xf32, #tpu.memory_space<vmem>>, vector<64x128xf32>
    %30 = arith.mulf %27, %28 : vector<64x128xf32>
    %31 = arith.addf %30, %29 : vector<64x128xf32>
    %c0_26 = arith.constant 0 : index
    %c0_27 = arith.constant 0 : index
    %32 = vector.load %arg12[%c0_26, %c0_27] : memref<128x128xf32, #tpu.memory_space<vmem>>, vector<128x128xf32>
    %cst_28 = arith.constant dense<0.000000e+00> : vector<64x128xf32>
    %33 = tpu.matmul %31, %32, %cst_28 {dimension_numbers = #tpu.dot_dimension_numbers<[1], [0], [0], [1], [0, 0, 1, 1], [], []>} : vector<64x128xf32>, vector<128x128xf32>, vector<64x128xf32> -> vector<64x128xf32>
    %cst_29 = arith.constant 0.000000e+00 : f32
    %34 = vector.broadcast %cst_29 : f32 to vector<64x128xf32>
    %35 = arith.subf %34, %33 : vector<64x128xf32>
    %36 = math.exp %35 : vector<64x128xf32>
    %cst_30 = arith.constant 1.000000e+00 : f32
    %37 = vector.broadcast %cst_30 : f32 to vector<64x128xf32>
    %38 = arith.addf %37, %36 : vector<64x128xf32>
    %39 = tpu.reciprocal %38 {approx = true} : vector<64x128xf32> -> vector<64x128xf32>
    %40 = vector.shape_cast %2 : vector<1x128xi1> to vector<1x128xi1>
    %41 = vector.broadcast %40 : vector<1x128xi1> to vector<64x128xi1>
    %42 = arith.select %41, %39, %33 : vector<64x128xi1>, vector<64x128xf32>
    %c0_31 = arith.constant 0 : index
    %c0_32 = arith.constant 0 : index
    %c0_33 = arith.constant 0 : index
    %43 = vector.load %arg16[%c0_31, %c0_32, %c0_33] : memref<1x256x128xf32, #tpu.memory_space<vmem>>, vector<1x64x128xf32>
    %44 = vector.shape_cast %43 : vector<1x64x128xf32> to vector<64x128xf32>
    %45 = vector.shape_cast %42 : vector<64x128xf32> to vector<1x64x128xf32>
    tpu.vector_store %arg16[%c0_31, %c0_32, %c0_33], %45 {strides = array<i32>} : memref<1x256x128xf32, #tpu.memory_space<vmem>>, vector<1x64x128xf32>,
    %c0_34 = arith.constant 0 : index
    %c64 = arith.constant 64 : index
    %c0_35 = arith.constant 0 : index
    %46 = vector.load %arg1[%c0_34, %c64, %c0_35] : memref<1x256x192xbf16, #tpu.memory_space<vmem>>, vector<1x64x192xbf16>
    %47 = vector.shape_cast %46 : vector<1x64x192xbf16> to vector<64x192xbf16>
    %cst_36 = arith.constant dense<0.000000e+00> : vector<64x32xf32>
    %48 = tpu.matmul %47, %5, %cst_36 {dimension_numbers = #tpu.dot_dimension_numbers<[1], [0], [0], [1], [0, 0, 1, 1], [], []>} : vector<64x192xbf16>, vector<192x32xbf16>, vector<64x32xf32> -> vector<64x32xf32>
    %49 = vector.broadcast %9 : vector<1x32xf32> to vector<64x32xf32>
    %50 = arith.addf %48, %49 : vector<64x32xf32>
    %cst_37 = arith.constant 0.000000e+00 : f32
    %51 = vector.broadcast %cst_37 : f32 to vector<64x32xf32>
    %52 = arith.maximumf %50, %51 : vector<64x32xf32>
    %53 = arith.truncf %52 : vector<64x32xf32> to vector<64x32xbf16>
    %54 = vector.extract_strided_slice %6 {offsets = [32, 0], sizes = [32, 64], strides = [1, 1]} : vector<128x64xbf16> to vector<32x64xbf16>
    %cst_38 = arith.constant dense<0.000000e+00> : vector<64x64xf32>
    %55 = tpu.matmul %53, %54, %cst_38 {dimension_numbers = #tpu.dot_dimension_numbers<[1], [0], [0], [1], [0, 0, 1, 1], [], []>} : vector<64x32xbf16>, vector<32x64xbf16>, vector<64x64xf32> -> vector<64x64xf32>
    %56 = arith.addf %24, %55 : vector<64x64xf32>
    %cst_39 = arith.constant dense<0.000000e+00> : vector<64x128xf32>
    %57 = tpu.matmul %53, %7, %cst_39 {dimension_numbers = #tpu.dot_dimension_numbers<[1], [0], [0], [1], [0, 0, 1, 1], [], []>} : vector<64x32xbf16>, vector<32x128xbf16>, vector<64x128xf32> -> vector<64x128xf32>
    %58 = vector.broadcast %11 : vector<1x128xf32> to vector<64x128xf32>
    %59 = arith.addf %57, %58 : vector<64x128xf32>
    %c64_40 = arith.constant 64 : index
    %c0_41 = arith.constant 0 : index
    %60 = vector.load %arg10[%c64_40, %c0_41] : memref<256x128xf32, #tpu.memory_space<vmem>>, vector<64x128xf32>
    %c64_42 = arith.constant 64 : index
    %c0_43 = arith.constant 0 : index
    %61 = vector.load %arg11[%c64_42, %c0_43] : memref<256x128xf32, #tpu.memory_space<vmem>>, vector<64x128xf32>
    %62 = arith.mulf %59, %60 : vector<64x128xf32>
    %63 = arith.addf %62, %61 : vector<64x128xf32>
    %c0_44 = arith.constant 0 : index
    %c0_45 = arith.constant 0 : index
    %64 = vector.load %arg12[%c0_44, %c0_45] : memref<128x128xf32, #tpu.memory_space<vmem>>, vector<128x128xf32>
    %cst_46 = arith.constant dense<0.000000e+00> : vector<64x128xf32>
    %65 = tpu.matmul %63, %64, %cst_46 {dimension_numbers = #tpu.dot_dimension_numbers<[1], [0], [0], [1], [0, 0, 1, 1], [], []>} : vector<64x128xf32>, vector<128x128xf32>, vector<64x128xf32> -> vector<64x128xf32>
    %cst_47 = arith.constant 0.000000e+00 : f32
    %66 = vector.broadcast %cst_47 : f32 to vector<64x128xf32>
    %67 = arith.subf %66, %65 : vector<64x128xf32>
    %68 = math.exp %67 : vector<64x128xf32>
    %cst_48 = arith.constant 1.000000e+00 : f32
    %69 = vector.broadcast %cst_48 : f32 to vector<64x128xf32>
    %70 = arith.addf %69, %68 : vector<64x128xf32>
    %71 = tpu.reciprocal %70 {approx = true} : vector<64x128xf32> -> vector<64x128xf32>
    %72 = vector.shape_cast %2 : vector<1x128xi1> to vector<1x128xi1>
    %73 = vector.broadcast %72 : vector<1x128xi1> to vector<64x128xi1>
    %74 = arith.select %73, %71, %65 : vector<64x128xi1>, vector<64x128xf32>
    %c0_49 = arith.constant 0 : index
    %c64_50 = arith.constant 64 : index
    %c0_51 = arith.constant 0 : index
    %75 = vector.load %arg16[%c0_49, %c64_50, %c0_51] : memref<1x256x128xf32, #tpu.memory_space<vmem>>, vector<1x64x128xf32>
    %76 = vector.shape_cast %75 : vector<1x64x128xf32> to vector<64x128xf32>
    %77 = vector.shape_cast %74 : vector<64x128xf32> to vector<1x64x128xf32>
    tpu.vector_store %arg16[%c0_49, %c64_50, %c0_51], %77 {strides = array<i32>} : memref<1x256x128xf32, #tpu.memory_space<vmem>>, vector<1x64x128xf32>,
    %c0_52 = arith.constant 0 : index
    %c128 = arith.constant 128 : index
    %c0_53 = arith.constant 0 : index
    %78 = vector.load %arg1[%c0_52, %c128, %c0_53] : memref<1x256x192xbf16, #tpu.memory_space<vmem>>, vector<1x64x192xbf16>
    %79 = vector.shape_cast %78 : vector<1x64x192xbf16> to vector<64x192xbf16>
    %cst_54 = arith.constant dense<0.000000e+00> : vector<64x32xf32>
    %80 = tpu.matmul %79, %5, %cst_54 {dimension_numbers = #tpu.dot_dimension_numbers<[1], [0], [0], [1], [0, 0, 1, 1], [], []>} : vector<64x192xbf16>, vector<192x32xbf16>, vector<64x32xf32> -> vector<64x32xf32>
    %81 = vector.broadcast %9 : vector<1x32xf32> to vector<64x32xf32>
    %82 = arith.addf %80, %81 : vector<64x32xf32>
    %cst_55 = arith.constant 0.000000e+00 : f32
    %83 = vector.broadcast %cst_55 : f32 to vector<64x32xf32>
    %84 = arith.maximumf %82, %83 : vector<64x32xf32>
    %85 = arith.truncf %84 : vector<64x32xf32> to vector<64x32xbf16>
    %86 = vector.extract_strided_slice %6 {offsets = [64, 0], sizes = [32, 64], strides = [1, 1]} : vector<128x64xbf16> to vector<32x64xbf16>
    %cst_56 = arith.constant dense<0.000000e+00> : vector<64x64xf32>
    %87 = tpu.matmul %85, %86, %cst_56 {dimension_numbers = #tpu.dot_dimension_numbers<[1], [0], [0], [1], [0, 0, 1, 1], [], []>} : vector<64x32xbf16>, vector<32x64xbf16>, vector<64x64xf32> -> vector<64x64xf32>
    %88 = arith.addf %56, %87 : vector<64x64xf32>
    %cst_57 = arith.constant dense<0.000000e+00> : vector<64x128xf32>
    %89 = tpu.matmul %85, %7, %cst_57 {dimension_numbers = #tpu.dot_dimension_numbers<[1], [0], [0], [1], [0, 0, 1, 1], [], []>} : vector<64x32xbf16>, vector<32x128xbf16>, vector<64x128xf32> -> vector<64x128xf32>
    %90 = vector.broadcast %11 : vector<1x128xf32> to vector<64x128xf32>
    %91 = arith.addf %89, %90 : vector<64x128xf32>
    %c128_58 = arith.constant 128 : index
    %c0_59 = arith.constant 0 : index
    %92 = vector.load %arg10[%c128_58, %c0_59] : memref<256x128xf32, #tpu.memory_space<vmem>>, vector<64x128xf32>
    %c128_60 = arith.constant 128 : index
    %c0_61 = arith.constant 0 : index
    %93 = vector.load %arg11[%c128_60, %c0_61] : memref<256x128xf32, #tpu.memory_space<vmem>>, vector<64x128xf32>
    %94 = arith.mulf %91, %92 : vector<64x128xf32>
    %95 = arith.addf %94, %93 : vector<64x128xf32>
    %c0_62 = arith.constant 0 : index
    %c0_63 = arith.constant 0 : index
    %96 = vector.load %arg12[%c0_62, %c0_63] : memref<128x128xf32, #tpu.memory_space<vmem>>, vector<128x128xf32>
    %cst_64 = arith.constant dense<0.000000e+00> : vector<64x128xf32>
    %97 = tpu.matmul %95, %96, %cst_64 {dimension_numbers = #tpu.dot_dimension_numbers<[1], [0], [0], [1], [0, 0, 1, 1], [], []>} : vector<64x128xf32>, vector<128x128xf32>, vector<64x128xf32> -> vector<64x128xf32>
    %cst_65 = arith.constant 0.000000e+00 : f32
    %98 = vector.broadcast %cst_65 : f32 to vector<64x128xf32>
    %99 = arith.subf %98, %97 : vector<64x128xf32>
    %100 = math.exp %99 : vector<64x128xf32>
    %cst_66 = arith.constant 1.000000e+00 : f32
    %101 = vector.broadcast %cst_66 : f32 to vector<64x128xf32>
    %102 = arith.addf %101, %100 : vector<64x128xf32>
    %103 = tpu.reciprocal %102 {approx = true} : vector<64x128xf32> -> vector<64x128xf32>
    %104 = vector.shape_cast %2 : vector<1x128xi1> to vector<1x128xi1>
    %105 = vector.broadcast %104 : vector<1x128xi1> to vector<64x128xi1>
    %106 = arith.select %105, %103, %97 : vector<64x128xi1>, vector<64x128xf32>
    %c0_67 = arith.constant 0 : index
    %c128_68 = arith.constant 128 : index
    %c0_69 = arith.constant 0 : index
    %107 = vector.load %arg16[%c0_67, %c128_68, %c0_69] : memref<1x256x128xf32, #tpu.memory_space<vmem>>, vector<1x64x128xf32>
    %108 = vector.shape_cast %107 : vector<1x64x128xf32> to vector<64x128xf32>
    %109 = vector.shape_cast %106 : vector<64x128xf32> to vector<1x64x128xf32>
    tpu.vector_store %arg16[%c0_67, %c128_68, %c0_69], %109 {strides = array<i32>} : memref<1x256x128xf32, #tpu.memory_space<vmem>>, vector<1x64x128xf32>,
    %c0_70 = arith.constant 0 : index
    %c192 = arith.constant 192 : index
    %c0_71 = arith.constant 0 : index
    %110 = vector.load %arg1[%c0_70, %c192, %c0_71] : memref<1x256x192xbf16, #tpu.memory_space<vmem>>, vector<1x64x192xbf16>
    %111 = vector.shape_cast %110 : vector<1x64x192xbf16> to vector<64x192xbf16>
    %cst_72 = arith.constant dense<0.000000e+00> : vector<64x32xf32>
    %112 = tpu.matmul %111, %5, %cst_72 {dimension_numbers = #tpu.dot_dimension_numbers<[1], [0], [0], [1], [0, 0, 1, 1], [], []>} : vector<64x192xbf16>, vector<192x32xbf16>, vector<64x32xf32> -> vector<64x32xf32>
    %113 = vector.broadcast %9 : vector<1x32xf32> to vector<64x32xf32>
    %114 = arith.addf %112, %113 : vector<64x32xf32>
    %cst_73 = arith.constant 0.000000e+00 : f32
    %115 = vector.broadcast %cst_73 : f32 to vector<64x32xf32>
    %116 = arith.maximumf %114, %115 : vector<64x32xf32>
    %117 = arith.truncf %116 : vector<64x32xf32> to vector<64x32xbf16>
    %118 = vector.extract_strided_slice %6 {offsets = [96, 0], sizes = [32, 64], strides = [1, 1]} : vector<128x64xbf16> to vector<32x64xbf16>
    %cst_74 = arith.constant dense<0.000000e+00> : vector<64x64xf32>
    %119 = tpu.matmul %117, %118, %cst_74 {dimension_numbers = #tpu.dot_dimension_numbers<[1], [0], [0], [1], [0, 0, 1, 1], [], []>} : vector<64x32xbf16>, vector<32x64xbf16>, vector<64x64xf32> -> vector<64x64xf32>
    %120 = arith.addf %88, %119 : vector<64x64xf32>
    %cst_75 = arith.constant dense<0.000000e+00> : vector<64x128xf32>
    %121 = tpu.matmul %117, %7, %cst_75 {dimension_numbers = #tpu.dot_dimension_numbers<[1], [0], [0], [1], [0, 0, 1, 1], [], []>} : vector<64x32xbf16>, vector<32x128xbf16>, vector<64x128xf32> -> vector<64x128xf32>
    %122 = vector.broadcast %11 : vector<1x128xf32> to vector<64x128xf32>
    %123 = arith.addf %121, %122 : vector<64x128xf32>
    %c192_76 = arith.constant 192 : index
    %c0_77 = arith.constant 0 : index
    %124 = vector.load %arg10[%c192_76, %c0_77] : memref<256x128xf32, #tpu.memory_space<vmem>>, vector<64x128xf32>
    %c192_78 = arith.constant 192 : index
    %c0_79 = arith.constant 0 : index
    %125 = vector.load %arg11[%c192_78, %c0_79] : memref<256x128xf32, #tpu.memory_space<vmem>>, vector<64x128xf32>
    %126 = arith.mulf %123, %124 : vector<64x128xf32>
    %127 = arith.addf %126, %125 : vector<64x128xf32>
    %c0_80 = arith.constant 0 : index
    %c0_81 = arith.constant 0 : index
    %128 = vector.load %arg12[%c0_80, %c0_81] : memref<128x128xf32, #tpu.memory_space<vmem>>, vector<128x128xf32>
    %cst_82 = arith.constant dense<0.000000e+00> : vector<64x128xf32>
    %129 = tpu.matmul %127, %128, %cst_82 {dimension_numbers = #tpu.dot_dimension_numbers<[1], [0], [0], [1], [0, 0, 1, 1], [], []>} : vector<64x128xf32>, vector<128x128xf32>, vector<64x128xf32> -> vector<64x128xf32>
    %cst_83 = arith.constant 0.000000e+00 : f32
    %130 = vector.broadcast %cst_83 : f32 to vector<64x128xf32>
    %131 = arith.subf %130, %129 : vector<64x128xf32>
    %132 = math.exp %131 : vector<64x128xf32>
    %cst_84 = arith.constant 1.000000e+00 : f32
    %133 = vector.broadcast %cst_84 : f32 to vector<64x128xf32>
    %134 = arith.addf %133, %132 : vector<64x128xf32>
    %135 = tpu.reciprocal %134 {approx = true} : vector<64x128xf32> -> vector<64x128xf32>
    %136 = vector.shape_cast %2 : vector<1x128xi1> to vector<1x128xi1>
    %137 = vector.broadcast %136 : vector<1x128xi1> to vector<64x128xi1>
    %138 = arith.select %137, %135, %129 : vector<64x128xi1>, vector<64x128xf32>
    %c0_85 = arith.constant 0 : index
    %c192_86 = arith.constant 192 : index
    %c0_87 = arith.constant 0 : index
    %139 = vector.load %arg16[%c0_85, %c192_86, %c0_87] : memref<1x256x128xf32, #tpu.memory_space<vmem>>, vector<1x64x128xf32>
    %140 = vector.shape_cast %139 : vector<1x64x128xf32> to vector<64x128xf32>
    %141 = vector.shape_cast %138 : vector<64x128xf32> to vector<1x64x128xf32>
    tpu.vector_store %arg16[%c0_85, %c192_86, %c0_87], %141 {strides = array<i32>} : memref<1x256x128xf32, #tpu.memory_space<vmem>>, vector<1x64x128xf32>,
    %142 = vector.broadcast %10 : vector<1x64xf32> to vector<64x64xf32>
    %143 = arith.addf %120, %142 : vector<64x64xf32>
    %cst_88 = arith.constant 0.000000e+00 : f32
    %144 = vector.broadcast %cst_88 : f32 to vector<64x64xf32>
    %145 = arith.maximumf %143, %144 : vector<64x64xf32>
    %146 = arith.truncf %145 : vector<64x64xf32> to vector<64x64xbf16>
    %cst_89 = arith.constant dense<0.000000e+00> : vector<64x128xf32>
    %147 = tpu.matmul %146, %8, %cst_89 {dimension_numbers = #tpu.dot_dimension_numbers<[1], [0], [0], [1], [0, 0, 1, 1], [], []>} : vector<64x64xbf16>, vector<64x128xbf16>, vector<64x128xf32> -> vector<64x128xf32>
    %148 = vector.broadcast %12 : vector<1x128xf32> to vector<64x128xf32>
    %149 = arith.addf %147, %148 : vector<64x128xf32>
    %c0_90 = arith.constant 0 : index
    %c0_91 = arith.constant 0 : index
    %150 = vector.load %arg13[%c0_90, %c0_91] : memref<64x128xf32, #tpu.memory_space<vmem>>, vector<64x128xf32>
    %c0_92 = arith.constant 0 : index
    %c0_93 = arith.constant 0 : index
    %151 = vector.load %arg14[%c0_92, %c0_93] : memref<64x128xf32, #tpu.memory_space<vmem>>, vector<64x128xf32>
    %152 = arith.mulf %149, %150 : vector<64x128xf32>
    %153 = arith.addf %152, %151 : vector<64x128xf32>
    %c0_94 = arith.constant 0 : index
    %c0_95 = arith.constant 0 : index
    %154 = vector.load %arg15[%c0_94, %c0_95] : memref<128x128xf32, #tpu.memory_space<vmem>>, vector<128x128xf32>
    %cst_96 = arith.constant dense<0.000000e+00> : vector<64x128xf32>
    %155 = tpu.matmul %153, %154, %cst_96 {dimension_numbers = #tpu.dot_dimension_numbers<[1], [0], [0], [1], [0, 0, 1, 1], [], []>} : vector<64x128xf32>, vector<128x128xf32>, vector<64x128xf32> -> vector<64x128xf32>
    %cst_97 = arith.constant 0.000000e+00 : f32
    %156 = vector.broadcast %cst_97 : f32 to vector<64x128xf32>
    %157 = arith.subf %156, %155 : vector<64x128xf32>
    %158 = math.exp %157 : vector<64x128xf32>
    %cst_98 = arith.constant 1.000000e+00 : f32
    %159 = vector.broadcast %cst_98 : f32 to vector<64x128xf32>
    %160 = arith.addf %159, %158 : vector<64x128xf32>
    %161 = tpu.reciprocal %160 {approx = true} : vector<64x128xf32> -> vector<64x128xf32>
    %162 = vector.shape_cast %4 : vector<1x128xi1> to vector<1x128xi1>
    %163 = vector.broadcast %162 : vector<1x128xi1> to vector<64x128xi1>
    %164 = arith.select %163, %161, %155 : vector<64x128xi1>, vector<64x128xf32>
    %c0_99 = arith.constant 0 : index
    %c0_100 = arith.constant 0 : index
    %c0_101 = arith.constant 0 : index
    %165 = vector.load %arg17[%c0_99, %c0_100, %c0_101] : memref<1x64x128xf32, #tpu.memory_space<vmem>>, vector<1x64x128xf32>
    %166 = vector.shape_cast %165 : vector<1x64x128xf32> to vector<64x128xf32>
    %167 = vector.shape_cast %164 : vector<64x128xf32> to vector<1x64x128xf32>
    tpu.vector_store %arg17[%c0_99, %c0_100, %c0_101], %167 {strides = array<i32>} : memref<1x64x128xf32, #tpu.memory_space<vmem>>, vector<1x64x128xf32>,
    return
  }
  func.func @transform_0(%arg0: i32) -> (i32, i32, i32) {
    %c0_i32 = arith.constant 0 : i32
    %c0_i32_0 = arith.constant 0 : i32
    %c0_i32_1 = arith.constant 0 : i32
    return %arg0, %c0_i32, %c0_i32_0 : i32, i32, i32
  }
  func.func @transform_1(%arg0: i32) -> (i32, i32) {
    %c0_i32 = arith.constant 0 : i32
    %c0_i32_0 = arith.constant 0 : i32
    %c0_i32_1 = arith.constant 0 : i32
    return %c0_i32, %c0_i32_0 : i32, i32
  }
  func.func @transform_2(%arg0: i32) -> (i32, i32) {
    %c0_i32 = arith.constant 0 : i32
    %c0_i32_0 = arith.constant 0 : i32
    %c0_i32_1 = arith.constant 0 : i32
    return %c0_i32, %c0_i32_0 : i32, i32
  }
  func.func @transform_3(%arg0: i32) -> (i32, i32) {
    %c0_i32 = arith.constant 0 : i32
    %c0_i32_0 = arith.constant 0 : i32
    %c0_i32_1 = arith.constant 0 : i32
    return %c0_i32, %c0_i32_0 : i32, i32
  }
  func.func @transform_4(%arg0: i32) -> (i32, i32) {
    %c0_i32 = arith.constant 0 : i32
    %c0_i32_0 = arith.constant 0 : i32
    %c0_i32_1 = arith.constant 0 : i32
    return %c0_i32, %c0_i32_0 : i32, i32
  }
  func.func @transform_5(%arg0: i32) -> (i32, i32) {
    %c0_i32 = arith.constant 0 : i32
    %c0_i32_0 = arith.constant 0 : i32
    %c0_i32_1 = arith.constant 0 : i32
    return %c0_i32, %c0_i32_0 : i32, i32
  }
  func.func @transform_6(%arg0: i32) -> (i32, i32) {
    %c0_i32 = arith.constant 0 : i32
    %c0_i32_0 = arith.constant 0 : i32
    %c0_i32_1 = arith.constant 0 : i32
    return %c0_i32, %c0_i32_0 : i32, i32
  }
  func.func @transform_7(%arg0: i32) -> (i32, i32) {
    %c0_i32 = arith.constant 0 : i32
    %c0_i32_0 = arith.constant 0 : i32
    %c0_i32_1 = arith.constant 0 : i32
    return %c0_i32, %c0_i32_0 : i32, i32
  }
  func.func @transform_8(%arg0: i32) -> (i32, i32) {
    %c0_i32 = arith.constant 0 : i32
    %c0_i32_0 = arith.constant 0 : i32
    %c0_i32_1 = arith.constant 0 : i32
    return %c0_i32, %c0_i32_0 : i32, i32
  }
  func.func @transform_9(%arg0: i32) -> (i32, i32) {
    %c0_i32 = arith.constant 0 : i32
    %c0_i32_0 = arith.constant 0 : i32
    %c0_i32_1 = arith.constant 0 : i32
    return %c0_i32, %c0_i32_0 : i32, i32
  }
  func.func @transform_10(%arg0: i32) -> (i32, i32) {
    %c0_i32 = arith.constant 0 : i32
    %c0_i32_0 = arith.constant 0 : i32
    %c0_i32_1 = arith.constant 0 : i32
    return %c0_i32, %c0_i32_0 : i32, i32
  }
  func.func @transform_11(%arg0: i32) -> (i32, i32) {
    %c0_i32 = arith.constant 0 : i32
    %c0_i32_0 = arith.constant 0 : i32
    %c0_i32_1 = arith.constant 0 : i32
    return %c0_i32, %c0_i32_0 : i32, i32
  }
  func.func @transform_12(%arg0: i32) -> (i32, i32) {
    %c0_i32 = arith.constant 0 : i32
    %c0_i32_0 = arith.constant 0 : i32
    %c0_i32_1 = arith.constant 0 : i32
    return %c0_i32, %c0_i32_0 : i32, i32
  }
  func.func @transform_13(%arg0: i32) -> (i32, i32) {
    %c0_i32 = arith.constant 0 : i32
    %c0_i32_0 = arith.constant 0 : i32
    %c0_i32_1 = arith.constant 0 : i32
    return %c0_i32, %c0_i32_0 : i32, i32
  }
  func.func @transform_14(%arg0: i32) -> (i32, i32) {
    %c0_i32 = arith.constant 0 : i32
    %c0_i32_0 = arith.constant 0 : i32
    %c0_i32_1 = arith.constant 0 : i32
    return %c0_i32, %c0_i32_0 : i32, i32
  }
  func.func @transform_15(%arg0: i32) -> (i32, i32, i32) {
    %c0_i32 = arith.constant 0 : i32
    %c0_i32_0 = arith.constant 0 : i32
    %c0_i32_1 = arith.constant 0 : i32
    return %arg0, %c0_i32, %c0_i32_0 : i32, i32, i32
  }
  func.func @transform_16(%arg0: i32) -> (i32, i32, i32) {
    %c0_i32 = arith.constant 0 : i32
    %c0_i32_0 = arith.constant 0 : i32
    %c0_i32_1 = arith.constant 0 : i32
    return %arg0, %c0_i32, %c0_i32_0 : i32, i32, i32
  }
}

</mosaic_0001>

<llo_original>
// kernel: hand_detection.1
$region0: #{hand_detection.1}
  #allocation0 [shape = 'u32[]', space=smem, size = 0x4, offset = 0x4, fixed_abs, tag = 'smem constant byte address 0x4 - core index']
  #allocation1 [shape = 'u32[144,128]{1,0:T(1,128)}', space=vmem, size = 0x12000, scoped, tag = 'internal scratch']
  %s0 = inlined_call_operand.vmem [shape: bf16[2,256,192], index: 0, kind: input, shape index: {}]
  %s1 = inlined_call_operand.vmem [shape: bf16[192,32], index: 1, kind: input, shape index: {}]
  %s2 = inlined_call_operand.vmem [shape: f32[1,32], index: 2, kind: input, shape index: {}]
  %s3 = inlined_call_operand.vmem [shape: bf16[128,64], index: 3, kind: input, shape index: {}]
  %s4 = inlined_call_operand.vmem [shape: f32[1,64], index: 4, kind: input, shape index: {}]
  %s5 = inlined_call_operand.vmem [shape: bf16[32,128], index: 5, kind: input, shape index: {}]
  %s6 = inlined_call_operand.vmem [shape: f32[1,128], index: 6, kind: input, shape index: {}, may-alias: {6,8}]
  %s7 = inlined_call_operand.vmem [shape: bf16[64,128], index: 7, kind: input, shape index: {}]
  %s8 = inlined_call_operand.vmem [shape: f32[1,128], index: 8, kind: input, shape index: {}, may-alias: {6,8}]
  %s9 = inlined_call_operand.vmem [shape: f32[256,128], index: 9, kind: input, shape index: {}]
  %s10 = inlined_call_operand.vmem [shape: f32[256,128], index: 10, kind: input, shape index: {}]
  %s11 = inlined_call_operand.vmem [shape: f32[128,128], index: 11, kind: input, shape index: {}]
  %s12 = inlined_call_operand.vmem [shape: f32[64,128], index: 12, kind: input, shape index: {}]
  %s13 = inlined_call_operand.vmem [shape: f32[64,128], index: 13, kind: input, shape index: {}]
  %s14 = inlined_call_operand.vmem [shape: f32[128,128], index: 14, kind: input, shape index: {}]
  %s15 = inlined_call_operand.vmem [shape: f32[2,256,128], index: 15, kind: output, shape index: {0}]
  %s16 = inlined_call_operand.vmem [shape: f32[2,64,128], index: 16, kind: output, shape index: {1}]
  %17 = xla_tuple %s15, %s16
  %s18 = sld [smem:[#allocation0]]
  $region101: #{hand_detection.1} parent=0
    _
  %s20 = ssub.s32 1, %s18
  %s21 = scalar_select 0, %s20, %s18
  loop: start=0, step=1, limit=4
  $region2: #{hand_detection.1} parent=0 // loop_pre_header
    _
  $region3: #{hand_detection.1} parent=0 // loop_header
    %s23 = sphi 0, %s27
    %p24 = scmp.ge.s32.totalorder %s23, 4
    %s33 = sphi 0, %s35
    %s36 = sphi 0, %s33
    %s37 = sphi 0, %s36
    %s53 = sphi 0, %s37
    %s57 = sphi 0, %s57
    %s59 = sphi 0, %s57
    %s60 = sphi 0, %s59
    %s74 = sphi 0, %s60
    %s78 = sphi 0, %s78
    %s80 = sphi 0, %s78
    %s81 = sphi 0, %s80
    %s95 = sphi 0, %s81
    %s99 = sphi 0, %s99
    %s101 = sphi 0, %s99
    %s102 = sphi 0, %s101
    %s116 = sphi 0, %s102
    %s120 = sphi 0, %s120
    %s122 = sphi 0, %s120
    %s123 = sphi 0, %s122
    %s137 = sphi 0, %s123
    %s141 = sphi 0, %s141
    %s143 = sphi 0, %s141
    %s144 = sphi 0, %s143
    %s158 = sphi 0, %s144
    %s162 = sphi 0, %s162
    %s164 = sphi 0, %s162
    %s165 = sphi 0, %s164
    %s179 = sphi 0, %s165
    %s183 = sphi 0, %s183
    %s185 = sphi 0, %s183
    %s186 = sphi 0, %s185
    %s200 = sphi 0, %s186
    %s204 = sphi 0, %s204
    %s206 = sphi 0, %s204
    %s207 = sphi 0, %s206
    %s221 = sphi 0, %s207
    %s225 = sphi 0, %s225
    %s227 = sphi 0, %s225
    %s228 = sphi 0, %s227
    %s242 = sphi 0, %s228
    %s246 = sphi 0, %s246
    %s248 = sphi 0, %s246
    %s249 = sphi 0, %s248
    %s263 = sphi 0, %s249
    %s267 = sphi 0, %s267
    %s269 = sphi 0, %s267
    %s270 = sphi 0, %s269
    %s284 = sphi 0, %s270
    %s288 = sphi 0, %s288
    %s290 = sphi 0, %s288
    %s291 = sphi 0, %s290
    %s305 = sphi 0, %s291
    %s309 = sphi 0, %s309
    %s311 = sphi 0, %s309
    %s312 = sphi 0, %s311
    %s326 = sphi 0, %s312
    %s330 = sphi 0, %s330
    %s332 = sphi 0, %s330
    %s333 = sphi 0, %s332
    %s347 = sphi 0, %s333
    %s353 = sphi 0, %s355
    %s356 = sphi 0, %s353
    %s357 = sphi 0, %s356
    %s373 = sphi 0, %s357
    %s379 = sphi 0, %s381
    %s382 = sphi 0, %s379
    %s383 = sphi 0, %s382
    %s399 = sphi 0, %s383
  $region4: #{hand_detection.1} parent=0 // loop_header_branch
    %26 = sbr.rel (%p24) target = $region8
  $region5: #{hand_detection.1} parent=0 // loop_body
    %s28 = ssub.s32 %s23, 1
    %s29 = ssub.s32 %s23, 2
    %s30 = sadd.s32 %s23, 1
    %s31 = ssub.s32 %s23, %s30
    %p32 = scmp.eq.s32.totalorder %s31, 0
    %s34 = sadd.s32 %s33, 1
    %s35 = scalar_select %p32, %s33, %s34
    %p38 = pneg %p32
    %p39 = scmp.eq.s32.totalorder %s23, 1
    %p40 = por %p38, %p39
    %p41 = scmp.ne.s32.totalorder %s33, %s36
    %p42 = scmp.eq.s32.totalorder %s23, 0
    %p43 = por %p41, %p42
    %p44 = scmp.ne.s32.totalorder %s33, %s36
    %p45 = scmp.eq.s32.totalorder %s28, 1
    %p46 = por %p44, %p45
    %p47 = scmp.ne.s32.totalorder %s36, %s37
    %p48 = scmp.eq.s32.totalorder %s28, 0
    %p49 = por %p47, %p48
    %p50 = scmp.ne.s32.totalorder %s36, %s37
    %p51 = scmp.eq.s32.totalorder %s29, 1
    %p52 = por %p50, %p51
    %p54 = scmp.ne.s32.totalorder %s37, %s53
    %p55 = scmp.eq.s32.totalorder %s29, 0
    %p56 = por %p54, %p55
    %s58 = sadd.s32 %s57, 1
    %p61 = scmp.eq.s32.totalorder %s23, 1
    %p62 = scmp.ne.s32.totalorder %s57, %s59
    %p63 = scmp.eq.s32.totalorder %s23, 0
    %p64 = por %p62, %p63
    %p65 = scmp.ne.s32.totalorder %s57, %s59
    %p66 = scmp.eq.s32.totalorder %s28, 1
    %p67 = por %p65, %p66
    %p68 = scmp.ne.s32.totalorder %s59, %s60
    %p69 = scmp.eq.s32.totalorder %s28, 0
    %p70 = por %p68, %p69
    %p71 = scmp.ne.s32.totalorder %s59, %s60
    %p72 = scmp.eq.s32.totalorder %s29, 1
    %p73 = por %p71, %p72
    %p75 = scmp.ne.s32.totalorder %s60, %s74
    %p76 = scmp.eq.s32.totalorder %s29, 0
    %p77 = por %p75, %p76
    %s79 = sadd.s32 %s78, 1
    %p82 = scmp.eq.s32.totalorder %s23, 1
    %p83 = scmp.ne.s32.totalorder %s78, %s80
    %p84 = scmp.eq.s32.totalorder %s23, 0
    %p85 = por %p83, %p84
    %p86 = scmp.ne.s32.totalorder %s78, %s80
    %p87 = scmp.eq.s32.totalorder %s28, 1
    %p88 = por %p86, %p87
    %p89 = scmp.ne.s32.totalorder %s80, %s81
    %p90 = scmp.eq.s32.totalorder %s28, 0
    %p91 = por %p89, %p90
    %p92 = scmp.ne.s32.totalorder %s80, %s81
    %p93 = scmp.eq.s32.totalorder %s29, 1
    %p94 = por %p92, %p93
    %p96 = scmp.ne.s32.totalorder %s81, %s95
    %p97 = scmp.eq.s32.totalorder %s29, 0
    %p98 = por %p96, %p97
    %s100 = sadd.s32 %s99, 1
    %p103 = scmp.eq.s32.totalorder %s23, 1
    %p104 = scmp.ne.s32.totalorder %s99, %s101
    %p105 = scmp.eq.s32.totalorder %s23, 0
    %p106 = por %p104, %p105
    %p107 = scmp.ne.s32.totalorder %s99, %s101
    %p108 = scmp.eq.s32.totalorder %s28, 1
    %p109 = por %p107, %p108
    %p110 = scmp.ne.s32.totalorder %s101, %s102
    %p111 = scmp.eq.s32.totalorder %s28, 0
    %p112 = por %p110, %p111
    %p113 = scmp.ne.s32.totalorder %s101, %s102
    %p114 = scmp.eq.s32.totalorder %s29, 1
    %p115 = por %p113, %p114
    %p117 = scmp.ne.s32.totalorder %s102, %s116
    %p118 = scmp.eq.s32.totalorder %s29, 0
    %p119 = por %p117, %p118
    %s121 = sadd.s32 %s120, 1
    %p124 = scmp.eq.s32.totalorder %s23, 1
    %p125 = scmp.ne.s32.totalorder %s120, %s122
    %p126 = scmp.eq.s32.totalorder %s23, 0
    %p127 = por %p125, %p126
    %p128 = scmp.ne.s32.totalorder %s120, %s122
    %p129 = scmp.eq.s32.totalorder %s28, 1
    %p130 = por %p128, %p129
    %p131 = scmp.ne.s32.totalorder %s122, %s123
    %p132 = scmp.eq.s32.totalorder %s28, 0
    %p133 = por %p131, %p132
    %p134 = scmp.ne.s32.totalorder %s122, %s123
    %p135 = scmp.eq.s32.totalorder %s29, 1
    %p136 = por %p134, %p135
    %p138 = scmp.ne.s32.totalorder %s123, %s137
    %p139 = scmp.eq.s32.totalorder %s29, 0
    %p140 = por %p138, %p139
    %s142 = sadd.s32 %s141, 1
    %p145 = scmp.eq.s32.totalorder %s23, 1
    %p146 = scmp.ne.s32.totalorder %s141, %s143
    %p147 = scmp.eq.s32.totalorder %s23, 0
    %p148 = por %p146, %p147
    %p149 = scmp.ne.s32.totalorder %s141, %s143
    %p150 = scmp.eq.s32.totalorder %s28, 1
    %p151 = por %p149, %p150
    %p152 = scmp.ne.s32.totalorder %s143, %s144
    %p153 = scmp.eq.s32.totalorder %s28, 0
    %p154 = por %p152, %p153
    %p155 = scmp.ne.s32.totalorder %s143, %s144
    %p156 = scmp.eq.s32.totalorder %s29, 1
    %p157 = por %p155, %p156
    %p159 = scmp.ne.s32.totalorder %s144, %s158
    %p160 = scmp.eq.s32.totalorder %s29, 0
    %p161 = por %p159, %p160
    %s163 = sadd.s32 %s162, 1
    %p166 = scmp.eq.s32.totalorder %s23, 1
    %p167 = scmp.ne.s32.totalorder %s162, %s164
    %p168 = scmp.eq.s32.totalorder %s23, 0
    %p169 = por %p167, %p168
    %p170 = scmp.ne.s32.totalorder %s162, %s164
    %p171 = scmp.eq.s32.totalorder %s28, 1
    %p172 = por %p170, %p171
    %p173 = scmp.ne.s32.totalorder %s164, %s165
    %p174 = scmp.eq.s32.totalorder %s28, 0
    %p175 = por %p173, %p174
    %p176 = scmp.ne.s32.totalorder %s164, %s165
    %p177 = scmp.eq.s32.totalorder %s29, 1
    %p178 = por %p176, %p177
    %p180 = scmp.ne.s32.totalorder %s165, %s179
    %p181 = scmp.eq.s32.totalorder %s29, 0
    %p182 = por %p180, %p181
    %s184 = sadd.s32 %s183, 1
    %p187 = scmp.eq.s32.totalorder %s23, 1
    %p188 = scmp.ne.s32.totalorder %s183, %s185
    %p189 = scmp.eq.s32.totalorder %s23, 0
    %p190 = por %p188, %p189
    %p191 = scmp.ne.s32.totalorder %s183, %s185
    %p192 = scmp.eq.s32.totalorder %s28, 1
    %p193 = por %p191, %p192
    %p194 = scmp.ne.s32.totalorder %s185, %s186
    %p195 = scmp.eq.s32.totalorder %s28, 0
    %p196 = por %p194, %p195
    %p197 = scmp.ne.s32.totalorder %s185, %s186
    %p198 = scmp.eq.s32.totalorder %s29, 1
    %p199 = por %p197, %p198
    %p201 = scmp.ne.s32.totalorder %s186, %s200
    %p202 = scmp.eq.s32.totalorder %s29, 0
    %p203 = por %p201, %p202
    %s205 = sadd.s32 %s204, 1
    %p208 = scmp.eq.s32.totalorder %s23, 1
    %p209 = scmp.ne.s32.totalorder %s204, %s206
    %p210 = scmp.eq.s32.totalorder %s23, 0
    %p211 = por %p209, %p210
    %p212 = scmp.ne.s32.totalorder %s204, %s206
    %p213 = scmp.eq.s32.totalorder %s28, 1
    %p214 = por %p212, %p213
    %p215 = scmp.ne.s32.totalorder %s206, %s207
    %p216 = scmp.eq.s32.totalorder %s28, 0
    %p217 = por %p215, %p216
    %p218 = scmp.ne.s32.totalorder %s206, %s207
    %p219 = scmp.eq.s32.totalorder %s29, 1
    %p220 = por %p218, %p219
    %p222 = scmp.ne.s32.totalorder %s207, %s221
    %p223 = scmp.eq.s32.totalorder %s29, 0
    %p224 = por %p222, %p223
    %s226 = sadd.s32 %s225, 1
    %p229 = scmp.eq.s32.totalorder %s23, 1
    %p230 = scmp.ne.s32.totalorder %s225, %s227
    %p231 = scmp.eq.s32.totalorder %s23, 0
    %p232 = por %p230, %p231
    %p233 = scmp.ne.s32.totalorder %s225, %s227
    %p234 = scmp.eq.s32.totalorder %s28, 1
    %p235 = por %p233, %p234
    %p236 = scmp.ne.s32.totalorder %s227, %s228
    %p237 = scmp.eq.s32.totalorder %s28, 0
    %p238 = por %p236, %p237
    %p239 = scmp.ne.s32.totalorder %s227, %s228
    %p240 = scmp.eq.s32.totalorder %s29, 1
    %p241 = por %p239, %p240
    %p243 = scmp.ne.s32.totalorder %s228, %s242
    %p244 = scmp.eq.s32.totalorder %s29, 0
    %p245 = por %p243, %p244
    %s247 = sadd.s32 %s246, 1
    %p250 = scmp.eq.s32.totalorder %s23, 1
    %p251 = scmp.ne.s32.totalorder %s246, %s248
    %p252 = scmp.eq.s32.totalorder %s23, 0
    %p253 = por %p251, %p252
    %p254 = scmp.ne.s32.totalorder %s246, %s248
    %p255 = scmp.eq.s32.totalorder %s28, 1
    %p256 = por %p254, %p255
    %p257 = scmp.ne.s32.totalorder %s248, %s249
    %p258 = scmp.eq.s32.totalorder %s28, 0
    %p259 = por %p257, %p258
    %p260 = scmp.ne.s32.totalorder %s248, %s249
    %p261 = scmp.eq.s32.totalorder %s29, 1
    %p262 = por %p260, %p261
    %p264 = scmp.ne.s32.totalorder %s249, %s263
    %p265 = scmp.eq.s32.totalorder %s29, 0
    %p266 = por %p264, %p265
    %s268 = sadd.s32 %s267, 1
    %p271 = scmp.eq.s32.totalorder %s23, 1
    %p272 = scmp.ne.s32.totalorder %s267, %s269
    %p273 = scmp.eq.s32.totalorder %s23, 0
    %p274 = por %p272, %p273
    %p275 = scmp.ne.s32.totalorder %s267, %s269
    %p276 = scmp.eq.s32.totalorder %s28, 1
    %p277 = por %p275, %p276
    %p278 = scmp.ne.s32.totalorder %s269, %s270
    %p279 = scmp.eq.s32.totalorder %s28, 0
    %p280 = por %p278, %p279
    %p281 = scmp.ne.s32.totalorder %s269, %s270
    %p282 = scmp.eq.s32.totalorder %s29, 1
    %p283 = por %p281, %p282
    %p285 = scmp.ne.s32.totalorder %s270, %s284
    %p286 = scmp.eq.s32.totalorder %s29, 0
    %p287 = por %p285, %p286
    %s289 = sadd.s32 %s288, 1
    %p292 = scmp.eq.s32.totalorder %s23, 1
    %p293 = scmp.ne.s32.totalorder %s288, %s290
    %p294 = scmp.eq.s32.totalorder %s23, 0
    %p295 = por %p293, %p294
    %p296 = scmp.ne.s32.totalorder %s288, %s290
    %p297 = scmp.eq.s32.totalorder %s28, 1
    %p298 = por %p296, %p297
    %p299 = scmp.ne.s32.totalorder %s290, %s291
    %p300 = scmp.eq.s32.totalorder %s28, 0
    %p301 = por %p299, %p300
    %p302 = scmp.ne.s32.totalorder %s290, %s291
    %p303 = scmp.eq.s32.totalorder %s29, 1
    %p304 = por %p302, %p303
    %p306 = scmp.ne.s32.totalorder %s291, %s305
    %p307 = scmp.eq.s32.totalorder %s29, 0
    %p308 = por %p306, %p307
    %s310 = sadd.s32 %s309, 1
    %p313 = scmp.eq.s32.totalorder %s23, 1
    %p314 = scmp.ne.s32.totalorder %s309, %s311
    %p315 = scmp.eq.s32.totalorder %s23, 0
    %p316 = por %p314, %p315
    %p317 = scmp.ne.s32.totalorder %s309, %s311
    %p318 = scmp.eq.s32.totalorder %s28, 1
    %p319 = por %p317, %p318
    %p320 = scmp.ne.s32.totalorder %s311, %s312
    %p321 = scmp.eq.s32.totalorder %s28, 0
    %p322 = por %p320, %p321
    %p323 = scmp.ne.s32.totalorder %s311, %s312
    %p324 = scmp.eq.s32.totalorder %s29, 1
    %p325 = por %p323, %p324
    %p327 = scmp.ne.s32.totalorder %s312, %s326
    %p328 = scmp.eq.s32.totalorder %s29, 0
    %p329 = por %p327, %p328
    %s331 = sadd.s32 %s330, 1
    %p334 = scmp.eq.s32.totalorder %s23, 1
    %p335 = scmp.ne.s32.totalorder %s330, %s332
    %p336 = scmp.eq.s32.totalorder %s23, 0
    %p337 = por %p335, %p336
    %p338 = scmp.ne.s32.totalorder %s330, %s332
    %p339 = scmp.eq.s32.totalorder %s28, 1
    %p340 = por %p338, %p339
    %p341 = scmp.ne.s32.totalorder %s332, %s333
    %p342 = scmp.eq.s32.totalorder %s28, 0
    %p343 = por %p341, %p342
    %p344 = scmp.ne.s32.totalorder %s332, %s333
    %p345 = scmp.eq.s32.totalorder %s29, 1
    %p346 = por %p344, %p345
    %p348 = scmp.ne.s32.totalorder %s333, %s347
    %p349 = scmp.eq.s32.totalorder %s29, 0
    %p350 = por %p348, %p349
    %s351 = ssub.s32 %s23, %s30
    %p352 = scmp.eq.s32.totalorder %s351, 0
    %s354 = sadd.s32 %s353, 1
    %s355 = scalar_select %p352, %s353, %s354
    %p358 = pneg %p352
    %p359 = scmp.eq.s32.totalorder %s23, 1
    %p360 = por %p358, %p359
    %p361 = scmp.ne.s32.totalorder %s353, %s356
    %p362 = scmp.eq.s32.totalorder %s23, 0
    %p363 = por %p361, %p362
    %p364 = scmp.ne.s32.totalorder %s353, %s356
    %p365 = scmp.eq.s32.totalorder %s28, 1
    %p366 = por %p364, %p365
    %p367 = scmp.ne.s32.totalorder %s356, %s357
    %p368 = scmp.eq.s32.totalorder %s28, 0
    %p369 = por %p367, %p368
    %p370 = scmp.ne.s32.totalorder %s356, %s357
    %p371 = scmp.eq.s32.totalorder %s29, 1
    %p372 = por %p370, %p371
    %p374 = scmp.ne.s32.totalorder %s357, %s373
    %p375 = scmp.eq.s32.totalorder %s29, 0
    %p376 = por %p374, %p375
    %s377 = ssub.s32 %s23, %s30
    %p378 = scmp.eq.s32.totalorder %s377, 0
    %s380 = sadd.s32 %s379, 1
    %s381 = scalar_select %p378, %s379, %s380
    %p384 = pneg %p378
    %p385 = scmp.eq.s32.totalorder %s23, 1
    %p386 = por %p384, %p385
    %p387 = scmp.ne.s32.totalorder %s379, %s382
    %p388 = scmp.eq.s32.totalorder %s23, 0
    %p389 = por %p387, %p388
    %p390 = scmp.ne.s32.totalorder %s379, %s382
    %p391 = scmp.eq.s32.totalorder %s28, 1
    %p392 = por %p390, %p391
    %p393 = scmp.ne.s32.totalorder %s382, %s383
    %p394 = scmp.eq.s32.totalorder %s28, 0
    %p395 = por %p393, %p394
    %p396 = scmp.ne.s32.totalorder %s382, %s383
    %p397 = scmp.eq.s32.totalorder %s29, 1
    %p398 = por %p396, %p397
    %p400 = scmp.ne.s32.totalorder %s383, %s399
    %p401 = scmp.eq.s32.totalorder %s29, 0
    %p402 = por %p400, %p401
    %p403 = scmp.le.s32.totalorder 1, %s23
    %p404 = scmp.lt.s32.totalorder %s23, 3
    %p405 = pnand %p403, %p404
    %p406 = pneg %p405
    // Predicated region
    $region9: #{hand_detection.1} parent=5 // pred_check
      _
    $region10: #{hand_detection.1} parent=5 // pred_check_branch
      %408 = sbr.rel (%p405) target = $region12
    $region11: #{hand_detection.1} parent=5 // pred_region
      %s409 = ssub.s32 %s23, 1
      // Predicated region
      $region13: #{hand_detection.1} parent=11 // pred_check
        %p410 = pneg %p70
      $region14: #{hand_detection.1} parent=11 // pred_check_branch
        %412 = sbr.rel (%p410) target = $region16
      $region15: #{hand_detection.1} parent=11 // pred_region
        _
      $region16: #{hand_detection.1} parent=11 // pred_fallthru
        _
      // Predicated region
      $region17: #{hand_detection.1} parent=11 // pred_check
        %p413 = pneg %p91
      $region18: #{hand_detection.1} parent=11 // pred_check_branch
        %415 = sbr.rel (%p413) target = $region20
      $region19: #{hand_detection.1} parent=11 // pred_region
        _
      $region20: #{hand_detection.1} parent=11 // pred_fallthru
        _
      // Predicated region
      $region21: #{hand_detection.1} parent=11 // pred_check
        %p416 = pneg %p112
      $region22: #{hand_detection.1} parent=11 // pred_check_branch
        %418 = sbr.rel (%p416) target = $region24
      $region23: #{hand_detection.1} parent=11 // pred_region
        _
      $region24: #{hand_detection.1} parent=11 // pred_fallthru
        _
      // Predicated region
      $region25: #{hand_detection.1} parent=11 // pred_check
        %p419 = pneg %p133
      $region26: #{hand_detection.1} parent=11 // pred_check_branch
        %421 = sbr.rel (%p419) target = $region28
      $region27: #{hand_detection.1} parent=11 // pred_region
        _
      $region28: #{hand_detection.1} parent=11 // pred_fallthru
        _
      // Predicated region
      $region29: #{hand_detection.1} parent=11 // pred_check
        %p422 = pneg %p154
      $region30: #{hand_detection.1} parent=11 // pred_check_branch
        %424 = sbr.rel (%p422) target = $region32
      $region31: #{hand_detection.1} parent=11 // pred_region
        _
      $region32: #{hand_detection.1} parent=11 // pred_fallthru
        _
      // Predicated region
      $region33: #{hand_detection.1} parent=11 // pred_check
        %p425 = pneg %p175
      $region34: #{hand_detection.1} parent=11 // pred_check_branch
        %427 = sbr.rel (%p425) target = $region36
      $region35: #{hand_detection.1} parent=11 // pred_region
        _
      $region36: #{hand_detection.1} parent=11 // pred_fallthru
        _
      // Predicated region
      $region37: #{hand_detection.1} parent=11 // pred_check
        %p428 = pneg %p196
      $region38: #{hand_detection.1} parent=11 // pred_check_branch
        %430 = sbr.rel (%p428) target = $region40
      $region39: #{hand_detection.1} parent=11 // pred_region
        _
      $region40: #{hand_detection.1} parent=11 // pred_fallthru
        _
      // Predicated region
      $region41: #{hand_detection.1} parent=11 // pred_check
        %p431 = pneg %p217
      $region42: #{hand_detection.1} parent=11 // pred_check_branch
        %433 = sbr.rel (%p431) target = $region44
      $region43: #{hand_detection.1} parent=11 // pred_region
        _
      $region44: #{hand_detection.1} parent=11 // pred_fallthru
        _
      // Predicated region
      $region45: #{hand_detection.1} parent=11 // pred_check
        %p434 = pneg %p238
      $region46: #{hand_detection.1} parent=11 // pred_check_branch
        %436 = sbr.rel (%p434) target = $region48
      $region47: #{hand_detection.1} parent=11 // pred_region
        _
      $region48: #{hand_detection.1} parent=11 // pred_fallthru
        _
      // Predicated region
      $region49: #{hand_detection.1} parent=11 // pred_check
        %p437 = pneg %p259
      $region50: #{hand_detection.1} parent=11 // pred_check_branch
        %439 = sbr.rel (%p437) target = $region52
      $region51: #{hand_detection.1} parent=11 // pred_region
        _
      $region52: #{hand_detection.1} parent=11 // pred_fallthru
        _
      // Predicated region
      $region53: #{hand_detection.1} parent=11 // pred_check
        %p440 = pneg %p280
      $region54: #{hand_detection.1} parent=11 // pred_check_branch
        %442 = sbr.rel (%p440) target = $region56
      $region55: #{hand_detection.1} parent=11 // pred_region
        _
      $region56: #{hand_detection.1} parent=11 // pred_fallthru
        _
      // Predicated region
      $region57: #{hand_detection.1} parent=11 // pred_check
        %p443 = pneg %p301
      $region58: #{hand_detection.1} parent=11 // pred_check_branch
        %445 = sbr.rel (%p443) target = $region60
      $region59: #{hand_detection.1} parent=11 // pred_region
        _
      $region60: #{hand_detection.1} parent=11 // pred_fallthru
        _
      // Predicated region
      $region61: #{hand_detection.1} parent=11 // pred_check
        %p446 = pneg %p322
      $region62: #{hand_detection.1} parent=11 // pred_check_branch
        %448 = sbr.rel (%p446) target = $region64
      $region63: #{hand_detection.1} parent=11 // pred_region
        _
      $region64: #{hand_detection.1} parent=11 // pred_fallthru
        _
      // Predicated region
      $region65: #{hand_detection.1} parent=11 // pred_check
        %p449 = pneg %p343
      $region66: #{hand_detection.1} parent=11 // pred_check_branch
        %451 = sbr.rel (%p449) target = $region68
      $region67: #{hand_detection.1} parent=11 // pred_region
        _
      $region68: #{hand_detection.1} parent=11 // pred_fallthru
        _
    $region12: #{hand_detection.1} parent=5 // pred_fallthru
      _
    %p452 = scmp.lt.s32.totalorder %s23, 2
    // Predicated region
    $region69: #{hand_detection.1} parent=5 // pred_check
      %p453 = pneg %p452
    $region70: #{hand_detection.1} parent=5 // pred_check_branch
      %455 = sbr.rel (%p453) target = $region72
    $region71: #{hand_detection.1} parent=5 // pred_region
      // Predicated region
      $region73: #{hand_detection.1} parent=71 // pred_check
        %p456 = pneg %p43
      $region74: #{hand_detection.1} parent=71 // pred_check_branch
        %458 = sbr.rel (%p456) target = $region76
      $region75: #{hand_detection.1} parent=71 // pred_region
        %p459 = scmp.lt.s32.totalorder %s23, 1
        %s460 = scalar_select %p459, %s23, 1
        %s461 = smul.addr %s460, 64
        %s462 = smul.addr %s461, 4
        %s463 = scalar_lea.vmem %s0, %s462
      $region76: #{hand_detection.1} parent=71 // pred_fallthru
        _
    $region72: #{hand_detection.1} parent=5 // pred_fallthru
      _
    %p464 = scmp.le.s32.totalorder 1, %s23
    %p465 = scmp.lt.s32.totalorder %s23, 3
    %p466 = pnand %p464, %p465
    %p467 = pneg %p466
    // Predicated region
    $region77: #{hand_detection.1} parent=5 // pred_check
      _
    $region78: #{hand_detection.1} parent=5 // pred_check_branch
      %469 = sbr.rel (%p466) target = $region80
    $region79: #{hand_detection.1} parent=5 // pred_region
      %s470 = ssub.s32 %s23, 1
      %p471 = scmp.lt.s32.totalorder %s28, 1
      %s472 = scalar_select %p471, %s28, 1
      %s473 = smul.addr %s472, 64
      %s474 = smul.addr %s473, 4
      %s475 = scalar_lea.vmem %s0, %s474
      %p476 = pneg %p49
      %p477 = pneg %p46
      %p478 = pneg %p70
      %p479 = pneg %p67
      %p480 = pneg %p91
      %p481 = pneg %p88
      %p482 = pneg %p112
      %p483 = pneg %p109
      %p484 = pneg %p133
      %p485 = pneg %p130
      %p486 = pneg %p154
      %p487 = pneg %p151
      %p488 = pneg %p175
      %p489 = pneg %p172
      %p490 = pneg %p196
      %p491 = pneg %p193
      %p492 = pneg %p217
      %p493 = pneg %p214
      %p494 = pneg %p238
      %p495 = pneg %p235
      %p496 = pneg %p259
      %p497 = pneg %p256
      %p498 = pneg %p280
      %p499 = pneg %p277
      %p500 = pneg %p301
      %p501 = pneg %p298
      %p502 = pneg %p322
      %p503 = pneg %p319
      %p504 = pneg %p343
      %p505 = pneg %p340
      %p506 = pneg %p369
      %p507 = pneg %p366
      %p508 = scmp.lt.s32.totalorder %s28, 1
      %s509 = scalar_select %p508, %s28, 1
      %s510 = smul.addr %s509, 32
      %s511 = smul.addr %s510, 8
      %s512 = scalar_lea.vmem %s15, %s511
      %p513 = pneg %p395
      %p514 = pneg %p392
      %p515 = scmp.lt.s32.totalorder %s28, 1
      %s516 = scalar_select %p515, %s28, 1
      %s517 = smul.addr %s516, 8
      %s518 = smul.addr %s517, 8
      %s519 = scalar_lea.vmem %s16, %s518
      %p520 = scmp.lt.s32.totalorder %s28, 1
      %s521 = scalar_select %p520, %s28, 1
      %s522 = smul.addr %s521, 64
      %s523 = smul.addr %s522, 4
      %s524 = scalar_lea.vmem %s0, %s523
      %p525 = scmp.lt.s32.totalorder %s28, 1
      %s526 = scalar_select %p525, %s28, 1
      %s527 = smul.addr %s526, 32
      %s528 = smul.addr %s527, 8
      %s529 = scalar_lea.vmem %s15, %s528
      %p530 = scmp.lt.s32.totalorder %s28, 1
      %s531 = scalar_select %p530, %s28, 1
      %s532 = smul.addr %s531, 8
      %s533 = smul.addr %s532, 8
      %s534 = scalar_lea.vmem %s16, %s533
      %v536 = vlaneseq
      %v537 = vand.u32 %v536, 127
      %vm538 = vcmp.lt.s32.totalorder %v537, 2
      %vm539 = vcmp.lt.s32.totalorder %v537, 6
      %v540 = vld [vmem:[%s1] sm:$0xf]
      %v541 = vld [vmem:[%s1 + $0x4] sm:$0xf]
      %v542 = vld [vmem:[%s1 + $0x8] sm:$0xf]
      %v543 = vld [vmem:[%s1 + $0xc] sm:$0xf]
      %v544 = vld [vmem:[%s1 + $0x10] sm:$0xf]
      %v545 = vld [vmem:[%s1 + $0x14] sm:$0xf]
      %v546 = vld [vmem:[%s1 + $0x18] sm:$0xf]
      %v547 = vld [vmem:[%s1 + $0x1c] sm:$0xf]
      %v548 = vld [vmem:[%s1 + $0x20] sm:$0xf]
      %v549 = vld [vmem:[%s1 + $0x24] sm:$0xf]
      %v550 = vld [vmem:[%s1 + $0x28] sm:$0xf]
      %v551 = vld [vmem:[%s1 + $0x2c] sm:$0xf]
      %v552 = vld [vmem:[%s1 + $0x30] sm:$0xf]
      %v553 = vld [vmem:[%s1 + $0x34] sm:$0xf]
      %v554 = vld [vmem:[%s1 + $0x38] sm:$0xf]
      %v555 = vld [vmem:[%s1 + $0x3c] sm:$0xf]
      %v556 = vld [vmem:[%s1 + $0x40] sm:$0xf]
      %v557 = vld [vmem:[%s1 + $0x44] sm:$0xf]
      %v558 = vld [vmem:[%s1 + $0x48] sm:$0xf]
      %v559 = vld [vmem:[%s1 + $0x4c] sm:$0xf]
      %v560 = vld [vmem:[%s1 + $0x50] sm:$0xf]
      %v561 = vld [vmem:[%s1 + $0x54] sm:$0xf]
      %v562 = vld [vmem:[%s1 + $0x58] sm:$0xf]
      %v563 = vld [vmem:[%s1 + $0x5c] sm:$0xf]
      %v564 = vld [vmem:[%s3] sm:$0xf]
      %v565 = vld [vmem:[%s3 + $0x4] sm:$0xf]
      %v566 = vld [vmem:[%s3 + $0x8] sm:$0xf]
      %v567 = vld [vmem:[%s3 + $0xc] sm:$0xf]
      %v568 = vld [vmem:[%s3 + $0x10] sm:$0xf]
      %v569 = vld [vmem:[%s3 + $0x14] sm:$0xf]
      %v570 = vld [vmem:[%s3 + $0x18] sm:$0xf]
      %v571 = vld [vmem:[%s3 + $0x1c] sm:$0xf]
      %v572 = vld [vmem:[%s3 + $0x20] sm:$0xf]
      %v573 = vld [vmem:[%s3 + $0x24] sm:$0xf]
      %v574 = vld [vmem:[%s3 + $0x28] sm:$0xf]
      %v575 = vld [vmem:[%s3 + $0x2c] sm:$0xf]
      %v576 = vld [vmem:[%s3 + $0x30] sm:$0xf]
      %v577 = vld [vmem:[%s3 + $0x34] sm:$0xf]
      %v578 = vld [vmem:[%s3 + $0x38] sm:$0xf]
      %v579 = vld [vmem:[%s3 + $0x3c] sm:$0xf]
      %v580 = vld [vmem:[%s5] sm:$0xf]
      %v581 = vld [vmem:[%s5 + $0x4] sm:$0xf]
      %v582 = vld [vmem:[%s5 + $0x8] sm:$0xf]
      %v583 = vld [vmem:[%s5 + $0xc] sm:$0xf]
      %v584 = vld [vmem:[%s7] sm:$0xf]
      %v585 = vld [vmem:[%s7 + $0x4] sm:$0xf]
      %v586 = vld [vmem:[%s7 + $0x8] sm:$0xf]
      %v587 = vld [vmem:[%s7 + $0xc] sm:$0xf]
      %v588 = vld [vmem:[%s7 + $0x10] sm:$0xf]
      %v589 = vld [vmem:[%s7 + $0x14] sm:$0xf]
      %v590 = vld [vmem:[%s7 + $0x18] sm:$0xf]
      %v591 = vld [vmem:[%s7 + $0x1c] sm:$0xf]
      %v592 = vld [vmem:[%s2] sm:$0x1]
      %v593 = vld [vmem:[%s4] sm:$0x1]
      %v594 = vld [vmem:[%s6] sm:$0x1]
      %v595 = vld [vmem:[%s8] sm:$0x1]
      %v596 = vld [vmem:[%s524] sm:$0xff]
      %v597 = vld [vmem:[%s524 + $0x8] sm:$0xff]
      %v598 = vld [vmem:[%s524 + $0x10] sm:$0xff]
      %v599 = vld [vmem:[%s524 + $0x18] sm:$0xff]
      %v600 = vld [vmem:[%s524 + $0x20] sm:$0xff]
      %v601 = vld [vmem:[%s524 + $0x28] sm:$0xff]
      %v602 = vld [vmem:[%s524 + $0x30] sm:$0xff]
      %v603 = vld [vmem:[%s524 + $0x38] sm:$0xff]
      %v605 = vlaneseq
      %v606 = vshrl.u32 %v605, 7
      %v607 = vsub.s32 0, %v606
      %v608 = vrot.slane %v592, %v607
      %v618 = vunpack.c.l.b16 %v596
      %v619 = vunpack.c.h.b16 %v596
      %v620 = vunpack.c.l.b16 %v597
      %v621 = vunpack.c.h.b16 %v597
      %v622 = vunpack.c.l.b16 %v598
      %v623 = vunpack.c.h.b16 %v598
      %v624 = vunpack.c.l.b16 %v599
      %v625 = vunpack.c.h.b16 %v599
      %v626 = vunpack.c.l.b16 %v600
      %v627 = vunpack.c.h.b16 %v600
      %v628 = vunpack.c.l.b16 %v601
      %v629 = vunpack.c.h.b16 %v601
      %v630 = vunpack.c.l.b16 %v602
      %v631 = vunpack.c.h.b16 %v602
      %v632 = vunpack.c.l.b16 %v603
      %v633 = vunpack.c.h.b16 %v603
      %v634 = vpack.c.b16 %v620, %v618
      %v635 = vpack.c.b16 %v621, %v619
      %v636 = vpack.c.b16 %v624, %v622
      %v637 = vpack.c.b16 %v625, %v623
      %v638 = vpack.c.b16 %v628, %v626
      %v639 = vpack.c.b16 %v629, %v627
      %v640 = vpack.c.b16 %v632, %v630
      %v641 = vpack.c.b16 %v633, %v631
      %v670 = vunpack.c.l.b16 %v540
      %v671 = vunpack.c.l.b16 %v541
      %v672 = vunpack.c.l.b16 %v542
      %v673 = vunpack.c.l.b16 %v543
      %v674 = vunpack.c.l.b16 %v544
      %v675 = vunpack.c.l.b16 %v545
      %v676 = vunpack.c.l.b16 %v546
      %v677 = vunpack.c.l.b16 %v547
      %v678 = vunpack.c.l.b16 %v548
      %v679 = vunpack.c.l.b16 %v549
      %v680 = vunpack.c.l.b16 %v550
      %v681 = vunpack.c.l.b16 %v551
      %v682 = vunpack.c.l.b16 %v552
      %v683 = vunpack.c.l.b16 %v553
      %v684 = vunpack.c.l.b16 %v554
      %v685 = vunpack.c.l.b16 %v555
      %v686 = vunpack.c.l.b16 %v556
      %v687 = vunpack.c.l.b16 %v557
      %v688 = vunpack.c.l.b16 %v558
      %v689 = vunpack.c.l.b16 %v559
      %v690 = vunpack.c.l.b16 %v560
      %v691 = vunpack.c.l.b16 %v561
      %v692 = vunpack.c.l.b16 %v562
      %v693 = vunpack.c.l.b16 %v563
      %v694 = vpack.c.b16 %v671, %v670
      %v695 = vpack.c.b16 %v673, %v672
      %v696 = vpack.c.b16 %v675, %v674
      %v697 = vpack.c.b16 %v677, %v676
      %v698 = vpack.c.b16 %v679, %v678
      %v699 = vpack.c.b16 %v681, %v680
      %v700 = vpack.c.b16 %v683, %v682
      %v701 = vpack.c.b16 %v685, %v684
      %v702 = vpack.c.b16 %v687, %v686
      %v703 = vpack.c.b16 %v689, %v688
      %v704 = vpack.c.b16 %v691, %v690
      %v705 = vpack.c.b16 %v693, %v692
      %vm718 = vcmask 523264
      %v720 = vsel %vm718, %v635, 0
      %v723 = vsel %vm718, %v637, 0
      %v726 = vsel %vm718, %v639, 0
      %v729 = vsel %vm718, %v641, 0
      %731 = vmatprep.subr.bf16.mxu0 0
      %732 = vmatpush1.bf16.msra.mxu0 %v694
      %733 = vmatprep.subr.bf16.mxu0 0
      %734 = vmatpush1.bf16.msra.mxu0 %v695
      %735 = vmatprep.subr.bf16.mxu0 0
      %736 = vmatpush1.bf16.msra.mxu0 %v696
      %737 = vmatprep.subr.bf16.mxu0 0
      %738 = vmatpush1.bf16.msra.mxu0 %v697
      %739 = vmatprep.subr.bf16.mxu0 0
      %740 = vmatpush1.bf16.msra.mxu0 %v698
      %741 = vmatprep.subr.bf16.mxu0 0
      %742 = vmatpush1.bf16.msra.mxu0 %v699
      %743 = vmatprep.subr.bf16.mxu0 0
      %744 = vmatpush1.bf16.msra.mxu0 %v700
      %745 = vmatprep.subr.bf16.mxu0 0
      %746 = vmatpush1.bf16.msra.mxu0 %v701
      %747 = vmatprep.subr.bf16.mxu0 0
      %748 = vmatpush1.bf16.msra.mxu0 %v702
      %749 = vmatprep.subr.bf16.mxu0 0
      %750 = vmatpush1.bf16.msra.mxu0 %v703
      %751 = vmatprep.subr.bf16.mxu0 0
      %752 = vmatpush1.bf16.msra.mxu0 %v704
      %753 = vmatprep.subr.bf16.mxu0 0
      %754 = vmatpush1.bf16.msra.mxu0 %v705
      %755 = vmatprep.subr.bf16.mxu0 0
      %756 = vmatpush1.bf16.msra.mxu0 0
      %757 = vmatprep.subr.bf16.mxu0 0
      %758 = vmatpush1.bf16.msra.mxu0 0
      %759 = vmatprep.subr.bf16.mxu0 0
      %760 = vmatpush1.bf16.msra.mxu0 0
      %761 = vmatprep.subr.bf16.mxu0 0
      %762 = vmatpush1.bf16.msra.mxu0 0
      %763 = vmatprep.mubr.bf16.mxu0 %v720
      %764 = vmatmul.mubr.bf16.gmra.mrb[0].mxu0 %v634
      %v765 = vpop.f32.mrb[0].mxu0
      %v766 = vadd.f32 %v608, %v765
      %v767 = vpop.f32.mrb[0].mxu0
      %v768 = vpop.f32.mrb[0].mxu0
      %v769 = vadd.f32 %v608, %v768
      %v770 = vpop.f32.mrb[0].mxu0
      %771 = vmatprep.mubr.bf16.mxu0 %v723
      %772 = vmatmul.mubr.bf16.gmra.mrb[0].mxu0 %v636
      %v773 = vpop.f32.mrb[0].mxu0
      %v774 = vadd.f32 %v608, %v773
      %v775 = vpop.f32.mrb[0].mxu0
      %v776 = vpop.f32.mrb[0].mxu0
      %v777 = vadd.f32 %v608, %v776
      %v778 = vpop.f32.mrb[0].mxu0
      %779 = vmatprep.mubr.bf16.mxu0 %v726
      %780 = vmatmul.mubr.bf16.gmra.mrb[0].mxu0 %v638
      %v781 = vpop.f32.mrb[0].mxu0
      %v782 = vadd.f32 %v608, %v781
      %v783 = vpop.f32.mrb[0].mxu0
      %v784 = vpop.f32.mrb[0].mxu0
      %v785 = vadd.f32 %v608, %v784
      %v786 = vpop.f32.mrb[0].mxu0
      %787 = vmatprep.mubr.bf16.mxu0 %v729
      %788 = vmatmul.mubr.bf16.gmra.mrb[0].mxu0 %v640
      %v789 = vpop.f32.mrb[0].mxu0
      %v790 = vadd.f32 %v608, %v789
      %v791 = vpop.f32.mrb[0].mxu0
      %v792 = vpop.f32.mrb[0].mxu0
      %v793 = vadd.f32 %v608, %v792
      %v794 = vpop.f32.mrb[0].mxu0
      %795 = vdwg.mxu0
      %v796 = vmax.f32 %v766, 0.0
      %v797 = vmax.f32 %v769, 0.0
      %v798 = vmax.f32 %v774, 0.0
      %v799 = vmax.f32 %v777, 0.0
      %v800 = vmax.f32 %v782, 0.0
      %v801 = vmax.f32 %v785, 0.0
      %v802 = vmax.f32 %v790, 0.0
      %v803 = vmax.f32 %v793, 0.0
      %v804 = vpack.c.bf16 %v797, %v796
      %v805 = vpack.c.bf16 %v799, %v798
      %v806 = vpack.c.bf16 %v801, %v800
      %v807 = vpack.c.bf16 %v803, %v802
      %v809 = vlaneseq
      %v810 = vshrl.u32 %v809, 7
      %v811 = vsub.s32 0, %v810
      %v812 = vrot.slane %v594, %v811
      %v818 = vunpack.c.l.b16 %v580
      %v819 = vunpack.c.l.b16 %v581
      %v820 = vunpack.c.l.b16 %v582
      %v821 = vunpack.c.l.b16 %v583
      %v822 = vpack.c.b16 %v819, %v818
      %v823 = vpack.c.b16 %v821, %v820
      %vm826 = vcmask 261120
      %v828 = vsel %vm826, %v804, 0
      %v831 = vsel %vm826, %v805, 0
      %v834 = vsel %vm826, %v806, 0
      %v837 = vsel %vm826, %v807, 0
      %839 = vmatprep.subr.bf16.mxu0 0
      %840 = vmatpush1.bf16.msra.mxu0 %v822
      %841 = vmatprep.subr.bf16.mxu0 0
      %842 = vmatpush1.bf16.msra.mxu0 %v823
      %843 = vmatprep.subr.bf16.mxu0 0
      %844 = vmatpush1.bf16.msra.mxu0 0
      %845 = vmatprep.subr.bf16.mxu0 0
      %846 = vmatpush1.bf16.msra.mxu0 0
      %847 = vmatprep.subr.bf16.mxu0 0
      %848 = vmatpush1.bf16.msra.mxu0 0
      %849 = vmatprep.subr.bf16.mxu0 0
      %850 = vmatpush1.bf16.msra.mxu0 0
      %851 = vmatprep.subr.bf16.mxu0 0
      %852 = vmatpush1.bf16.msra.mxu0 0
      %853 = vmatprep.subr.bf16.mxu0 0
      %854 = vmatpush1.bf16.msra.mxu0 0
      %855 = vmatprep.subr.bf16.mxu0 0
      %856 = vmatpush1.bf16.msra.mxu0 0
      %857 = vmatprep.subr.bf16.mxu0 0
      %858 = vmatpush1.bf16.msra.mxu0 0
      %859 = vmatprep.subr.bf16.mxu0 0
      %860 = vmatpush1.bf16.msra.mxu0 0
      %861 = vmatprep.subr.bf16.mxu0 0
      %862 = vmatpush1.bf16.msra.mxu0 0
      %863 = vmatprep.subr.bf16.mxu0 0
      %864 = vmatpush1.bf16.msra.mxu0 0
      %865 = vmatprep.subr.bf16.mxu0 0
      %866 = vmatpush1.bf16.msra.mxu0 0
      %867 = vmatprep.subr.bf16.mxu0 0
      %868 = vmatpush1.bf16.msra.mxu0 0
      %869 = vmatprep.subr.bf16.mxu0 0
      %870 = vmatpush1.bf16.msra.mxu0 0
      %871 = vmatprep.mubr.bf16.mxu0 0
      %872 = vmatmul.mubr.bf16.gmra.mrb[0].mxu0 %v828
      %v873 = vpop.f32.mrb[0].mxu0
      %v874 = vadd.f32 %v812, %v873
      %v875 = vpop.f32.mrb[0].mxu0
      %v876 = vpop.f32.mrb[0].mxu0
      %v877 = vadd.f32 %v812, %v876
      %v878 = vpop.f32.mrb[0].mxu0
      %879 = vmatprep.mubr.bf16.mxu0 0
      %880 = vmatmul.mubr.bf16.gmra.mrb[0].mxu0 %v831
      %v881 = vpop.f32.mrb[0].mxu0
      %v882 = vadd.f32 %v812, %v881
      %v883 = vpop.f32.mrb[0].mxu0
      %v884 = vpop.f32.mrb[0].mxu0
      %v885 = vadd.f32 %v812, %v884
      %v886 = vpop.f32.mrb[0].mxu0
      %887 = vmatprep.mubr.bf16.mxu0 0
      %888 = vmatmul.mubr.bf16.gmra.mrb[0].mxu0 %v834
      %v889 = vpop.f32.mrb[0].mxu0
      %v890 = vadd.f32 %v812, %v889
      %v891 = vpop.f32.mrb[0].mxu0
      %v892 = vpop.f32.mrb[0].mxu0
      %v893 = vadd.f32 %v812, %v892
      %v894 = vpop.f32.mrb[0].mxu0
      %895 = vmatprep.mubr.bf16.mxu0 0
      %896 = vmatmul.mubr.bf16.gmra.mrb[0].mxu0 %v837
      %v897 = vpop.f32.mrb[0].mxu0
      %v898 = vadd.f32 %v812, %v897
      %v899 = vpop.f32.mrb[0].mxu0
      %v900 = vpop.f32.mrb[0].mxu0
      %v901 = vadd.f32 %v812, %v900
      %v902 = vpop.f32.mrb[0].mxu0
      %903 = vdwg.mxu0
      %v904 = vld [vmem:[%s9] sm:$0xff]
      %v905 = vld [vmem:[%s9 + $0x8] sm:$0xff]
      %v906 = vld [vmem:[%s9 + $0x10] sm:$0xff]
      %v907 = vld [vmem:[%s9 + $0x18] sm:$0xff]
      %v908 = vld [vmem:[%s9 + $0x20] sm:$0xff]
      %v909 = vld [vmem:[%s9 + $0x28] sm:$0xff]
      %v910 = vld [vmem:[%s9 + $0x30] sm:$0xff]
      %v911 = vld [vmem:[%s9 + $0x38] sm:$0xff]
      %v912 = vld [vmem:[%s10] sm:$0xff]
      %v913 = vld [vmem:[%s10 + $0x8] sm:$0xff]
      %v914 = vld [vmem:[%s10 + $0x10] sm:$0xff]
      %v915 = vld [vmem:[%s10 + $0x18] sm:$0xff]
      %v916 = vld [vmem:[%s10 + $0x20] sm:$0xff]
      %v917 = vld [vmem:[%s10 + $0x28] sm:$0xff]
      %v918 = vld [vmem:[%s10 + $0x30] sm:$0xff]
      %v919 = vld [vmem:[%s10 + $0x38] sm:$0xff]
      %v920 = vmul.f32 %v874, %v904
      %v921 = vmul.f32 %v877, %v905
      %v922 = vmul.f32 %v882, %v906
      %v923 = vmul.f32 %v885, %v907
      %v924 = vmul.f32 %v890, %v908
      %v925 = vmul.f32 %v893, %v909
      %v926 = vmul.f32 %v898, %v910
      %v927 = vmul.f32 %v901, %v911
      %v928 = vadd.f32 %v920, %v912
      %v929 = vadd.f32 %v921, %v913
      %v930 = vadd.f32 %v922, %v914
      %v931 = vadd.f32 %v923, %v915
      %v932 = vadd.f32 %v924, %v916
      %v933 = vadd.f32 %v925, %v917
      %v934 = vadd.f32 %v926, %v918
      %v935 = vadd.f32 %v927, %v919
      %v936 = vld [vmem:[%s11] sm:$0xff]
      %v937 = vld [vmem:[%s11 + $0x8] sm:$0xff]
      %v938 = vld [vmem:[%s11 + $0x10] sm:$0xff]
      %v939 = vld [vmem:[%s11 + $0x18] sm:$0xff]
      %v940 = vld [vmem:[%s11 + $0x20] sm:$0xff]
      %v941 = vld [vmem:[%s11 + $0x28] sm:$0xff]
      %v942 = vld [vmem:[%s11 + $0x30] sm:$0xff]
      %v943 = vld [vmem:[%s11 + $0x38] sm:$0xff]
      %v944 = vld [vmem:[%s11 + $0x40] sm:$0xff]
      %v945 = vld [vmem:[%s11 + $0x48] sm:$0xff]
      %v946 = vld [vmem:[%s11 + $0x50] sm:$0xff]
      %v947 = vld [vmem:[%s11 + $0x58] sm:$0xff]
      %v948 = vld [vmem:[%s11 + $0x60] sm:$0xff]
      %v949 = vld [vmem:[%s11 + $0x68] sm:$0xff]
      %v950 = vld [vmem:[%s11 + $0x70] sm:$0xff]
      %v951 = vld [vmem:[%s11 + $0x78] sm:$0xff]
      %952 = vmatprep.subr.mxu0 0.0
      %953 = vmatpush1.msra.mxu0 %v936
      %954 = vmatprep.subr.mxu0 0.0
      %955 = vmatpush1.msra.mxu0 %v937
      %956 = vmatprep.subr.mxu0 0.0
      %957 = vmatpush1.msra.mxu0 %v938
      %958 = vmatprep.subr.mxu0 0.0
      %959 = vmatpush1.msra.mxu0 %v939
      %960 = vmatprep.subr.mxu0 0.0
      %961 = vmatpush1.msra.mxu0 %v940
      %962 = vmatprep.subr.mxu0 0.0
      %963 = vmatpush1.msra.mxu0 %v941
      %964 = vmatprep.subr.mxu0 0.0
      %965 = vmatpush1.msra.mxu0 %v942
      %966 = vmatprep.subr.mxu0 0.0
      %967 = vmatpush1.msra.mxu0 %v943
      %968 = vmatprep.subr.mxu0 0.0
      %969 = vmatpush1.msra.mxu0 %v944
      %970 = vmatprep.subr.mxu0 0.0
      %971 = vmatpush1.msra.mxu0 %v945
      %972 = vmatprep.subr.mxu0 0.0
      %973 = vmatpush1.msra.mxu0 %v946
      %974 = vmatprep.subr.mxu0 0.0
      %975 = vmatpush1.msra.mxu0 %v947
      %976 = vmatprep.subr.mxu0 0.0
      %977 = vmatpush1.msra.mxu0 %v948
      %978 = vmatprep.subr.mxu0 0.0
      %979 = vmatpush1.msra.mxu0 %v949
      %980 = vmatprep.subr.mxu0 0.0
      %981 = vmatpush1.msra.mxu0 %v950
      %982 = vmatprep.subr.mxu0 0.0
      %983 = vmatpush1.msra.mxu0 %v951
      %984 = vmatprep.subr.mxu0 0.0
      %985 = vmatpush1.msra.mxu0 0.0
      %986 = vmatprep.subr.mxu0 0.0
      %987 = vmatpush1.msra.mxu0 0.0
      %988 = vmatprep.subr.mxu0 0.0
      %989 = vmatpush1.msra.mxu0 0.0
      %990 = vmatprep.subr.mxu0 0.0
      %991 = vmatpush1.msra.mxu0 0.0
      %992 = vmatprep.subr.mxu0 0.0
      %993 = vmatpush1.msra.mxu0 0.0
      %994 = vmatprep.subr.mxu0 0.0
      %995 = vmatpush1.msra.mxu0 0.0
      %996 = vmatprep.subr.mxu0 0.0
      %997 = vmatpush1.msra.mxu0 0.0
      %998 = vmatprep.subr.mxu0 0.0
      %999 = vmatpush1.msra.mxu0 0.0
      %1000 = vmatprep.subr.mxu0 0.0
      %1001 = vmatpush1.msra.mxu0 0.0
      %1002 = vmatprep.subr.mxu0 0.0
      %1003 = vmatpush1.msra.mxu0 0.0
      %1004 = vmatprep.subr.mxu0 0.0
      %1005 = vmatpush1.msra.mxu0 0.0
      %1006 = vmatprep.subr.mxu0 0.0
      %1007 = vmatpush1.msra.mxu0 0.0
      %1008 = vmatprep.subr.mxu0 0.0
      %1009 = vmatpush1.msra.mxu0 0.0
      %1010 = vmatprep.subr.mxu0 0.0
      %1011 = vmatpush1.msra.mxu0 0.0
      %1012 = vmatprep.subr.mxu0 0.0
      %1013 = vmatpush1.msra.mxu0 0.0
      %1014 = vmatprep.subr.mxu0 0.0
      %1015 = vmatpush1.msra.mxu0 0.0
      %1016 = vmatprep.mubr.f32.mxu0 0.0
      %1017 = vmatmul.mubr.f32.gmra.mrb[0].mxu0 %v928
      %v1018 = vpop.f32.mrb[0].mxu0
      %v1019 = vadd.f32 0.0, %v1018
      %v1020 = vpop.f32.mrb[0].mxu0
      %1021 = vmatprep.mubr.f32.mxu0 0.0
      %1022 = vmatmul.mubr.f32.gmra.mrb[0].mxu0 %v929
      %v1023 = vpop.f32.mrb[0].mxu0
      %v1024 = vadd.f32 0.0, %v1023
      %v1025 = vpop.f32.mrb[0].mxu0
      %1026 = vmatprep.mubr.f32.mxu0 0.0
      %1027 = vmatmul.mubr.f32.gmra.mrb[0].mxu0 %v930
      %v1028 = vpop.f32.mrb[0].mxu0
      %v1029 = vadd.f32 0.0, %v1028
      %v1030 = vpop.f32.mrb[0].mxu0
      %1031 = vmatprep.mubr.f32.mxu0 0.0
      %1032 = vmatmul.mubr.f32.gmra.mrb[0].mxu0 %v931
      %v1033 = vpop.f32.mrb[0].mxu0
      %v1034 = vadd.f32 0.0, %v1033
      %v1035 = vpop.f32.mrb[0].mxu0
      %1036 = vmatprep.mubr.f32.mxu0 0.0
      %1037 = vmatmul.mubr.f32.gmra.mrb[0].mxu0 %v932
      %v1038 = vpop.f32.mrb[0].mxu0
      %v1039 = vadd.f32 0.0, %v1038
      %v1040 = vpop.f32.mrb[0].mxu0
      %1041 = vmatprep.mubr.f32.mxu0 0.0
      %1042 = vmatmul.mubr.f32.gmra.mrb[0].mxu0 %v933
      %v1043 = vpop.f32.mrb[0].mxu0
      %v1044 = vadd.f32 0.0, %v1043
      %v1045 = vpop.f32.mrb[0].mxu0
      %1046 = vmatprep.mubr.f32.mxu0 0.0
      %1047 = vmatmul.mubr.f32.gmra.mrb[0].mxu0 %v934
      %v1048 = vpop.f32.mrb[0].mxu0
      %v1049 = vadd.f32 0.0, %v1048
      %v1050 = vpop.f32.mrb[0].mxu0
      %1051 = vmatprep.mubr.f32.mxu0 0.0
      %1052 = vmatmul.mubr.f32.gmra.mrb[0].mxu0 %v935
      %v1053 = vpop.f32.mrb[0].mxu0
      %v1054 = vadd.f32 0.0, %v1053
      %v1055 = vpop.f32.mrb[0].mxu0
      %1056 = vdwg.mxu0
      %v1057 = vsub.f32 0.0, %v1019
      %v1058 = vsub.f32 0.0, %v1024
      %v1059 = vsub.f32 0.0, %v1029
      %v1060 = vsub.f32 0.0, %v1034
      %v1061 = vsub.f32 0.0, %v1039
      %v1062 = vsub.f32 0.0, %v1044
      %v1063 = vsub.f32 0.0, %v1049
      %v1064 = vsub.f32 0.0, %v1054
      %v1065 = vmul.f32 %v1057, 1.442695
      %v1066 = vpow.pop %v1065
      %v1067 = vmul.f32 %v1058, 1.442695
      %v1068 = vpow.pop %v1067
      %v1069 = vmul.f32 %v1059, 1.442695
      %v1070 = vpow.pop %v1069
      %v1071 = vmul.f32 %v1060, 1.442695
      %v1072 = vpow.pop %v1071
      %v1073 = vmul.f32 %v1061, 1.442695
      %v1074 = vpow.pop %v1073
      %v1075 = vmul.f32 %v1062, 1.442695
      %v1076 = vpow.pop %v1075
      %v1077 = vmul.f32 %v1063, 1.442695
      %v1078 = vpow.pop %v1077
      %v1079 = vmul.f32 %v1064, 1.442695
      %v1080 = vpow.pop %v1079
      %v1081 = vadd.f32 %v1066, 1.0
      %v1082 = vadd.f32 %v1068, 1.0
      %v1083 = vadd.f32 %v1070, 1.0
      %v1084 = vadd.f32 %v1072, 1.0
      %v1085 = vadd.f32 %v1074, 1.0
      %v1086 = vadd.f32 %v1076, 1.0
      %v1087 = vadd.f32 %v1078, 1.0
      %v1088 = vadd.f32 %v1080, 1.0
      %v1089 = vrcp.pop %v1081
      %v1090 = vrcp.pop %v1082
      %v1091 = vrcp.pop %v1083
      %v1092 = vrcp.pop %v1084
      %v1093 = vrcp.pop %v1085
      %v1094 = vrcp.pop %v1086
      %v1095 = vrcp.pop %v1087
      %v1096 = vrcp.pop %v1088
      %v1097 = vsel %vm538, 1, 0
      %vm1098 = vcmp.eq.s32.totalorder %v1097, 1
      %v1099 = vsel %vm1098, %v1089, %v1019
      %v1100 = vsel %vm1098, %v1090, %v1024
      %v1101 = vsel %vm1098, %v1091, %v1029
      %v1102 = vsel %vm1098, %v1092, %v1034
      %v1103 = vsel %vm1098, %v1093, %v1039
      %v1104 = vsel %vm1098, %v1094, %v1044
      %v1105 = vsel %vm1098, %v1095, %v1049
      %v1106 = vsel %vm1098, %v1096, %v1054
      %1107 = vst [vmem:[%s529] sm:$0xff] %v1099
      %1108 = vst [vmem:[%s529 + $0x8] sm:$0xff] %v1100
      %1109 = vst [vmem:[%s529 + $0x10] sm:$0xff] %v1101
      %1110 = vst [vmem:[%s529 + $0x18] sm:$0xff] %v1102
      %1111 = vst [vmem:[%s529 + $0x20] sm:$0xff] %v1103
      %1112 = vst [vmem:[%s529 + $0x28] sm:$0xff] %v1104
      %1113 = vst [vmem:[%s529 + $0x30] sm:$0xff] %v1105
      %1114 = vst [vmem:[%s529 + $0x38] sm:$0xff] %v1106
      %v1115 = vld [vmem:[%s524 + $0x40] sm:$0xff]
      %v1116 = vld [vmem:[%s524 + $0x48] sm:$0xff]
      %v1117 = vld [vmem:[%s524 + $0x50] sm:$0xff]
      %v1118 = vld [vmem:[%s524 + $0x58] sm:$0xff]
      %v1119 = vld [vmem:[%s524 + $0x60] sm:$0xff]
      %v1120 = vld [vmem:[%s524 + $0x68] sm:$0xff]
      %v1121 = vld [vmem:[%s524 + $0x70] sm:$0xff]
      %v1122 = vld [vmem:[%s524 + $0x78] sm:$0xff]
      %v1131 = vunpack.c.l.b16 %v1115
      %v1132 = vunpack.c.h.b16 %v1115
      %v1133 = vunpack.c.l.b16 %v1116
      %v1134 = vunpack.c.h.b16 %v1116
      %v1135 = vunpack.c.l.b16 %v1117
      %v1136 = vunpack.c.h.b16 %v1117
      %v1137 = vunpack.c.l.b16 %v1118
      %v1138 = vunpack.c.h.b16 %v1118
      %v1139 = vunpack.c.l.b16 %v1119
      %v1140 = vunpack.c.h.b16 %v1119
      %v1141 = vunpack.c.l.b16 %v1120
      %v1142 = vunpack.c.h.b16 %v1120
      %v1143 = vunpack.c.l.b16 %v1121
      %v1144 = vunpack.c.h.b16 %v1121
      %v1145 = vunpack.c.l.b16 %v1122
      %v1146 = vunpack.c.h.b16 %v1122
      %v1147 = vpack.c.b16 %v1133, %v1131
      %v1148 = vpack.c.b16 %v1134, %v1132
      %v1149 = vpack.c.b16 %v1137, %v1135
      %v1150 = vpack.c.b16 %v1138, %v1136
      %v1151 = vpack.c.b16 %v1141, %v1139
      %v1152 = vpack.c.b16 %v1142, %v1140
      %v1153 = vpack.c.b16 %v1145, %v1143
      %v1154 = vpack.c.b16 %v1146, %v1144
      %v1160 = vsel %vm718, %v1148, 0
      %v1163 = vsel %vm718, %v1150, 0
      %v1166 = vsel %vm718, %v1152, 0
      %v1169 = vsel %vm718, %v1154, 0
      %1171 = vmatprep.subr.bf16.mxu0 0
      %1172 = vmatpush1.bf16.msra.mxu0 %v694
      %1173 = vmatprep.subr.bf16.mxu0 0
      %1174 = vmatpush1.bf16.msra.mxu0 %v695
      %1175 = vmatprep.subr.bf16.mxu0 0
      %1176 = vmatpush1.bf16.msra.mxu0 %v696
      %1177 = vmatprep.subr.bf16.mxu0 0
      %1178 = vmatpush1.bf16.msra.mxu0 %v697
      %1179 = vmatprep.subr.bf16.mxu0 0
      %1180 = vmatpush1.bf16.msra.mxu0 %v698
      %1181 = vmatprep.subr.bf16.mxu0 0
      %1182 = vmatpush1.bf16.msra.mxu0 %v699
      %1183 = vmatprep.subr.bf16.mxu0 0
      %1184 = vmatpush1.bf16.msra.mxu0 %v700
      %1185 = vmatprep.subr.bf16.mxu0 0
      %1186 = vmatpush1.bf16.msra.mxu0 %v701
      %1187 = vmatprep.subr.bf16.mxu0 0
      %1188 = vmatpush1.bf16.msra.mxu0 %v702
      %1189 = vmatprep.subr.bf16.mxu0 0
      %1190 = vmatpush1.bf16.msra.mxu0 %v703
      %1191 = vmatprep.subr.bf16.mxu0 0
      %1192 = vmatpush1.bf16.msra.mxu0 %v704
      %1193 = vmatprep.subr.bf16.mxu0 0
      %1194 = vmatpush1.bf16.msra.mxu0 %v705
      %1195 = vmatprep.subr.bf16.mxu0 0
      %1196 = vmatpush1.bf16.msra.mxu0 0
      %1197 = vmatprep.subr.bf16.mxu0 0
      %1198 = vmatpush1.bf16.msra.mxu0 0
      %1199 = vmatprep.subr.bf16.mxu0 0
      %1200 = vmatpush1.bf16.msra.mxu0 0
      %1201 = vmatprep.subr.bf16.mxu0 0
      %1202 = vmatpush1.bf16.msra.mxu0 0
      %1203 = vmatprep.mubr.bf16.mxu0 %v1160
      %1204 = vmatmul.mubr.bf16.gmra.mrb[0].mxu0 %v1147
      %v1205 = vpop.f32.mrb[0].mxu0
      %v1206 = vadd.f32 %v608, %v1205
      %v1207 = vpop.f32.mrb[0].mxu0
      %v1208 = vpop.f32.mrb[0].mxu0
      %v1209 = vadd.f32 %v608, %v1208
      %v1210 = vpop.f32.mrb[0].mxu0
      %1211 = vmatprep.mubr.bf16.mxu0 %v1163
      %1212 = vmatmul.mubr.bf16.gmra.mrb[0].mxu0 %v1149
      %v1213 = vpop.f32.mrb[0].mxu0
      %v1214 = vadd.f32 %v608, %v1213
      %v1215 = vpop.f32.mrb[0].mxu0
      %v1216 = vpop.f32.mrb[0].mxu0
      %v1217 = vadd.f32 %v608, %v1216
      %v1218 = vpop.f32.mrb[0].mxu0
      %1219 = vmatprep.mubr.bf16.mxu0 %v1166
      %1220 = vmatmul.mubr.bf16.gmra.mrb[0].mxu0 %v1151
      %v1221 = vpop.f32.mrb[0].mxu0
      %v1222 = vadd.f32 %v608, %v1221
      %v1223 = vpop.f32.mrb[0].mxu0
      %v1224 = vpop.f32.mrb[0].mxu0
      %v1225 = vadd.f32 %v608, %v1224
      %v1226 = vpop.f32.mrb[0].mxu0
      %1227 = vmatprep.mubr.bf16.mxu0 %v1169
      %1228 = vmatmul.mubr.bf16.gmra.mrb[0].mxu0 %v1153
      %v1229 = vpop.f32.mrb[0].mxu0
      %v1230 = vadd.f32 %v608, %v1229
      %v1231 = vpop.f32.mrb[0].mxu0
      %v1232 = vpop.f32.mrb[0].mxu0
      %v1233 = vadd.f32 %v608, %v1232
      %v1234 = vpop.f32.mrb[0].mxu0
      %1235 = vdwg.mxu0
      %v1236 = vmax.f32 %v1206, 0.0
      %v1237 = vmax.f32 %v1209, 0.0
      %v1238 = vmax.f32 %v1214, 0.0
      %v1239 = vmax.f32 %v1217, 0.0
      %v1240 = vmax.f32 %v1222, 0.0
      %v1241 = vmax.f32 %v1225, 0.0
      %v1242 = vmax.f32 %v1230, 0.0
      %v1243 = vmax.f32 %v1233, 0.0
      %v1244 = vpack.c.bf16 %v1237, %v1236
      %v1245 = vpack.c.bf16 %v1239, %v1238
      %v1246 = vpack.c.bf16 %v1241, %v1240
      %v1247 = vpack.c.bf16 %v1243, %v1242
      %v1252 = vunpack.c.l.b16 %v568
      %v1253 = vunpack.c.l.b16 %v569
      %v1254 = vunpack.c.l.b16 %v570
      %v1255 = vunpack.c.l.b16 %v571
      %v1256 = vpack.c.b16 %v1253, %v1252
      %v1257 = vpack.c.b16 %v1255, %v1254
      %v1261 = vsel %vm826, %v1244, 0
      %v1264 = vsel %vm826, %v1245, 0
      %v1267 = vsel %vm826, %v1246, 0
      %v1270 = vsel %vm826, %v1247, 0
      %1272 = vmatprep.subr.bf16.mxu0 0
      %1273 = vmatpush1.bf16.msra.mxu0 %v1256
      %1274 = vmatprep.subr.bf16.mxu0 0
      %1275 = vmatpush1.bf16.msra.mxu0 %v1257
      %1276 = vmatprep.subr.bf16.mxu0 0
      %1277 = vmatpush1.bf16.msra.mxu0 0
      %1278 = vmatprep.subr.bf16.mxu0 0
      %1279 = vmatpush1.bf16.msra.mxu0 0
      %1280 = vmatprep.subr.bf16.mxu0 0
      %1281 = vmatpush1.bf16.msra.mxu0 0
      %1282 = vmatprep.subr.bf16.mxu0 0
      %1283 = vmatpush1.bf16.msra.mxu0 0
      %1284 = vmatprep.subr.bf16.mxu0 0
      %1285 = vmatpush1.bf16.msra.mxu0 0
      %1286 = vmatprep.subr.bf16.mxu0 0
      %1287 = vmatpush1.bf16.msra.mxu0 0
      %1288 = vmatprep.subr.bf16.mxu0 0
      %1289 = vmatpush1.bf16.msra.mxu0 0
      %1290 = vmatprep.subr.bf16.mxu0 0
      %1291 = vmatpush1.bf16.msra.mxu0 0
      %1292 = vmatprep.subr.bf16.mxu0 0
      %1293 = vmatpush1.bf16.msra.mxu0 0
      %1294 = vmatprep.subr.bf16.mxu0 0
      %1295 = vmatpush1.bf16.msra.mxu0 0
      %1296 = vmatprep.subr.bf16.mxu0 0
      %1297 = vmatpush1.bf16.msra.mxu0 0
      %1298 = vmatprep.subr.bf16.mxu0 0
      %1299 = vmatpush1.bf16.msra.mxu0 0
      %1300 = vmatprep.subr.bf16.mxu0 0
      %1301 = vmatpush1.bf16.msra.mxu0 0
      %1302 = vmatprep.subr.bf16.mxu0 0
      %1303 = vmatpush1.bf16.msra.mxu0 0
      %1304 = vmatprep.mubr.bf16.mxu0 0
      %1305 = vmatmul.mubr.bf16.gmra.mrb[0].mxu0 %v1261
      %v1306 = vpop.f32.mrb[0].mxu0
      %v1307 = vadd.f32 0.0, %v1306
      %v1308 = vpop.f32.mrb[0].mxu0
      %v1309 = vpop.f32.mrb[0].mxu0
      %v1310 = vadd.f32 0.0, %v1309
      %v1311 = vpop.f32.mrb[0].mxu0
      %1312 = vmatprep.mubr.bf16.mxu0 0
      %1313 = vmatmul.mubr.bf16.gmra.mrb[0].mxu0 %v1264
      %v1314 = vpop.f32.mrb[0].mxu0
      %v1315 = vadd.f32 0.0, %v1314
      %v1316 = vpop.f32.mrb[0].mxu0
      %v1317 = vpop.f32.mrb[0].mxu0
      %v1318 = vadd.f32 0.0, %v1317
      %v1319 = vpop.f32.mrb[0].mxu0
      %1320 = vmatprep.mubr.bf16.mxu0 0
      %1321 = vmatmul.mubr.bf16.gmra.mrb[0].mxu0 %v1267
      %v1322 = vpop.f32.mrb[0].mxu0
      %v1323 = vadd.f32 0.0, %v1322
      %v1324 = vpop.f32.mrb[0].mxu0
      %v1325 = vpop.f32.mrb[0].mxu0
      %v1326 = vadd.f32 0.0, %v1325
      %v1327 = vpop.f32.mrb[0].mxu0
      %1328 = vmatprep.mubr.bf16.mxu0 0
      %1329 = vmatmul.mubr.bf16.gmra.mrb[0].mxu0 %v1270
      %v1330 = vpop.f32.mrb[0].mxu0
      %v1331 = vadd.f32 0.0, %v1330
      %v1332 = vpop.f32.mrb[0].mxu0
      %v1333 = vpop.f32.mrb[0].mxu0
      %v1334 = vadd.f32 0.0, %v1333
      %v1335 = vpop.f32.mrb[0].mxu0
      %1336 = vdwg.mxu0
      %v1341 = vunpack.c.l.b16 %v564
      %v1342 = vunpack.c.l.b16 %v565
      %v1343 = vunpack.c.l.b16 %v566
      %v1344 = vunpack.c.l.b16 %v567
      %v1345 = vpack.c.b16 %v1342, %v1341
      %v1346 = vpack.c.b16 %v1344, %v1343
      %1349 = vmatprep.subr.bf16.mxu0 0
      %1350 = vmatpush1.bf16.msra.mxu0 %v1345
      %1351 = vmatprep.subr.bf16.mxu0 0
      %1352 = vmatpush1.bf16.msra.mxu0 %v1346
      %1353 = vmatprep.subr.bf16.mxu0 0
      %1354 = vmatpush1.bf16.msra.mxu0 0
      %1355 = vmatprep.subr.bf16.mxu0 0
      %1356 = vmatpush1.bf16.msra.mxu0 0
      %1357 = vmatprep.subr.bf16.mxu0 0
      %1358 = vmatpush1.bf16.msra.mxu0 0
      %1359 = vmatprep.subr.bf16.mxu0 0
      %1360 = vmatpush1.bf16.msra.mxu0 0
      %1361 = vmatprep.subr.bf16.mxu0 0
      %1362 = vmatpush1.bf16.msra.mxu0 0
      %1363 = vmatprep.subr.bf16.mxu0 0
      %1364 = vmatpush1.bf16.msra.mxu0 0
      %1365 = vmatprep.subr.bf16.mxu0 0
      %1366 = vmatpush1.bf16.msra.mxu0 0
      %1367 = vmatprep.subr.bf16.mxu0 0
      %1368 = vmatpush1.bf16.msra.mxu0 0
      %1369 = vmatprep.subr.bf16.mxu0 0
      %1370 = vmatpush1.bf16.msra.mxu0 0
      %1371 = vmatprep.subr.bf16.mxu0 0
      %1372 = vmatpush1.bf16.msra.mxu0 0
      %1373 = vmatprep.subr.bf16.mxu0 0
      %1374 = vmatpush1.bf16.msra.mxu0 0
      %1375 = vmatprep.subr.bf16.mxu0 0
      %1376 = vmatpush1.bf16.msra.mxu0 0
      %1377 = vmatprep.subr.bf16.mxu0 0
      %1378 = vmatpush1.bf16.msra.mxu0 0
      %1379 = vmatprep.subr.bf16.mxu0 0
      %1380 = vmatpush1.bf16.msra.mxu0 0
      %1381 = vmatprep.mubr.bf16.mxu0 0
      %1382 = vmatmul.mubr.bf16.gmra.mrb[0].mxu0 %v828
      %v1383 = vpop.f32.mrb[0].mxu0
      %v1384 = vadd.f32 %v1307, %v1383
      %v1385 = vpop.f32.mrb[0].mxu0
      %v1386 = vpop.f32.mrb[0].mxu0
      %v1387 = vadd.f32 %v1310, %v1386
      %v1388 = vpop.f32.mrb[0].mxu0
      %1389 = vmatprep.mubr.bf16.mxu0 0
      %1390 = vmatmul.mubr.bf16.gmra.mrb[0].mxu0 %v831
      %v1391 = vpop.f32.mrb[0].mxu0
      %v1392 = vadd.f32 %v1315, %v1391
      %v1393 = vpop.f32.mrb[0].mxu0
      %v1394 = vpop.f32.mrb[0].mxu0
      %v1395 = vadd.f32 %v1318, %v1394
      %v1396 = vpop.f32.mrb[0].mxu0
      %1397 = vmatprep.mubr.bf16.mxu0 0
      %1398 = vmatmul.mubr.bf16.gmra.mrb[0].mxu0 %v834
      %v1399 = vpop.f32.mrb[0].mxu0
      %v1400 = vadd.f32 %v1323, %v1399
      %v1401 = vpop.f32.mrb[0].mxu0
      %v1402 = vpop.f32.mrb[0].mxu0
      %v1403 = vadd.f32 %v1326, %v1402
      %v1404 = vpop.f32.mrb[0].mxu0
      %1405 = vmatprep.mubr.bf16.mxu0 0
      %1406 = vmatmul.mubr.bf16.gmra.mrb[0].mxu0 %v837
      %v1407 = vpop.f32.mrb[0].mxu0
      %v1408 = vadd.f32 %v1331, %v1407
      %v1409 = vpop.f32.mrb[0].mxu0
      %v1410 = vpop.f32.mrb[0].mxu0
      %v1411 = vadd.f32 %v1334, %v1410
      %v1412 = vpop.f32.mrb[0].mxu0
      %1413 = vdwg.mxu0
      %1414 = vmatprep.subr.bf16.mxu0 0
      %1415 = vmatpush1.bf16.msra.mxu0 %v822
      %1416 = vmatprep.subr.bf16.mxu0 0
      %1417 = vmatpush1.bf16.msra.mxu0 %v823
      %1418 = vmatprep.subr.bf16.mxu0 0
      %1419 = vmatpush1.bf16.msra.mxu0 0
      %1420 = vmatprep.subr.bf16.mxu0 0
      %1421 = vmatpush1.bf16.msra.mxu0 0
      %1422 = vmatprep.subr.bf16.mxu0 0
      %1423 = vmatpush1.bf16.msra.mxu0 0
      %1424 = vmatprep.subr.bf16.mxu0 0
      %1425 = vmatpush1.bf16.msra.mxu0 0
      %1426 = vmatprep.subr.bf16.mxu0 0
      %1427 = vmatpush1.bf16.msra.mxu0 0
      %1428 = vmatprep.subr.bf16.mxu0 0
      %1429 = vmatpush1.bf16.msra.mxu0 0
      %1430 = vmatprep.subr.bf16.mxu0 0
      %1431 = vmatpush1.bf16.msra.mxu0 0
      %1432 = vmatprep.subr.bf16.mxu0 0
      %1433 = vmatpush1.bf16.msra.mxu0 0
      %1434 = vmatprep.subr.bf16.mxu0 0
      %1435 = vmatpush1.bf16.msra.mxu0 0
      %1436 = vmatprep.subr.bf16.mxu0 0
      %1437 = vmatpush1.bf16.msra.mxu0 0
      %1438 = vmatprep.subr.bf16.mxu0 0
      %1439 = vmatpush1.bf16.msra.mxu0 0
      %1440 = vmatprep.subr.bf16.mxu0 0
      %1441 = vmatpush1.bf16.msra.mxu0 0
      %1442 = vmatprep.subr.bf16.mxu0 0
      %1443 = vmatpush1.bf16.msra.mxu0 0
      %1444 = vmatprep.subr.bf16.mxu0 0
      %1445 = vmatpush1.bf16.msra.mxu0 0
      %1446 = vmatprep.mubr.bf16.mxu0 0
      %1447 = vmatmul.mubr.bf16.gmra.mrb[0].mxu0 %v1261
      %v1448 = vpop.f32.mrb[0].mxu0
      %v1449 = vadd.f32 %v812, %v1448
      %v1450 = vpop.f32.mrb[0].mxu0
      %v1451 = vpop.f32.mrb[0].mxu0
      %v1452 = vadd.f32 %v812, %v1451
      %v1453 = vpop.f32.mrb[0].mxu0
      %1454 = vmatprep.mubr.bf16.mxu0 0
      %1455 = vmatmul.mubr.bf16.gmra.mrb[0].mxu0 %v1264
      %v1456 = vpop.f32.mrb[0].mxu0
      %v1457 = vadd.f32 %v812, %v1456
      %v1458 = vpop.f32.mrb[0].mxu0
      %v1459 = vpop.f32.mrb[0].mxu0
      %v1460 = vadd.f32 %v812, %v1459
      %v1461 = vpop.f32.mrb[0].mxu0
      %1462 = vmatprep.mubr.bf16.mxu0 0
      %1463 = vmatmul.mubr.bf16.gmra.mrb[0].mxu0 %v1267
      %v1464 = vpop.f32.mrb[0].mxu0
      %v1465 = vadd.f32 %v812, %v1464
      %v1466 = vpop.f32.mrb[0].mxu0
      %v1467 = vpop.f32.mrb[0].mxu0
      %v1468 = vadd.f32 %v812, %v1467
      %v1469 = vpop.f32.mrb[0].mxu0
      %1470 = vmatprep.mubr.bf16.mxu0 0
      %1471 = vmatmul.mubr.bf16.gmra.mrb[0].mxu0 %v1270
      %v1472 = vpop.f32.mrb[0].mxu0
      %v1473 = vadd.f32 %v812, %v1472
      %v1474 = vpop.f32.mrb[0].mxu0
      %v1475 = vpop.f32.mrb[0].mxu0
      %v1476 = vadd.f32 %v812, %v1475
      %v1477 = vpop.f32.mrb[0].mxu0
      %1478 = vdwg.mxu0
      %v1479 = vld [vmem:[%s9 + $0x40] sm:$0xff]
      %v1480 = vld [vmem:[%s9 + $0x48] sm:$0xff]
      %v1481 = vld [vmem:[%s9 + $0x50] sm:$0xff]
      %v1482 = vld [vmem:[%s9 + $0x58] sm:$0xff]
      %v1483 = vld [vmem:[%s9 + $0x60] sm:$0xff]
      %v1484 = vld [vmem:[%s9 + $0x68] sm:$0xff]
      %v1485 = vld [vmem:[%s9 + $0x70] sm:$0xff]
      %v1486 = vld [vmem:[%s9 + $0x78] sm:$0xff]
      %v1487 = vld [vmem:[%s10 + $0x40] sm:$0xff]
      %v1488 = vld [vmem:[%s10 + $0x48] sm:$0xff]
      %v1489 = vld [vmem:[%s10 + $0x50] sm:$0xff]
      %v1490 = vld [vmem:[%s10 + $0x58] sm:$0xff]
      %v1491 = vld [vmem:[%s10 + $0x60] sm:$0xff]
      %v1492 = vld [vmem:[%s10 + $0x68] sm:$0xff]
      %v1493 = vld [vmem:[%s10 + $0x70] sm:$0xff]
      %v1494 = vld [vmem:[%s10 + $0x78] sm:$0xff]
      %v1495 = vmul.f32 %v1449, %v1479
      %v1496 = vmul.f32 %v1452, %v1480
      %v1497 = vmul.f32 %v1457, %v1481
      %v1498 = vmul.f32 %v1460, %v1482
      %v1499 = vmul.f32 %v1465, %v1483
      %v1500 = vmul.f32 %v1468, %v1484
      %v1501 = vmul.f32 %v1473, %v1485
      %v1502 = vmul.f32 %v1476, %v1486
      %v1503 = vadd.f32 %v1495, %v1487
      %v1504 = vadd.f32 %v1496, %v1488
      %v1505 = vadd.f32 %v1497, %v1489
      %v1506 = vadd.f32 %v1498, %v1490
      %v1507 = vadd.f32 %v1499, %v1491
      %v1508 = vadd.f32 %v1500, %v1492
      %v1509 = vadd.f32 %v1501, %v1493
      %v1510 = vadd.f32 %v1502, %v1494
      %v1511 = vld [vmem:[%s11] sm:$0xff]
      %v1512 = vld [vmem:[%s11 + $0x8] sm:$0xff]
      %v1513 = vld [vmem:[%s11 + $0x10] sm:$0xff]
      %v1514 = vld [vmem:[%s11 + $0x18] sm:$0xff]
      %v1515 = vld [vmem:[%s11 + $0x20] sm:$0xff]
      %v1516 = vld [vmem:[%s11 + $0x28] sm:$0xff]
      %v1517 = vld [vmem:[%s11 + $0x30] sm:$0xff]
      %v1518 = vld [vmem:[%s11 + $0x38] sm:$0xff]
      %v1519 = vld [vmem:[%s11 + $0x40] sm:$0xff]
      %v1520 = vld [vmem:[%s11 + $0x48] sm:$0xff]
      %v1521 = vld [vmem:[%s11 + $0x50] sm:$0xff]
      %v1522 = vld [vmem:[%s11 + $0x58] sm:$0xff]
      %v1523 = vld [vmem:[%s11 + $0x60] sm:$0xff]
      %v1524 = vld [vmem:[%s11 + $0x68] sm:$0xff]
      %v1525 = vld [vmem:[%s11 + $0x70] sm:$0xff]
      %v1526 = vld [vmem:[%s11 + $0x78] sm:$0xff]
      %1527 = vmatprep.subr.mxu0 0.0
      %1528 = vmatpush1.msra.mxu0 %v1511
      %1529 = vmatprep.subr.mxu0 0.0
      %1530 = vmatpush1.msra.mxu0 %v1512
      %1531 = vmatprep.subr.mxu0 0.0
      %1532 = vmatpush1.msra.mxu0 %v1513
      %1533 = vmatprep.subr.mxu0 0.0
      %1534 = vmatpush1.msra.mxu0 %v1514
      %1535 = vmatprep.subr.mxu0 0.0
      %1536 = vmatpush1.msra.mxu0 %v1515
      %1537 = vmatprep.subr.mxu0 0.0
      %1538 = vmatpush1.msra.mxu0 %v1516
      %1539 = vmatprep.subr.mxu0 0.0
      %1540 = vmatpush1.msra.mxu0 %v1517
      %1541 = vmatprep.subr.mxu0 0.0
      %1542 = vmatpush1.msra.mxu0 %v1518
      %1543 = vmatprep.subr.mxu0 0.0
      %1544 = vmatpush1.msra.mxu0 %v1519
      %1545 = vmatprep.subr.mxu0 0.0
      %1546 = vmatpush1.msra.mxu0 %v1520
      %1547 = vmatprep.subr.mxu0 0.0
      %1548 = vmatpush1.msra.mxu0 %v1521
      %1549 = vmatprep.subr.mxu0 0.0
      %1550 = vmatpush1.msra.mxu0 %v1522
      %1551 = vmatprep.subr.mxu0 0.0
      %1552 = vmatpush1.msra.mxu0 %v1523
      %1553 = vmatprep.subr.mxu0 0.0
      %1554 = vmatpush1.msra.mxu0 %v1524
      %1555 = vmatprep.subr.mxu0 0.0
      %1556 = vmatpush1.msra.mxu0 %v1525
      %1557 = vmatprep.subr.mxu0 0.0
      %1558 = vmatpush1.msra.mxu0 %v1526
      %1559 = vmatprep.subr.mxu0 0.0
      %1560 = vmatpush1.msra.mxu0 0.0
      %1561 = vmatprep.subr.mxu0 0.0
      %1562 = vmatpush1.msra.mxu0 0.0
      %1563 = vmatprep.subr.mxu0 0.0
      %1564 = vmatpush1.msra.mxu0 0.0
      %1565 = vmatprep.subr.mxu0 0.0
      %1566 = vmatpush1.msra.mxu0 0.0
      %1567 = vmatprep.subr.mxu0 0.0
      %1568 = vmatpush1.msra.mxu0 0.0
      %1569 = vmatprep.subr.mxu0 0.0
      %1570 = vmatpush1.msra.mxu0 0.0
      %1571 = vmatprep.subr.mxu0 0.0
      %1572 = vmatpush1.msra.mxu0 0.0
      %1573 = vmatprep.subr.mxu0 0.0
      %1574 = vmatpush1.msra.mxu0 0.0
      %1575 = vmatprep.subr.mxu0 0.0
      %1576 = vmatpush1.msra.mxu0 0.0
      %1577 = vmatprep.subr.mxu0 0.0
      %1578 = vmatpush1.msra.mxu0 0.0
      %1579 = vmatprep.subr.mxu0 0.0
      %1580 = vmatpush1.msra.mxu0 0.0
      %1581 = vmatprep.subr.mxu0 0.0
      %1582 = vmatpush1.msra.mxu0 0.0
      %1583 = vmatprep.subr.mxu0 0.0
      %1584 = vmatpush1.msra.mxu0 0.0
      %1585 = vmatprep.subr.mxu0 0.0
      %1586 = vmatpush1.msra.mxu0 0.0
      %1587 = vmatprep.subr.mxu0 0.0
      %1588 = vmatpush1.msra.mxu0 0.0
      %1589 = vmatprep.subr.mxu0 0.0
      %1590 = vmatpush1.msra.mxu0 0.0
      %1591 = vmatprep.mubr.f32.mxu0 0.0
      %1592 = vmatmul.mubr.f32.gmra.mrb[0].mxu0 %v1503
      %v1593 = vpop.f32.mrb[0].mxu0
      %v1594 = vadd.f32 0.0, %v1593
      %v1595 = vpop.f32.mrb[0].mxu0
      %1596 = vmatprep.mubr.f32.mxu0 0.0
      %1597 = vmatmul.mubr.f32.gmra.mrb[0].mxu0 %v1504
      %v1598 = vpop.f32.mrb[0].mxu0
      %v1599 = vadd.f32 0.0, %v1598
      %v1600 = vpop.f32.mrb[0].mxu0
      %1601 = vmatprep.mubr.f32.mxu0 0.0
      %1602 = vmatmul.mubr.f32.gmra.mrb[0].mxu0 %v1505
      %v1603 = vpop.f32.mrb[0].mxu0
      %v1604 = vadd.f32 0.0, %v1603
      %v1605 = vpop.f32.mrb[0].mxu0
      %1606 = vmatprep.mubr.f32.mxu0 0.0
      %1607 = vmatmul.mubr.f32.gmra.mrb[0].mxu0 %v1506
      %v1608 = vpop.f32.mrb[0].mxu0
      %v1609 = vadd.f32 0.0, %v1608
      %v1610 = vpop.f32.mrb[0].mxu0
      %1611 = vmatprep.mubr.f32.mxu0 0.0
      %1612 = vmatmul.mubr.f32.gmra.mrb[0].mxu0 %v1507
      %v1613 = vpop.f32.mrb[0].mxu0
      %v1614 = vadd.f32 0.0, %v1613
      %v1615 = vpop.f32.mrb[0].mxu0
      %1616 = vmatprep.mubr.f32.mxu0 0.0
      %1617 = vmatmul.mubr.f32.gmra.mrb[0].mxu0 %v1508
      %v1618 = vpop.f32.mrb[0].mxu0
      %v1619 = vadd.f32 0.0, %v1618
      %v1620 = vpop.f32.mrb[0].mxu0
      %1621 = vmatprep.mubr.f32.mxu0 0.0
      %1622 = vmatmul.mubr.f32.gmra.mrb[0].mxu0 %v1509
      %v1623 = vpop.f32.mrb[0].mxu0
      %v1624 = vadd.f32 0.0, %v1623
      %v1625 = vpop.f32.mrb[0].mxu0
      %1626 = vmatprep.mubr.f32.mxu0 0.0
      %1627 = vmatmul.mubr.f32.gmra.mrb[0].mxu0 %v1510
      %v1628 = vpop.f32.mrb[0].mxu0
      %v1629 = vadd.f32 0.0, %v1628
      %v1630 = vpop.f32.mrb[0].mxu0
      %1631 = vdwg.mxu0
      %v1632 = vsub.f32 0.0, %v1594
      %v1633 = vsub.f32 0.0, %v1599
      %v1634 = vsub.f32 0.0, %v1604
      %v1635 = vsub.f32 0.0, %v1609
      %v1636 = vsub.f32 0.0, %v1614
      %v1637 = vsub.f32 0.0, %v1619
      %v1638 = vsub.f32 0.0, %v1624
      %v1639 = vsub.f32 0.0, %v1629
      %v1640 = vmul.f32 %v1632, 1.442695
      %v1641 = vpow.pop %v1640
      %v1642 = vmul.f32 %v1633, 1.442695
      %v1643 = vpow.pop %v1642
      %v1644 = vmul.f32 %v1634, 1.442695
      %v1645 = vpow.pop %v1644
      %v1646 = vmul.f32 %v1635, 1.442695
      %v1647 = vpow.pop %v1646
      %v1648 = vmul.f32 %v1636, 1.442695
      %v1649 = vpow.pop %v1648
      %v1650 = vmul.f32 %v1637, 1.442695
      %v1651 = vpow.pop %v1650
      %v1652 = vmul.f32 %v1638, 1.442695
      %v1653 = vpow.pop %v1652
      %v1654 = vmul.f32 %v1639, 1.442695
      %v1655 = vpow.pop %v1654
      %v1656 = vadd.f32 %v1641, 1.0
      %v1657 = vadd.f32 %v1643, 1.0
      %v1658 = vadd.f32 %v1645, 1.0
      %v1659 = vadd.f32 %v1647, 1.0
      %v1660 = vadd.f32 %v1649, 1.0
      %v1661 = vadd.f32 %v1651, 1.0
      %v1662 = vadd.f32 %v1653, 1.0
      %v1663 = vadd.f32 %v1655, 1.0
      %v1664 = vrcp.pop %v1656
      %v1665 = vrcp.pop %v1657
      %v1666 = vrcp.pop %v1658
      %v1667 = vrcp.pop %v1659
      %v1668 = vrcp.pop %v1660
      %v1669 = vrcp.pop %v1661
      %v1670 = vrcp.pop %v1662
      %v1671 = vrcp.pop %v1663
      %v1672 = vsel %vm1098, %v1664, %v1594
      %v1673 = vsel %vm1098, %v1665, %v1599
      %v1674 = vsel %vm1098, %v1666, %v1604
      %v1675 = vsel %vm1098, %v1667, %v1609
      %v1676 = vsel %vm1098, %v1668, %v1614
      %v1677 = vsel %vm1098, %v1669, %v1619
      %v1678 = vsel %vm1098, %v1670, %v1624
      %v1679 = vsel %vm1098, %v1671, %v1629
      %1680 = vst [vmem:[%s529 + $0x40] sm:$0xff] %v1672
      %1681 = vst [vmem:[%s529 + $0x48] sm:$0xff] %v1673
      %1682 = vst [vmem:[%s529 + $0x50] sm:$0xff] %v1674
      %1683 = vst [vmem:[%s529 + $0x58] sm:$0xff] %v1675
      %1684 = vst [vmem:[%s529 + $0x60] sm:$0xff] %v1676
      %1685 = vst [vmem:[%s529 + $0x68] sm:$0xff] %v1677
      %1686 = vst [vmem:[%s529 + $0x70] sm:$0xff] %v1678
      %1687 = vst [vmem:[%s529 + $0x78] sm:$0xff] %v1679
      %v1688 = vld [vmem:[%s524 + $0x80] sm:$0xff]
      %v1689 = vld [vmem:[%s524 + $0x88] sm:$0xff]
      %v1690 = vld [vmem:[%s524 + $0x90] sm:$0xff]
      %v1691 = vld [vmem:[%s524 + $0x98] sm:$0xff]
      %v1692 = vld [vmem:[%s524 + $0xa0] sm:$0xff]
      %v1693 = vld [vmem:[%s524 + $0xa8] sm:$0xff]
      %v1694 = vld [vmem:[%s524 + $0xb0] sm:$0xff]
      %v1695 = vld [vmem:[%s524 + $0xb8] sm:$0xff]
      %v1704 = vunpack.c.l.b16 %v1688
      %v1705 = vunpack.c.h.b16 %v1688
      %v1706 = vunpack.c.l.b16 %v1689
      %v1707 = vunpack.c.h.b16 %v1689
      %v1708 = vunpack.c.l.b16 %v1690
      %v1709 = vunpack.c.h.b16 %v1690
      %v1710 = vunpack.c.l.b16 %v1691
      %v1711 = vunpack.c.h.b16 %v1691
      %v1712 = vunpack.c.l.b16 %v1692
      %v1713 = vunpack.c.h.b16 %v1692
      %v1714 = vunpack.c.l.b16 %v1693
      %v1715 = vunpack.c.h.b16 %v1693
      %v1716 = vunpack.c.l.b16 %v1694
      %v1717 = vunpack.c.h.b16 %v1694
      %v1718 = vunpack.c.l.b16 %v1695
      %v1719 = vunpack.c.h.b16 %v1695
      %v1720 = vpack.c.b16 %v1706, %v1704
      %v1721 = vpack.c.b16 %v1707, %v1705
      %v1722 = vpack.c.b16 %v1710, %v1708
      %v1723 = vpack.c.b16 %v1711, %v1709
      %v1724 = vpack.c.b16 %v1714, %v1712
      %v1725 = vpack.c.b16 %v1715, %v1713
      %v1726 = vpack.c.b16 %v1718, %v1716
      %v1727 = vpack.c.b16 %v1719, %v1717
      %v1733 = vsel %vm718, %v1721, 0
      %v1736 = vsel %vm718, %v1723, 0
      %v1739 = vsel %vm718, %v1725, 0
      %v1742 = vsel %vm718, %v1727, 0
      %1744 = vmatprep.subr.bf16.mxu0 0
      %1745 = vmatpush1.bf16.msra.mxu0 %v694
      %1746 = vmatprep.subr.bf16.mxu0 0
      %1747 = vmatpush1.bf16.msra.mxu0 %v695
      %1748 = vmatprep.subr.bf16.mxu0 0
      %1749 = vmatpush1.bf16.msra.mxu0 %v696
      %1750 = vmatprep.subr.bf16.mxu0 0
      %1751 = vmatpush1.bf16.msra.mxu0 %v697
      %1752 = vmatprep.subr.bf16.mxu0 0
      %1753 = vmatpush1.bf16.msra.mxu0 %v698
      %1754 = vmatprep.subr.bf16.mxu0 0
      %1755 = vmatpush1.bf16.msra.mxu0 %v699
      %1756 = vmatprep.subr.bf16.mxu0 0
      %1757 = vmatpush1.bf16.msra.mxu0 %v700
      %1758 = vmatprep.subr.bf16.mxu0 0
      %1759 = vmatpush1.bf16.msra.mxu0 %v701
      %1760 = vmatprep.subr.bf16.mxu0 0
      %1761 = vmatpush1.bf16.msra.mxu0 %v702
      %1762 = vmatprep.subr.bf16.mxu0 0
      %1763 = vmatpush1.bf16.msra.mxu0 %v703
      %1764 = vmatprep.subr.bf16.mxu0 0
      %1765 = vmatpush1.bf16.msra.mxu0 %v704
      %1766 = vmatprep.subr.bf16.mxu0 0
      %1767 = vmatpush1.bf16.msra.mxu0 %v705
      %1768 = vmatprep.subr.bf16.mxu0 0
      %1769 = vmatpush1.bf16.msra.mxu0 0
      %1770 = vmatprep.subr.bf16.mxu0 0
      %1771 = vmatpush1.bf16.msra.mxu0 0
      %1772 = vmatprep.subr.bf16.mxu0 0
      %1773 = vmatpush1.bf16.msra.mxu0 0
      %1774 = vmatprep.subr.bf16.mxu0 0
      %1775 = vmatpush1.bf16.msra.mxu0 0
      %1776 = vmatprep.mubr.bf16.mxu0 %v1733
      %1777 = vmatmul.mubr.bf16.gmra.mrb[0].mxu0 %v1720
      %v1778 = vpop.f32.mrb[0].mxu0
      %v1779 = vadd.f32 %v608, %v1778
      %v1780 = vpop.f32.mrb[0].mxu0
      %v1781 = vpop.f32.mrb[0].mxu0
      %v1782 = vadd.f32 %v608, %v1781
      %v1783 = vpop.f32.mrb[0].mxu0
      %1784 = vmatprep.mubr.bf16.mxu0 %v1736
      %1785 = vmatmul.mubr.bf16.gmra.mrb[0].mxu0 %v1722
      %v1786 = vpop.f32.mrb[0].mxu0
      %v1787 = vadd.f32 %v608, %v1786
      %v1788 = vpop.f32.mrb[0].mxu0
      %v1789 = vpop.f32.mrb[0].mxu0
      %v1790 = vadd.f32 %v608, %v1789
      %v1791 = vpop.f32.mrb[0].mxu0
      %1792 = vmatprep.mubr.bf16.mxu0 %v1739
      %1793 = vmatmul.mubr.bf16.gmra.mrb[0].mxu0 %v1724
      %v1794 = vpop.f32.mrb[0].mxu0
      %v1795 = vadd.f32 %v608, %v1794
      %v1796 = vpop.f32.mrb[0].mxu0
      %v1797 = vpop.f32.mrb[0].mxu0
      %v1798 = vadd.f32 %v608, %v1797
      %v1799 = vpop.f32.mrb[0].mxu0
      %1800 = vmatprep.mubr.bf16.mxu0 %v1742
      %1801 = vmatmul.mubr.bf16.gmra.mrb[0].mxu0 %v1726
      %v1802 = vpop.f32.mrb[0].mxu0
      %v1803 = vadd.f32 %v608, %v1802
      %v1804 = vpop.f32.mrb[0].mxu0
      %v1805 = vpop.f32.mrb[0].mxu0
      %v1806 = vadd.f32 %v608, %v1805
      %v1807 = vpop.f32.mrb[0].mxu0
      %1808 = vdwg.mxu0
      %v1809 = vmax.f32 %v1779, 0.0
      %v1810 = vmax.f32 %v1782, 0.0
      %v1811 = vmax.f32 %v1787, 0.0
      %v1812 = vmax.f32 %v1790, 0.0
      %v1813 = vmax.f32 %v1795, 0.0
      %v1814 = vmax.f32 %v1798, 0.0
      %v1815 = vmax.f32 %v1803, 0.0
      %v1816 = vmax.f32 %v1806, 0.0
      %v1817 = vpack.c.bf16 %v1810, %v1809
      %v1818 = vpack.c.bf16 %v1812, %v1811
      %v1819 = vpack.c.bf16 %v1814, %v1813
      %v1820 = vpack.c.bf16 %v1816, %v1815
      %v1825 = vunpack.c.l.b16 %v572
      %v1826 = vunpack.c.l.b16 %v573
      %v1827 = vunpack.c.l.b16 %v574
      %v1828 = vunpack.c.l.b16 %v575
      %v1829 = vpack.c.b16 %v1826, %v1825
      %v1830 = vpack.c.b16 %v1828, %v1827
      %v1834 = vsel %vm826, %v1817, 0
      %v1837 = vsel %vm826, %v1818, 0
      %v1840 = vsel %vm826, %v1819, 0
      %v1843 = vsel %vm826, %v1820, 0
      %1845 = vmatprep.subr.bf16.mxu0 0
      %1846 = vmatpush1.bf16.msra.mxu0 %v1829
      %1847 = vmatprep.subr.bf16.mxu0 0
      %1848 = vmatpush1.bf16.msra.mxu0 %v1830
      %1849 = vmatprep.subr.bf16.mxu0 0
      %1850 = vmatpush1.bf16.msra.mxu0 0
      %1851 = vmatprep.subr.bf16.mxu0 0
      %1852 = vmatpush1.bf16.msra.mxu0 0
      %1853 = vmatprep.subr.bf16.mxu0 0
      %1854 = vmatpush1.bf16.msra.mxu0 0
      %1855 = vmatprep.subr.bf16.mxu0 0
      %1856 = vmatpush1.bf16.msra.mxu0 0
      %1857 = vmatprep.subr.bf16.mxu0 0
      %1858 = vmatpush1.bf16.msra.mxu0 0
      %1859 = vmatprep.subr.bf16.mxu0 0
      %1860 = vmatpush1.bf16.msra.mxu0 0
      %1861 = vmatprep.subr.bf16.mxu0 0
      %1862 = vmatpush1.bf16.msra.mxu0 0
      %1863 = vmatprep.subr.bf16.mxu0 0
      %1864 = vmatpush1.bf16.msra.mxu0 0
      %1865 = vmatprep.subr.bf16.mxu0 0
      %1866 = vmatpush1.bf16.msra.mxu0 0
      %1867 = vmatprep.subr.bf16.mxu0 0
      %1868 = vmatpush1.bf16.msra.mxu0 0
      %1869 = vmatprep.subr.bf16.mxu0 0
      %1870 = vmatpush1.bf16.msra.mxu0 0
      %1871 = vmatprep.subr.bf16.mxu0 0
      %1872 = vmatpush1.bf16.msra.mxu0 0
      %1873 = vmatprep.subr.bf16.mxu0 0
      %1874 = vmatpush1.bf16.msra.mxu0 0
      %1875 = vmatprep.subr.bf16.mxu0 0
      %1876 = vmatpush1.bf16.msra.mxu0 0
      %1877 = vmatprep.mubr.bf16.mxu0 0
      %1878 = vmatmul.mubr.bf16.gmra.mrb[0].mxu0 %v1834
      %v1879 = vpop.f32.mrb[0].mxu0
      %v1880 = vadd.f32 0.0, %v1879
      %v1881 = vpop.f32.mrb[0].mxu0
      %v1882 = vpop.f32.mrb[0].mxu0
      %v1883 = vadd.f32 0.0, %v1882
      %v1884 = vpop.f32.mrb[0].mxu0
      %1885 = vmatprep.mubr.bf16.mxu0 0
      %1886 = vmatmul.mubr.bf16.gmra.mrb[0].mxu0 %v1837
      %v1887 = vpop.f32.mrb[0].mxu0
      %v1888 = vadd.f32 0.0, %v1887
      %v1889 = vpop.f32.mrb[0].mxu0
      %v1890 = vpop.f32.mrb[0].mxu0
      %v1891 = vadd.f32 0.0, %v1890
      %v1892 = vpop.f32.mrb[0].mxu0
      %1893 = vmatprep.mubr.bf16.mxu0 0
      %1894 = vmatmul.mubr.bf16.gmra.mrb[0].mxu0 %v1840
      %v1895 = vpop.f32.mrb[0].mxu0
      %v1896 = vadd.f32 0.0, %v1895
      %v1897 = vpop.f32.mrb[0].mxu0
      %v1898 = vpop.f32.mrb[0].mxu0
      %v1899 = vadd.f32 0.0, %v1898
      %v1900 = vpop.f32.mrb[0].mxu0
      %1901 = vmatprep.mubr.bf16.mxu0 0
      %1902 = vmatmul.mubr.bf16.gmra.mrb[0].mxu0 %v1843
      %v1903 = vpop.f32.mrb[0].mxu0
      %v1904 = vadd.f32 0.0, %v1903
      %v1905 = vpop.f32.mrb[0].mxu0
      %v1906 = vpop.f32.mrb[0].mxu0
      %v1907 = vadd.f32 0.0, %v1906
      %v1908 = vpop.f32.mrb[0].mxu0
      %1909 = vdwg.mxu0
      %v1910 = vadd.f32 %v1384, %v1880
      %v1911 = vadd.f32 %v1387, %v1883
      %v1912 = vadd.f32 %v1392, %v1888
      %v1913 = vadd.f32 %v1395, %v1891
      %v1914 = vadd.f32 %v1400, %v1896
      %v1915 = vadd.f32 %v1403, %v1899
      %v1916 = vadd.f32 %v1408, %v1904
      %v1917 = vadd.f32 %v1411, %v1907
      %1918 = vmatprep.subr.bf16.mxu0 0
      %1919 = vmatpush1.bf16.msra.mxu0 %v822
      %1920 = vmatprep.subr.bf16.mxu0 0
      %1921 = vmatpush1.bf16.msra.mxu0 %v823
      %1922 = vmatprep.subr.bf16.mxu0 0
      %1923 = vmatpush1.bf16.msra.mxu0 0
      %1924 = vmatprep.subr.bf16.mxu0 0
      %1925 = vmatpush1.bf16.msra.mxu0 0
      %1926 = vmatprep.subr.bf16.mxu0 0
      %1927 = vmatpush1.bf16.msra.mxu0 0
      %1928 = vmatprep.subr.bf16.mxu0 0
      %1929 = vmatpush1.bf16.msra.mxu0 0
      %1930 = vmatprep.subr.bf16.mxu0 0
      %1931 = vmatpush1.bf16.msra.mxu0 0
      %1932 = vmatprep.subr.bf16.mxu0 0
      %1933 = vmatpush1.bf16.msra.mxu0 0
      %1934 = vmatprep.subr.bf16.mxu0 0
      %1935 = vmatpush1.bf16.msra.mxu0 0
      %1936 = vmatprep.subr.bf16.mxu0 0
      %1937 = vmatpush1.bf16.msra.mxu0 0
      %1938 = vmatprep.subr.bf16.mxu0 0
      %1939 = vmatpush1.bf16.msra.mxu0 0
      %1940 = vmatprep.subr.bf16.mxu0 0
      %1941 = vmatpush1.bf16.msra.mxu0 0
      %1942 = vmatprep.subr.bf16.mxu0 0
      %1943 = vmatpush1.bf16.msra.mxu0 0
      %1944 = vmatprep.subr.bf16.mxu0 0
      %1945 = vmatpush1.bf16.msra.mxu0 0
      %1946 = vmatprep.subr.bf16.mxu0 0
      %1947 = vmatpush1.bf16.msra.mxu0 0
      %1948 = vmatprep.subr.bf16.mxu0 0
      %1949 = vmatpush1.bf16.msra.mxu0 0
      %1950 = vmatprep.mubr.bf16.mxu0 0
      %1951 = vmatmul.mubr.bf16.gmra.mrb[0].mxu0 %v1834
      %v1952 = vpop.f32.mrb[0].mxu0
      %v1953 = vadd.f32 %v812, %v1952
      %v1954 = vpop.f32.mrb[0].mxu0
      %v1955 = vpop.f32.mrb[0].mxu0
      %v1956 = vadd.f32 %v812, %v1955
      %v1957 = vpop.f32.mrb[0].mxu0
      %1958 = vmatprep.mubr.bf16.mxu0 0
      %1959 = vmatmul.mubr.bf16.gmra.mrb[0].mxu0 %v1837
      %v1960 = vpop.f32.mrb[0].mxu0
      %v1961 = vadd.f32 %v812, %v1960
      %v1962 = vpop.f32.mrb[0].mxu0
      %v1963 = vpop.f32.mrb[0].mxu0
      %v1964 = vadd.f32 %v812, %v1963
      %v1965 = vpop.f32.mrb[0].mxu0
      %1966 = vmatprep.mubr.bf16.mxu0 0
      %1967 = vmatmul.mubr.bf16.gmra.mrb[0].mxu0 %v1840
      %v1968 = vpop.f32.mrb[0].mxu0
      %v1969 = vadd.f32 %v812, %v1968
      %v1970 = vpop.f32.mrb[0].mxu0
      %v1971 = vpop.f32.mrb[0].mxu0
      %v1972 = vadd.f32 %v812, %v1971
      %v1973 = vpop.f32.mrb[0].mxu0
      %1974 = vmatprep.mubr.bf16.mxu0 0
      %1975 = vmatmul.mubr.bf16.gmra.mrb[0].mxu0 %v1843
      %v1976 = vpop.f32.mrb[0].mxu0
      %v1977 = vadd.f32 %v812, %v1976
      %v1978 = vpop.f32.mrb[0].mxu0
      %v1979 = vpop.f32.mrb[0].mxu0
      %v1980 = vadd.f32 %v812, %v1979
      %v1981 = vpop.f32.mrb[0].mxu0
      %1982 = vdwg.mxu0
      %v1983 = vld [vmem:[%s9 + $0x80] sm:$0xff]
      %v1984 = vld [vmem:[%s9 + $0x88] sm:$0xff]
      %v1985 = vld [vmem:[%s9 + $0x90] sm:$0xff]
      %v1986 = vld [vmem:[%s9 + $0x98] sm:$0xff]
      %v1987 = vld [vmem:[%s9 + $0xa0] sm:$0xff]
      %v1988 = vld [vmem:[%s9 + $0xa8] sm:$0xff]
      %v1989 = vld [vmem:[%s9 + $0xb0] sm:$0xff]
      %v1990 = vld [vmem:[%s9 + $0xb8] sm:$0xff]
      %v1991 = vld [vmem:[%s10 + $0x80] sm:$0xff]
      %v1992 = vld [vmem:[%s10 + $0x88] sm:$0xff]
      %v1993 = vld [vmem:[%s10 + $0x90] sm:$0xff]
      %v1994 = vld [vmem:[%s10 + $0x98] sm:$0xff]
      %v1995 = vld [vmem:[%s10 + $0xa0] sm:$0xff]
      %v1996 = vld [vmem:[%s10 + $0xa8] sm:$0xff]
      %v1997 = vld [vmem:[%s10 + $0xb0] sm:$0xff]
      %v1998 = vld [vmem:[%s10 + $0xb8] sm:$0xff]
      %v1999 = vmul.f32 %v1953, %v1983
      %v2000 = vmul.f32 %v1956, %v1984
      %v2001 = vmul.f32 %v1961, %v1985
      %v2002 = vmul.f32 %v1964, %v1986
      %v2003 = vmul.f32 %v1969, %v1987
      %v2004 = vmul.f32 %v1972, %v1988
      %v2005 = vmul.f32 %v1977, %v1989
      %v2006 = vmul.f32 %v1980, %v1990
      %v2007 = vadd.f32 %v1999, %v1991
      %v2008 = vadd.f32 %v2000, %v1992
      %v2009 = vadd.f32 %v2001, %v1993
      %v2010 = vadd.f32 %v2002, %v1994
      %v2011 = vadd.f32 %v2003, %v1995
      %v2012 = vadd.f32 %v2004, %v1996
      %v2013 = vadd.f32 %v2005, %v1997
      %v2014 = vadd.f32 %v2006, %v1998
      %v2015 = vld [vmem:[%s11] sm:$0xff]
      %v2016 = vld [vmem:[%s11 + $0x8] sm:$0xff]
      %v2017 = vld [vmem:[%s11 + $0x10] sm:$0xff]
      %v2018 = vld [vmem:[%s11 + $0x18] sm:$0xff]
      %v2019 = vld [vmem:[%s11 + $0x20] sm:$0xff]
      %v2020 = vld [vmem:[%s11 + $0x28] sm:$0xff]
      %v2021 = vld [vmem:[%s11 + $0x30] sm:$0xff]
      %v2022 = vld [vmem:[%s11 + $0x38] sm:$0xff]
      %v2023 = vld [vmem:[%s11 + $0x40] sm:$0xff]
      %v2024 = vld [vmem:[%s11 + $0x48] sm:$0xff]
      %v2025 = vld [vmem:[%s11 + $0x50] sm:$0xff]
      %v2026 = vld [vmem:[%s11 + $0x58] sm:$0xff]
      %v2027 = vld [vmem:[%s11 + $0x60] sm:$0xff]
      %v2028 = vld [vmem:[%s11 + $0x68] sm:$0xff]
      %v2029 = vld [vmem:[%s11 + $0x70] sm:$0xff]
      %v2030 = vld [vmem:[%s11 + $0x78] sm:$0xff]
      %2031 = vmatprep.subr.mxu0 0.0
      %2032 = vmatpush1.msra.mxu0 %v2015
      %2033 = vmatprep.subr.mxu0 0.0
      %2034 = vmatpush1.msra.mxu0 %v2016
      %2035 = vmatprep.subr.mxu0 0.0
      %2036 = vmatpush1.msra.mxu0 %v2017
      %2037 = vmatprep.subr.mxu0 0.0
      %2038 = vmatpush1.msra.mxu0 %v2018
      %2039 = vmatprep.subr.mxu0 0.0
      %2040 = vmatpush1.msra.mxu0 %v2019
      %2041 = vmatprep.subr.mxu0 0.0
      %2042 = vmatpush1.msra.mxu0 %v2020
      %2043 = vmatprep.subr.mxu0 0.0
      %2044 = vmatpush1.msra.mxu0 %v2021
      %2045 = vmatprep.subr.mxu0 0.0
      %2046 = vmatpush1.msra.mxu0 %v2022
      %2047 = vmatprep.subr.mxu0 0.0
      %2048 = vmatpush1.msra.mxu0 %v2023
      %2049 = vmatprep.subr.mxu0 0.0
      %2050 = vmatpush1.msra.mxu0 %v2024
      %2051 = vmatprep.subr.mxu0 0.0
      %2052 = vmatpush1.msra.mxu0 %v2025
      %2053 = vmatprep.subr.mxu0 0.0
      %2054 = vmatpush1.msra.mxu0 %v2026
      %2055 = vmatprep.subr.mxu0 0.0
      %2056 = vmatpush1.msra.mxu0 %v2027
      %2057 = vmatprep.subr.mxu0 0.0
      %2058 = vmatpush1.msra.mxu0 %v2028
      %2059 = vmatprep.subr.mxu0 0.0
      %2060 = vmatpush1.msra.mxu0 %v2029
      %2061 = vmatprep.subr.mxu0 0.0
      %2062 = vmatpush1.msra.mxu0 %v2030
      %2063 = vmatprep.subr.mxu0 0.0
      %2064 = vmatpush1.msra.mxu0 0.0
      %2065 = vmatprep.subr.mxu0 0.0
      %2066 = vmatpush1.msra.mxu0 0.0
      %2067 = vmatprep.subr.mxu0 0.0
      %2068 = vmatpush1.msra.mxu0 0.0
      %2069 = vmatprep.subr.mxu0 0.0
      %2070 = vmatpush1.msra.mxu0 0.0
      %2071 = vmatprep.subr.mxu0 0.0
      %2072 = vmatpush1.msra.mxu0 0.0
      %2073 = vmatprep.subr.mxu0 0.0
      %2074 = vmatpush1.msra.mxu0 0.0
      %2075 = vmatprep.subr.mxu0 0.0
      %2076 = vmatpush1.msra.mxu0 0.0
      %2077 = vmatprep.subr.mxu0 0.0
      %2078 = vmatpush1.msra.mxu0 0.0
      %2079 = vmatprep.subr.mxu0 0.0
      %2080 = vmatpush1.msra.mxu0 0.0
      %2081 = vmatprep.subr.mxu0 0.0
      %2082 = vmatpush1.msra.mxu0 0.0
      %2083 = vmatprep.subr.mxu0 0.0
      %2084 = vmatpush1.msra.mxu0 0.0
      %2085 = vmatprep.subr.mxu0 0.0
      %2086 = vmatpush1.msra.mxu0 0.0
      %2087 = vmatprep.subr.mxu0 0.0
      %2088 = vmatpush1.msra.mxu0 0.0
      %2089 = vmatprep.subr.mxu0 0.0
      %2090 = vmatpush1.msra.mxu0 0.0
      %2091 = vmatprep.subr.mxu0 0.0
      %2092 = vmatpush1.msra.mxu0 0.0
      %2093 = vmatprep.subr.mxu0 0.0
      %2094 = vmatpush1.msra.mxu0 0.0
      %2095 = vmatprep.mubr.f32.mxu0 0.0
      %2096 = vmatmul.mubr.f32.gmra.mrb[0].mxu0 %v2007
      %v2097 = vpop.f32.mrb[0].mxu0
      %v2098 = vadd.f32 0.0, %v2097
      %v2099 = vpop.f32.mrb[0].mxu0
      %2100 = vmatprep.mubr.f32.mxu0 0.0
      %2101 = vmatmul.mubr.f32.gmra.mrb[0].mxu0 %v2008
      %v2102 = vpop.f32.mrb[0].mxu0
      %v2103 = vadd.f32 0.0, %v2102
      %v2104 = vpop.f32.mrb[0].mxu0
      %2105 = vmatprep.mubr.f32.mxu0 0.0
      %2106 = vmatmul.mubr.f32.gmra.mrb[0].mxu0 %v2009
      %v2107 = vpop.f32.mrb[0].mxu0
      %v2108 = vadd.f32 0.0, %v2107
      %v2109 = vpop.f32.mrb[0].mxu0
      %2110 = vmatprep.mubr.f32.mxu0 0.0
      %2111 = vmatmul.mubr.f32.gmra.mrb[0].mxu0 %v2010
      %v2112 = vpop.f32.mrb[0].mxu0
      %v2113 = vadd.f32 0.0, %v2112
      %v2114 = vpop.f32.mrb[0].mxu0
      %2115 = vmatprep.mubr.f32.mxu0 0.0
      %2116 = vmatmul.mubr.f32.gmra.mrb[0].mxu0 %v2011
      %v2117 = vpop.f32.mrb[0].mxu0
      %v2118 = vadd.f32 0.0, %v2117
      %v2119 = vpop.f32.mrb[0].mxu0
      %2120 = vmatprep.mubr.f32.mxu0 0.0
      %2121 = vmatmul.mubr.f32.gmra.mrb[0].mxu0 %v2012
      %v2122 = vpop.f32.mrb[0].mxu0
      %v2123 = vadd.f32 0.0, %v2122
      %v2124 = vpop.f32.mrb[0].mxu0
      %2125 = vmatprep.mubr.f32.mxu0 0.0
      %2126 = vmatmul.mubr.f32.gmra.mrb[0].mxu0 %v2013
      %v2127 = vpop.f32.mrb[0].mxu0
      %v2128 = vadd.f32 0.0, %v2127
      %v2129 = vpop.f32.mrb[0].mxu0
      %2130 = vmatprep.mubr.f32.mxu0 0.0
      %2131 = vmatmul.mubr.f32.gmra.mrb[0].mxu0 %v2014
      %v2132 = vpop.f32.mrb[0].mxu0
      %v2133 = vadd.f32 0.0, %v2132
      %v2134 = vpop.f32.mrb[0].mxu0
      %2135 = vdwg.mxu0
      %v2136 = vsub.f32 0.0, %v2098
      %v2137 = vsub.f32 0.0, %v2103
      %v2138 = vsub.f32 0.0, %v2108
      %v2139 = vsub.f32 0.0, %v2113
      %v2140 = vsub.f32 0.0, %v2118
      %v2141 = vsub.f32 0.0, %v2123
      %v2142 = vsub.f32 0.0, %v2128
      %v2143 = vsub.f32 0.0, %v2133
      %v2144 = vmul.f32 %v2136, 1.442695
      %v2145 = vpow.pop %v2144
      %v2146 = vmul.f32 %v2137, 1.442695
      %v2147 = vpow.pop %v2146
      %v2148 = vmul.f32 %v2138, 1.442695
      %v2149 = vpow.pop %v2148
      %v2150 = vmul.f32 %v2139, 1.442695
      %v2151 = vpow.pop %v2150
      %v2152 = vmul.f32 %v2140, 1.442695
      %v2153 = vpow.pop %v2152
      %v2154 = vmul.f32 %v2141, 1.442695
      %v2155 = vpow.pop %v2154
      %v2156 = vmul.f32 %v2142, 1.442695
      %v2157 = vpow.pop %v2156
      %v2158 = vmul.f32 %v2143, 1.442695
      %v2159 = vpow.pop %v2158
      %v2160 = vadd.f32 %v2145, 1.0
      %v2161 = vadd.f32 %v2147, 1.0
      %v2162 = vadd.f32 %v2149, 1.0
      %v2163 = vadd.f32 %v2151, 1.0
      %v2164 = vadd.f32 %v2153, 1.0
      %v2165 = vadd.f32 %v2155, 1.0
      %v2166 = vadd.f32 %v2157, 1.0
      %v2167 = vadd.f32 %v2159, 1.0
      %v2168 = vrcp.pop %v2160
      %v2169 = vrcp.pop %v2161
      %v2170 = vrcp.pop %v2162
      %v2171 = vrcp.pop %v2163
      %v2172 = vrcp.pop %v2164
      %v2173 = vrcp.pop %v2165
      %v2174 = vrcp.pop %v2166
      %v2175 = vrcp.pop %v2167
      %v2176 = vsel %vm1098, %v2168, %v2098
      %v2177 = vsel %vm1098, %v2169, %v2103
      %v2178 = vsel %vm1098, %v2170, %v2108
      %v2179 = vsel %vm1098, %v2171, %v2113
      %v2180 = vsel %vm1098, %v2172, %v2118
      %v2181 = vsel %vm1098, %v2173, %v2123
      %v2182 = vsel %vm1098, %v2174, %v2128
      %v2183 = vsel %vm1098, %v2175, %v2133
      %2184 = vst [vmem:[%s529 + $0x80] sm:$0xff] %v2176
      %2185 = vst [vmem:[%s529 + $0x88] sm:$0xff] %v2177
      %2186 = vst [vmem:[%s529 + $0x90] sm:$0xff] %v2178
      %2187 = vst [vmem:[%s529 + $0x98] sm:$0xff] %v2179
      %2188 = vst [vmem:[%s529 + $0xa0] sm:$0xff] %v2180
      %2189 = vst [vmem:[%s529 + $0xa8] sm:$0xff] %v2181
      %2190 = vst [vmem:[%s529 + $0xb0] sm:$0xff] %v2182
      %2191 = vst [vmem:[%s529 + $0xb8] sm:$0xff] %v2183
      %v2192 = vld [vmem:[%s524 + $0xc0] sm:$0xff]
      %v2193 = vld [vmem:[%s524 + $0xc8] sm:$0xff]
      %v2194 = vld [vmem:[%s524 + $0xd0] sm:$0xff]
      %v2195 = vld [vmem:[%s524 + $0xd8] sm:$0xff]
      %v2196 = vld [vmem:[%s524 + $0xe0] sm:$0xff]
      %v2197 = vld [vmem:[%s524 + $0xe8] sm:$0xff]
      %v2198 = vld [vmem:[%s524 + $0xf0] sm:$0xff]
      %v2199 = vld [vmem:[%s524 + $0xf8] sm:$0xff]
      %v2208 = vunpack.c.l.b16 %v2192
      %v2209 = vunpack.c.h.b16 %v2192
      %v2210 = vunpack.c.l.b16 %v2193
      %v2211 = vunpack.c.h.b16 %v2193
      %v2212 = vunpack.c.l.b16 %v2194
      %v2213 = vunpack.c.h.b16 %v2194
      %v2214 = vunpack.c.l.b16 %v2195
      %v2215 = vunpack.c.h.b16 %v2195
      %v2216 = vunpack.c.l.b16 %v2196
      %v2217 = vunpack.c.h.b16 %v2196
      %v2218 = vunpack.c.l.b16 %v2197
      %v2219 = vunpack.c.h.b16 %v2197
      %v2220 = vunpack.c.l.b16 %v2198
      %v2221 = vunpack.c.h.b16 %v2198
      %v2222 = vunpack.c.l.b16 %v2199
      %v2223 = vunpack.c.h.b16 %v2199
      %v2224 = vpack.c.b16 %v2210, %v2208
      %v2225 = vpack.c.b16 %v2211, %v2209
      %v2226 = vpack.c.b16 %v2214, %v2212
      %v2227 = vpack.c.b16 %v2215, %v2213
      %v2228 = vpack.c.b16 %v2218, %v2216
      %v2229 = vpack.c.b16 %v2219, %v2217
      %v2230 = vpack.c.b16 %v2222, %v2220
      %v2231 = vpack.c.b16 %v2223, %v2221
      %v2237 = vsel %vm718, %v2225, 0
      %v2240 = vsel %vm718, %v2227, 0
      %v2243 = vsel %vm718, %v2229, 0
      %v2246 = vsel %vm718, %v2231, 0
      %2248 = vmatprep.subr.bf16.mxu0 0
      %2249 = vmatpush1.bf16.msra.mxu0 %v694
      %2250 = vmatprep.subr.bf16.mxu0 0
      %2251 = vmatpush1.bf16.msra.mxu0 %v695
      %2252 = vmatprep.subr.bf16.mxu0 0
      %2253 = vmatpush1.bf16.msra.mxu0 %v696
      %2254 = vmatprep.subr.bf16.mxu0 0
      %2255 = vmatpush1.bf16.msra.mxu0 %v697
      %2256 = vmatprep.subr.bf16.mxu0 0
      %2257 = vmatpush1.bf16.msra.mxu0 %v698
      %2258 = vmatprep.subr.bf16.mxu0 0
      %2259 = vmatpush1.bf16.msra.mxu0 %v699
      %2260 = vmatprep.subr.bf16.mxu0 0
      %2261 = vmatpush1.bf16.msra.mxu0 %v700
      %2262 = vmatprep.subr.bf16.mxu0 0
      %2263 = vmatpush1.bf16.msra.mxu0 %v701
      %2264 = vmatprep.subr.bf16.mxu0 0
      %2265 = vmatpush1.bf16.msra.mxu0 %v702
      %2266 = vmatprep.subr.bf16.mxu0 0
      %2267 = vmatpush1.bf16.msra.mxu0 %v703
      %2268 = vmatprep.subr.bf16.mxu0 0
      %2269 = vmatpush1.bf16.msra.mxu0 %v704
      %2270 = vmatprep.subr.bf16.mxu0 0
      %2271 = vmatpush1.bf16.msra.mxu0 %v705
      %2272 = vmatprep.subr.bf16.mxu0 0
      %2273 = vmatpush1.bf16.msra.mxu0 0
      %2274 = vmatprep.subr.bf16.mxu0 0
      %2275 = vmatpush1.bf16.msra.mxu0 0
      %2276 = vmatprep.subr.bf16.mxu0 0
      %2277 = vmatpush1.bf16.msra.mxu0 0
      %2278 = vmatprep.subr.bf16.mxu0 0
      %2279 = vmatpush1.bf16.msra.mxu0 0
      %2280 = vmatprep.mubr.bf16.mxu0 %v2237
      %2281 = vmatmul.mubr.bf16.gmra.mrb[0].mxu0 %v2224
      %v2282 = vpop.f32.mrb[0].mxu0
      %v2283 = vadd.f32 %v608, %v2282
      %v2284 = vpop.f32.mrb[0].mxu0
      %v2285 = vpop.f32.mrb[0].mxu0
      %v2286 = vadd.f32 %v608, %v2285
      %v2287 = vpop.f32.mrb[0].mxu0
      %2288 = vmatprep.mubr.bf16.mxu0 %v2240
      %2289 = vmatmul.mubr.bf16.gmra.mrb[0].mxu0 %v2226
      %v2290 = vpop.f32.mrb[0].mxu0
      %v2291 = vadd.f32 %v608, %v2290
      %v2292 = vpop.f32.mrb[0].mxu0
      %v2293 = vpop.f32.mrb[0].mxu0
      %v2294 = vadd.f32 %v608, %v2293
      %v2295 = vpop.f32.mrb[0].mxu0
      %2296 = vmatprep.mubr.bf16.mxu0 %v2243
      %2297 = vmatmul.mubr.bf16.gmra.mrb[0].mxu0 %v2228
      %v2298 = vpop.f32.mrb[0].mxu0
      %v2299 = vadd.f32 %v608, %v2298
      %v2300 = vpop.f32.mrb[0].mxu0
      %v2301 = vpop.f32.mrb[0].mxu0
      %v2302 = vadd.f32 %v608, %v2301
      %v2303 = vpop.f32.mrb[0].mxu0
      %2304 = vmatprep.mubr.bf16.mxu0 %v2246
      %2305 = vmatmul.mubr.bf16.gmra.mrb[0].mxu0 %v2230
      %v2306 = vpop.f32.mrb[0].mxu0
      %v2307 = vadd.f32 %v608, %v2306
      %v2308 = vpop.f32.mrb[0].mxu0
      %v2309 = vpop.f32.mrb[0].mxu0
      %v2310 = vadd.f32 %v608, %v2309
      %v2311 = vpop.f32.mrb[0].mxu0
      %2312 = vdwg.mxu0
      %v2313 = vmax.f32 %v2283, 0.0
      %v2314 = vmax.f32 %v2286, 0.0
      %v2315 = vmax.f32 %v2291, 0.0
      %v2316 = vmax.f32 %v2294, 0.0
      %v2317 = vmax.f32 %v2299, 0.0
      %v2318 = vmax.f32 %v2302, 0.0
      %v2319 = vmax.f32 %v2307, 0.0
      %v2320 = vmax.f32 %v2310, 0.0
      %v2321 = vpack.c.bf16 %v2314, %v2313
      %v2322 = vpack.c.bf16 %v2316, %v2315
      %v2323 = vpack.c.bf16 %v2318, %v2317
      %v2324 = vpack.c.bf16 %v2320, %v2319
      %v2329 = vunpack.c.l.b16 %v576
      %v2330 = vunpack.c.l.b16 %v577
      %v2331 = vunpack.c.l.b16 %v578
      %v2332 = vunpack.c.l.b16 %v579
      %v2333 = vpack.c.b16 %v2330, %v2329
      %v2334 = vpack.c.b16 %v2332, %v2331
      %v2338 = vsel %vm826, %v2321, 0
      %v2341 = vsel %vm826, %v2322, 0
      %v2344 = vsel %vm826, %v2323, 0
      %v2347 = vsel %vm826, %v2324, 0
      %2349 = vmatprep.subr.bf16.mxu0 0
      %2350 = vmatpush1.bf16.msra.mxu0 %v2333
      %2351 = vmatprep.subr.bf16.mxu0 0
      %2352 = vmatpush1.bf16.msra.mxu0 %v2334
      %2353 = vmatprep.subr.bf16.mxu0 0
      %2354 = vmatpush1.bf16.msra.mxu0 0
      %2355 = vmatprep.subr.bf16.mxu0 0
      %2356 = vmatpush1.bf16.msra.mxu0 0
      %2357 = vmatprep.subr.bf16.mxu0 0
      %2358 = vmatpush1.bf16.msra.mxu0 0
      %2359 = vmatprep.subr.bf16.mxu0 0
      %2360 = vmatpush1.bf16.msra.mxu0 0
      %2361 = vmatprep.subr.bf16.mxu0 0
      %2362 = vmatpush1.bf16.msra.mxu0 0
      %2363 = vmatprep.subr.bf16.mxu0 0
      %2364 = vmatpush1.bf16.msra.mxu0 0
      %2365 = vmatprep.subr.bf16.mxu0 0
      %2366 = vmatpush1.bf16.msra.mxu0 0
      %2367 = vmatprep.subr.bf16.mxu0 0
      %2368 = vmatpush1.bf16.msra.mxu0 0
      %2369 = vmatprep.subr.bf16.mxu0 0
      %2370 = vmatpush1.bf16.msra.mxu0 0
      %2371 = vmatprep.subr.bf16.mxu0 0
      %2372 = vmatpush1.bf16.msra.mxu0 0
      %2373 = vmatprep.subr.bf16.mxu0 0
      %2374 = vmatpush1.bf16.msra.mxu0 0
      %2375 = vmatprep.subr.bf16.mxu0 0
      %2376 = vmatpush1.bf16.msra.mxu0 0
      %2377 = vmatprep.subr.bf16.mxu0 0
      %2378 = vmatpush1.bf16.msra.mxu0 0
      %2379 = vmatprep.subr.bf16.mxu0 0
      %2380 = vmatpush1.bf16.msra.mxu0 0
      %2381 = vmatprep.mubr.bf16.mxu0 0
      %2382 = vmatmul.mubr.bf16.gmra.mrb[0].mxu0 %v2338
      %v2383 = vpop.f32.mrb[0].mxu0
      %v2384 = vadd.f32 0.0, %v2383
      %v2385 = vpop.f32.mrb[0].mxu0
      %v2386 = vpop.f32.mrb[0].mxu0
      %v2387 = vadd.f32 0.0, %v2386
      %v2388 = vpop.f32.mrb[0].mxu0
      %2389 = vmatprep.mubr.bf16.mxu0 0
      %2390 = vmatmul.mubr.bf16.gmra.mrb[0].mxu0 %v2341
      %v2391 = vpop.f32.mrb[0].mxu0
      %v2392 = vadd.f32 0.0, %v2391
      %v2393 = vpop.f32.mrb[0].mxu0
      %v2394 = vpop.f32.mrb[0].mxu0
      %v2395 = vadd.f32 0.0, %v2394
      %v2396 = vpop.f32.mrb[0].mxu0
      %2397 = vmatprep.mubr.bf16.mxu0 0
      %2398 = vmatmul.mubr.bf16.gmra.mrb[0].mxu0 %v2344
      %v2399 = vpop.f32.mrb[0].mxu0
      %v2400 = vadd.f32 0.0, %v2399
      %v2401 = vpop.f32.mrb[0].mxu0
      %v2402 = vpop.f32.mrb[0].mxu0
      %v2403 = vadd.f32 0.0, %v2402
      %v2404 = vpop.f32.mrb[0].mxu0
      %2405 = vmatprep.mubr.bf16.mxu0 0
      %2406 = vmatmul.mubr.bf16.gmra.mrb[0].mxu0 %v2347
      %v2407 = vpop.f32.mrb[0].mxu0
      %v2408 = vadd.f32 0.0, %v2407
      %v2409 = vpop.f32.mrb[0].mxu0
      %v2410 = vpop.f32.mrb[0].mxu0
      %v2411 = vadd.f32 0.0, %v2410
      %v2412 = vpop.f32.mrb[0].mxu0
      %2413 = vdwg.mxu0
      %v2414 = vadd.f32 %v1910, %v2384
      %v2415 = vadd.f32 %v1911, %v2387
      %v2416 = vadd.f32 %v1912, %v2392
      %v2417 = vadd.f32 %v1913, %v2395
      %v2418 = vadd.f32 %v1914, %v2400
      %v2419 = vadd.f32 %v1915, %v2403
      %v2420 = vadd.f32 %v1916, %v2408
      %v2421 = vadd.f32 %v1917, %v2411
      %2422 = vmatprep.subr.bf16.mxu0 0
      %2423 = vmatpush1.bf16.msra.mxu0 %v822
      %2424 = vmatprep.subr.bf16.mxu0 0
      %2425 = vmatpush1.bf16.msra.mxu0 %v823
      %2426 = vmatprep.subr.bf16.mxu0 0
      %2427 = vmatpush1.bf16.msra.mxu0 0
      %2428 = vmatprep.subr.bf16.mxu0 0
      %2429 = vmatpush1.bf16.msra.mxu0 0
      %2430 = vmatprep.subr.bf16.mxu0 0
      %2431 = vmatpush1.bf16.msra.mxu0 0
      %2432 = vmatprep.subr.bf16.mxu0 0
      %2433 = vmatpush1.bf16.msra.mxu0 0
      %2434 = vmatprep.subr.bf16.mxu0 0
      %2435 = vmatpush1.bf16.msra.mxu0 0
      %2436 = vmatprep.subr.bf16.mxu0 0
      %2437 = vmatpush1.bf16.msra.mxu0 0
      %2438 = vmatprep.subr.bf16.mxu0 0
      %2439 = vmatpush1.bf16.msra.mxu0 0
      %2440 = vmatprep.subr.bf16.mxu0 0
      %2441 = vmatpush1.bf16.msra.mxu0 0
      %2442 = vmatprep.subr.bf16.mxu0 0
      %2443 = vmatpush1.bf16.msra.mxu0 0
      %2444 = vmatprep.subr.bf16.mxu0 0
      %2445 = vmatpush1.bf16.msra.mxu0 0
      %2446 = vmatprep.subr.bf16.mxu0 0
      %2447 = vmatpush1.bf16.msra.mxu0 0
      %2448 = vmatprep.subr.bf16.mxu0 0
      %2449 = vmatpush1.bf16.msra.mxu0 0
      %2450 = vmatprep.subr.bf16.mxu0 0
      %2451 = vmatpush1.bf16.msra.mxu0 0
      %2452 = vmatprep.subr.bf16.mxu0 0
      %2453 = vmatpush1.bf16.msra.mxu0 0
      %2454 = vmatprep.mubr.bf16.mxu0 0
      %2455 = vmatmul.mubr.bf16.gmra.mrb[0].mxu0 %v2338
      %v2456 = vpop.f32.mrb[0].mxu0
      %v2457 = vadd.f32 %v812, %v2456
      %v2458 = vpop.f32.mrb[0].mxu0
      %v2459 = vpop.f32.mrb[0].mxu0
      %v2460 = vadd.f32 %v812, %v2459
      %v2461 = vpop.f32.mrb[0].mxu0
      %2462 = vmatprep.mubr.bf16.mxu0 0
      %2463 = vmatmul.mubr.bf16.gmra.mrb[0].mxu0 %v2341
      %v2464 = vpop.f32.mrb[0].mxu0
      %v2465 = vadd.f32 %v812, %v2464
      %v2466 = vpop.f32.mrb[0].mxu0
      %v2467 = vpop.f32.mrb[0].mxu0
      %v2468 = vadd.f32 %v812, %v2467
      %v2469 = vpop.f32.mrb[0].mxu0
      %2470 = vmatprep.mubr.bf16.mxu0 0
      %2471 = vmatmul.mubr.bf16.gmra.mrb[0].mxu0 %v2344
      %v2472 = vpop.f32.mrb[0].mxu0
      %v2473 = vadd.f32 %v812, %v2472
      %v2474 = vpop.f32.mrb[0].mxu0
      %v2475 = vpop.f32.mrb[0].mxu0
      %v2476 = vadd.f32 %v812, %v2475
      %v2477 = vpop.f32.mrb[0].mxu0
      %2478 = vmatprep.mubr.bf16.mxu0 0
      %2479 = vmatmul.mubr.bf16.gmra.mrb[0].mxu0 %v2347
      %v2480 = vpop.f32.mrb[0].mxu0
      %v2481 = vadd.f32 %v812, %v2480
      %v2482 = vpop.f32.mrb[0].mxu0
      %v2483 = vpop.f32.mrb[0].mxu0
      %v2484 = vadd.f32 %v812, %v2483
      %v2485 = vpop.f32.mrb[0].mxu0
      %2486 = vdwg.mxu0
      %v2487 = vld [vmem:[%s9 + $0xc0] sm:$0xff]
      %v2488 = vld [vmem:[%s9 + $0xc8] sm:$0xff]
      %v2489 = vld [vmem:[%s9 + $0xd0] sm:$0xff]
      %v2490 = vld [vmem:[%s9 + $0xd8] sm:$0xff]
      %v2491 = vld [vmem:[%s9 + $0xe0] sm:$0xff]
      %v2492 = vld [vmem:[%s9 + $0xe8] sm:$0xff]
      %v2493 = vld [vmem:[%s9 + $0xf0] sm:$0xff]
      %v2494 = vld [vmem:[%s9 + $0xf8] sm:$0xff]
      %v2495 = vld [vmem:[%s10 + $0xc0] sm:$0xff]
      %v2496 = vld [vmem:[%s10 + $0xc8] sm:$0xff]
      %v2497 = vld [vmem:[%s10 + $0xd0] sm:$0xff]
      %v2498 = vld [vmem:[%s10 + $0xd8] sm:$0xff]
      %v2499 = vld [vmem:[%s10 + $0xe0] sm:$0xff]
      %v2500 = vld [vmem:[%s10 + $0xe8] sm:$0xff]
      %v2501 = vld [vmem:[%s10 + $0xf0] sm:$0xff]
      %v2502 = vld [vmem:[%s10 + $0xf8] sm:$0xff]
      %v2503 = vmul.f32 %v2457, %v2487
      %v2504 = vmul.f32 %v2460, %v2488
      %v2505 = vmul.f32 %v2465, %v2489
      %v2506 = vmul.f32 %v2468, %v2490
      %v2507 = vmul.f32 %v2473, %v2491
      %v2508 = vmul.f32 %v2476, %v2492
      %v2509 = vmul.f32 %v2481, %v2493
      %v2510 = vmul.f32 %v2484, %v2494
      %v2511 = vadd.f32 %v2503, %v2495
      %v2512 = vadd.f32 %v2504, %v2496
      %v2513 = vadd.f32 %v2505, %v2497
      %v2514 = vadd.f32 %v2506, %v2498
      %v2515 = vadd.f32 %v2507, %v2499
      %v2516 = vadd.f32 %v2508, %v2500
      %v2517 = vadd.f32 %v2509, %v2501
      %v2518 = vadd.f32 %v2510, %v2502
      %v2519 = vld [vmem:[%s11] sm:$0xff]
      %v2520 = vld [vmem:[%s11 + $0x8] sm:$0xff]
      %v2521 = vld [vmem:[%s11 + $0x10] sm:$0xff]
      %v2522 = vld [vmem:[%s11 + $0x18] sm:$0xff]
      %v2523 = vld [vmem:[%s11 + $0x20] sm:$0xff]
      %v2524 = vld [vmem:[%s11 + $0x28] sm:$0xff]
      %v2525 = vld [vmem:[%s11 + $0x30] sm:$0xff]
      %v2526 = vld [vmem:[%s11 + $0x38] sm:$0xff]
      %v2527 = vld [vmem:[%s11 + $0x40] sm:$0xff]
      %v2528 = vld [vmem:[%s11 + $0x48] sm:$0xff]
      %v2529 = vld [vmem:[%s11 + $0x50] sm:$0xff]
      %v2530 = vld [vmem:[%s11 + $0x58] sm:$0xff]
      %v2531 = vld [vmem:[%s11 + $0x60] sm:$0xff]
      %v2532 = vld [vmem:[%s11 + $0x68] sm:$0xff]
      %v2533 = vld [vmem:[%s11 + $0x70] sm:$0xff]
      %v2534 = vld [vmem:[%s11 + $0x78] sm:$0xff]
      %2535 = vmatprep.subr.mxu0 0.0
      %2536 = vmatpush1.msra.mxu0 %v2519
      %2537 = vmatprep.subr.mxu0 0.0
      %2538 = vmatpush1.msra.mxu0 %v2520
      %2539 = vmatprep.subr.mxu0 0.0
      %2540 = vmatpush1.msra.mxu0 %v2521
      %2541 = vmatprep.subr.mxu0 0.0
      %2542 = vmatpush1.msra.mxu0 %v2522
      %2543 = vmatprep.subr.mxu0 0.0
      %2544 = vmatpush1.msra.mxu0 %v2523
      %2545 = vmatprep.subr.mxu0 0.0
      %2546 = vmatpush1.msra.mxu0 %v2524
      %2547 = vmatprep.subr.mxu0 0.0
      %2548 = vmatpush1.msra.mxu0 %v2525
      %2549 = vmatprep.subr.mxu0 0.0
      %2550 = vmatpush1.msra.mxu0 %v2526
      %2551 = vmatprep.subr.mxu0 0.0
      %2552 = vmatpush1.msra.mxu0 %v2527
      %2553 = vmatprep.subr.mxu0 0.0
      %2554 = vmatpush1.msra.mxu0 %v2528
      %2555 = vmatprep.subr.mxu0 0.0
      %2556 = vmatpush1.msra.mxu0 %v2529
      %2557 = vmatprep.subr.mxu0 0.0
      %2558 = vmatpush1.msra.mxu0 %v2530
      %2559 = vmatprep.subr.mxu0 0.0
      %2560 = vmatpush1.msra.mxu0 %v2531
      %2561 = vmatprep.subr.mxu0 0.0
      %2562 = vmatpush1.msra.mxu0 %v2532
      %2563 = vmatprep.subr.mxu0 0.0
      %2564 = vmatpush1.msra.mxu0 %v2533
      %2565 = vmatprep.subr.mxu0 0.0
      %2566 = vmatpush1.msra.mxu0 %v2534
      %2567 = vmatprep.subr.mxu0 0.0
      %2568 = vmatpush1.msra.mxu0 0.0
      %2569 = vmatprep.subr.mxu0 0.0
      %2570 = vmatpush1.msra.mxu0 0.0
      %2571 = vmatprep.subr.mxu0 0.0
      %2572 = vmatpush1.msra.mxu0 0.0
      %2573 = vmatprep.subr.mxu0 0.0
      %2574 = vmatpush1.msra.mxu0 0.0
      %2575 = vmatprep.subr.mxu0 0.0
      %2576 = vmatpush1.msra.mxu0 0.0
      %2577 = vmatprep.subr.mxu0 0.0
      %2578 = vmatpush1.msra.mxu0 0.0
      %2579 = vmatprep.subr.mxu0 0.0
      %2580 = vmatpush1.msra.mxu0 0.0
      %2581 = vmatprep.subr.mxu0 0.0
      %2582 = vmatpush1.msra.mxu0 0.0
      %2583 = vmatprep.subr.mxu0 0.0
      %2584 = vmatpush1.msra.mxu0 0.0
      %2585 = vmatprep.subr.mxu0 0.0
      %2586 = vmatpush1.msra.mxu0 0.0
      %2587 = vmatprep.subr.mxu0 0.0
      %2588 = vmatpush1.msra.mxu0 0.0
      %2589 = vmatprep.subr.mxu0 0.0
      %2590 = vmatpush1.msra.mxu0 0.0
      %2591 = vmatprep.subr.mxu0 0.0
      %2592 = vmatpush1.msra.mxu0 0.0
      %2593 = vmatprep.subr.mxu0 0.0
      %2594 = vmatpush1.msra.mxu0 0.0
      %2595 = vmatprep.subr.mxu0 0.0
      %2596 = vmatpush1.msra.mxu0 0.0
      %2597 = vmatprep.subr.mxu0 0.0
      %2598 = vmatpush1.msra.mxu0 0.0
      %2599 = vmatprep.mubr.f32.mxu0 0.0
      %2600 = vmatmul.mubr.f32.gmra.mrb[0].mxu0 %v2511
      %v2601 = vpop.f32.mrb[0].mxu0
      %v2602 = vadd.f32 0.0, %v2601
      %v2603 = vpop.f32.mrb[0].mxu0
      %2604 = vmatprep.mubr.f32.mxu0 0.0
      %2605 = vmatmul.mubr.f32.gmra.mrb[0].mxu0 %v2512
      %v2606 = vpop.f32.mrb[0].mxu0
      %v2607 = vadd.f32 0.0, %v2606
      %v2608 = vpop.f32.mrb[0].mxu0
      %2609 = vmatprep.mubr.f32.mxu0 0.0
      %2610 = vmatmul.mubr.f32.gmra.mrb[0].mxu0 %v2513
      %v2611 = vpop.f32.mrb[0].mxu0
      %v2612 = vadd.f32 0.0, %v2611
      %v2613 = vpop.f32.mrb[0].mxu0
      %2614 = vmatprep.mubr.f32.mxu0 0.0
      %2615 = vmatmul.mubr.f32.gmra.mrb[0].mxu0 %v2514
      %v2616 = vpop.f32.mrb[0].mxu0
      %v2617 = vadd.f32 0.0, %v2616
      %v2618 = vpop.f32.mrb[0].mxu0
      %2619 = vmatprep.mubr.f32.mxu0 0.0
      %2620 = vmatmul.mubr.f32.gmra.mrb[0].mxu0 %v2515
      %v2621 = vpop.f32.mrb[0].mxu0
      %v2622 = vadd.f32 0.0, %v2621
      %v2623 = vpop.f32.mrb[0].mxu0
      %2624 = vmatprep.mubr.f32.mxu0 0.0
      %2625 = vmatmul.mubr.f32.gmra.mrb[0].mxu0 %v2516
      %v2626 = vpop.f32.mrb[0].mxu0
      %v2627 = vadd.f32 0.0, %v2626
      %v2628 = vpop.f32.mrb[0].mxu0
      %2629 = vmatprep.mubr.f32.mxu0 0.0
      %2630 = vmatmul.mubr.f32.gmra.mrb[0].mxu0 %v2517
      %v2631 = vpop.f32.mrb[0].mxu0
      %v2632 = vadd.f32 0.0, %v2631
      %v2633 = vpop.f32.mrb[0].mxu0
      %2634 = vmatprep.mubr.f32.mxu0 0.0
      %2635 = vmatmul.mubr.f32.gmra.mrb[0].mxu0 %v2518
      %v2636 = vpop.f32.mrb[0].mxu0
      %v2637 = vadd.f32 0.0, %v2636
      %v2638 = vpop.f32.mrb[0].mxu0
      %2639 = vdwg.mxu0
      %v2640 = vsub.f32 0.0, %v2602
      %v2641 = vsub.f32 0.0, %v2607
      %v2642 = vsub.f32 0.0, %v2612
      %v2643 = vsub.f32 0.0, %v2617
      %v2644 = vsub.f32 0.0, %v2622
      %v2645 = vsub.f32 0.0, %v2627
      %v2646 = vsub.f32 0.0, %v2632
      %v2647 = vsub.f32 0.0, %v2637
      %v2648 = vmul.f32 %v2640, 1.442695
      %v2649 = vpow.pop %v2648
      %v2650 = vmul.f32 %v2641, 1.442695
      %v2651 = vpow.pop %v2650
      %v2652 = vmul.f32 %v2642, 1.442695
      %v2653 = vpow.pop %v2652
      %v2654 = vmul.f32 %v2643, 1.442695
      %v2655 = vpow.pop %v2654
      %v2656 = vmul.f32 %v2644, 1.442695
      %v2657 = vpow.pop %v2656
      %v2658 = vmul.f32 %v2645, 1.442695
      %v2659 = vpow.pop %v2658
      %v2660 = vmul.f32 %v2646, 1.442695
      %v2661 = vpow.pop %v2660
      %v2662 = vmul.f32 %v2647, 1.442695
      %v2663 = vpow.pop %v2662
      %v2664 = vadd.f32 %v2649, 1.0
      %v2665 = vadd.f32 %v2651, 1.0
      %v2666 = vadd.f32 %v2653, 1.0
      %v2667 = vadd.f32 %v2655, 1.0
      %v2668 = vadd.f32 %v2657, 1.0
      %v2669 = vadd.f32 %v2659, 1.0
      %v2670 = vadd.f32 %v2661, 1.0
      %v2671 = vadd.f32 %v2663, 1.0
      %v2672 = vrcp.pop %v2664
      %v2673 = vrcp.pop %v2665
      %v2674 = vrcp.pop %v2666
      %v2675 = vrcp.pop %v2667
      %v2676 = vrcp.pop %v2668
      %v2677 = vrcp.pop %v2669
      %v2678 = vrcp.pop %v2670
      %v2679 = vrcp.pop %v2671
      %v2680 = vsel %vm1098, %v2672, %v2602
      %v2681 = vsel %vm1098, %v2673, %v2607
      %v2682 = vsel %vm1098, %v2674, %v2612
      %v2683 = vsel %vm1098, %v2675, %v2617
      %v2684 = vsel %vm1098, %v2676, %v2622
      %v2685 = vsel %vm1098, %v2677, %v2627
      %v2686 = vsel %vm1098, %v2678, %v2632
      %v2687 = vsel %vm1098, %v2679, %v2637
      %2688 = vst [vmem:[%s529 + $0xc0] sm:$0xff] %v2680
      %2689 = vst [vmem:[%s529 + $0xc8] sm:$0xff] %v2681
      %2690 = vst [vmem:[%s529 + $0xd0] sm:$0xff] %v2682
      %2691 = vst [vmem:[%s529 + $0xd8] sm:$0xff] %v2683
      %2692 = vst [vmem:[%s529 + $0xe0] sm:$0xff] %v2684
      %2693 = vst [vmem:[%s529 + $0xe8] sm:$0xff] %v2685
      %2694 = vst [vmem:[%s529 + $0xf0] sm:$0xff] %v2686
      %2695 = vst [vmem:[%s529 + $0xf8] sm:$0xff] %v2687
      %v2697 = vlaneseq
      %v2698 = vshrl.u32 %v2697, 7
      %v2699 = vsub.s32 0, %v2698
      %v2700 = vrot.slane %v593, %v2699
      %v2702 = vadd.f32 %v2414, %v2700
      %v2703 = vadd.f32 %v2415, %v2700
      %v2704 = vadd.f32 %v2416, %v2700
      %v2705 = vadd.f32 %v2417, %v2700
      %v2706 = vadd.f32 %v2418, %v2700
      %v2707 = vadd.f32 %v2419, %v2700
      %v2708 = vadd.f32 %v2420, %v2700
      %v2709 = vadd.f32 %v2421, %v2700
      %v2710 = vmax.f32 %v2702, 0.0
      %v2711 = vmax.f32 %v2703, 0.0
      %v2712 = vmax.f32 %v2704, 0.0
      %v2713 = vmax.f32 %v2705, 0.0
      %v2714 = vmax.f32 %v2706, 0.0
      %v2715 = vmax.f32 %v2707, 0.0
      %v2716 = vmax.f32 %v2708, 0.0
      %v2717 = vmax.f32 %v2709, 0.0
      %v2718 = vpack.c.bf16 %v2711, %v2710
      %v2719 = vpack.c.bf16 %v2713, %v2712
      %v2720 = vpack.c.bf16 %v2715, %v2714
      %v2721 = vpack.c.bf16 %v2717, %v2716
      %v2723 = vlaneseq
      %v2724 = vshrl.u32 %v2723, 7
      %v2725 = vsub.s32 0, %v2724
      %v2726 = vrot.slane %v595, %v2725
      %v2736 = vunpack.c.l.b16 %v584
      %v2737 = vunpack.c.l.b16 %v585
      %v2738 = vunpack.c.l.b16 %v586
      %v2739 = vunpack.c.l.b16 %v587
      %v2740 = vunpack.c.l.b16 %v588
      %v2741 = vunpack.c.l.b16 %v589
      %v2742 = vunpack.c.l.b16 %v590
      %v2743 = vunpack.c.l.b16 %v591
      %v2744 = vpack.c.b16 %v2737, %v2736
      %v2745 = vpack.c.b16 %v2739, %v2738
      %v2746 = vpack.c.b16 %v2741, %v2740
      %v2747 = vpack.c.b16 %v2743, %v2742
      %v2753 = vsel %vm718, %v2718, 0
      %v2756 = vsel %vm718, %v2719, 0
      %v2759 = vsel %vm718, %v2720, 0
      %v2762 = vsel %vm718, %v2721, 0
      %2764 = vmatprep.subr.bf16.mxu0 0
      %2765 = vmatpush1.bf16.msra.mxu0 %v2744
      %2766 = vmatprep.subr.bf16.mxu0 0
      %2767 = vmatpush1.bf16.msra.mxu0 %v2745
      %2768 = vmatprep.subr.bf16.mxu0 0
      %2769 = vmatpush1.bf16.msra.mxu0 %v2746
      %2770 = vmatprep.subr.bf16.mxu0 0
      %2771 = vmatpush1.bf16.msra.mxu0 %v2747
      %2772 = vmatprep.subr.bf16.mxu0 0
      %2773 = vmatpush1.bf16.msra.mxu0 0
      %2774 = vmatprep.subr.bf16.mxu0 0
      %2775 = vmatpush1.bf16.msra.mxu0 0
      %2776 = vmatprep.subr.bf16.mxu0 0
      %2777 = vmatpush1.bf16.msra.mxu0 0
      %2778 = vmatprep.subr.bf16.mxu0 0
      %2779 = vmatpush1.bf16.msra.mxu0 0
      %2780 = vmatprep.subr.bf16.mxu0 0
      %2781 = vmatpush1.bf16.msra.mxu0 0
      %2782 = vmatprep.subr.bf16.mxu0 0
      %2783 = vmatpush1.bf16.msra.mxu0 0
      %2784 = vmatprep.subr.bf16.mxu0 0
      %2785 = vmatpush1.bf16.msra.mxu0 0
      %2786 = vmatprep.subr.bf16.mxu0 0
      %2787 = vmatpush1.bf16.msra.mxu0 0
      %2788 = vmatprep.subr.bf16.mxu0 0
      %2789 = vmatpush1.bf16.msra.mxu0 0
      %2790 = vmatprep.subr.bf16.mxu0 0
      %2791 = vmatpush1.bf16.msra.mxu0 0
      %2792 = vmatprep.subr.bf16.mxu0 0
      %2793 = vmatpush1.bf16.msra.mxu0 0
      %2794 = vmatprep.subr.bf16.mxu0 0
      %2795 = vmatpush1.bf16.msra.mxu0 0
      %2796 = vmatprep.mubr.bf16.mxu0 0
      %2797 = vmatmul.mubr.bf16.gmra.mrb[0].mxu0 %v2753
      %v2798 = vpop.f32.mrb[0].mxu0
      %v2799 = vadd.f32 %v2726, %v2798
      %v2800 = vpop.f32.mrb[0].mxu0
      %v2801 = vpop.f32.mrb[0].mxu0
      %v2802 = vadd.f32 %v2726, %v2801
      %v2803 = vpop.f32.mrb[0].mxu0
      %2804 = vmatprep.mubr.bf16.mxu0 0
      %2805 = vmatmul.mubr.bf16.gmra.mrb[0].mxu0 %v2756
      %v2806 = vpop.f32.mrb[0].mxu0
      %v2807 = vadd.f32 %v2726, %v2806
      %v2808 = vpop.f32.mrb[0].mxu0
      %v2809 = vpop.f32.mrb[0].mxu0
      %v2810 = vadd.f32 %v2726, %v2809
      %v2811 = vpop.f32.mrb[0].mxu0
      %2812 = vmatprep.mubr.bf16.mxu0 0
      %2813 = vmatmul.mubr.bf16.gmra.mrb[0].mxu0 %v2759
      %v2814 = vpop.f32.mrb[0].mxu0
      %v2815 = vadd.f32 %v2726, %v2814
      %v2816 = vpop.f32.mrb[0].mxu0
      %v2817 = vpop.f32.mrb[0].mxu0
      %v2818 = vadd.f32 %v2726, %v2817
      %v2819 = vpop.f32.mrb[0].mxu0
      %2820 = vmatprep.mubr.bf16.mxu0 0
      %2821 = vmatmul.mubr.bf16.gmra.mrb[0].mxu0 %v2762
      %v2822 = vpop.f32.mrb[0].mxu0
      %v2823 = vadd.f32 %v2726, %v2822
      %v2824 = vpop.f32.mrb[0].mxu0
      %v2825 = vpop.f32.mrb[0].mxu0
      %v2826 = vadd.f32 %v2726, %v2825
      %v2827 = vpop.f32.mrb[0].mxu0
      %2828 = vdwg.mxu0
      %v2829 = vld [vmem:[%s12] sm:$0xff]
      %v2830 = vld [vmem:[%s12 + $0x8] sm:$0xff]
      %v2831 = vld [vmem:[%s12 + $0x10] sm:$0xff]
      %v2832 = vld [vmem:[%s12 + $0x18] sm:$0xff]
      %v2833 = vld [vmem:[%s12 + $0x20] sm:$0xff]
      %v2834 = vld [vmem:[%s12 + $0x28] sm:$0xff]
      %v2835 = vld [vmem:[%s12 + $0x30] sm:$0xff]
      %v2836 = vld [vmem:[%s12 + $0x38] sm:$0xff]
      %v2837 = vld [vmem:[%s13] sm:$0xff]
      %v2838 = vld [vmem:[%s13 + $0x8] sm:$0xff]
      %v2839 = vld [vmem:[%s13 + $0x10] sm:$0xff]
      %v2840 = vld [vmem:[%s13 + $0x18] sm:$0xff]
      %v2841 = vld [vmem:[%s13 + $0x20] sm:$0xff]
      %v2842 = vld [vmem:[%s13 + $0x28] sm:$0xff]
      %v2843 = vld [vmem:[%s13 + $0x30] sm:$0xff]
      %v2844 = vld [vmem:[%s13 + $0x38] sm:$0xff]
      %v2845 = vmul.f32 %v2799, %v2829
      %v2846 = vmul.f32 %v2802, %v2830
      %v2847 = vmul.f32 %v2807, %v2831
      %v2848 = vmul.f32 %v2810, %v2832
      %v2849 = vmul.f32 %v2815, %v2833
      %v2850 = vmul.f32 %v2818, %v2834
      %v2851 = vmul.f32 %v2823, %v2835
      %v2852 = vmul.f32 %v2826, %v2836
      %v2853 = vadd.f32 %v2845, %v2837
      %v2854 = vadd.f32 %v2846, %v2838
      %v2855 = vadd.f32 %v2847, %v2839
      %v2856 = vadd.f32 %v2848, %v2840
      %v2857 = vadd.f32 %v2849, %v2841
      %v2858 = vadd.f32 %v2850, %v2842
      %v2859 = vadd.f32 %v2851, %v2843
      %v2860 = vadd.f32 %v2852, %v2844
      %v2861 = vld [vmem:[%s14] sm:$0xff]
      %v2862 = vld [vmem:[%s14 + $0x8] sm:$0xff]
      %v2863 = vld [vmem:[%s14 + $0x10] sm:$0xff]
      %v2864 = vld [vmem:[%s14 + $0x18] sm:$0xff]
      %v2865 = vld [vmem:[%s14 + $0x20] sm:$0xff]
      %v2866 = vld [vmem:[%s14 + $0x28] sm:$0xff]
      %v2867 = vld [vmem:[%s14 + $0x30] sm:$0xff]
      %v2868 = vld [vmem:[%s14 + $0x38] sm:$0xff]
      %v2869 = vld [vmem:[%s14 + $0x40] sm:$0xff]
      %v2870 = vld [vmem:[%s14 + $0x48] sm:$0xff]
      %v2871 = vld [vmem:[%s14 + $0x50] sm:$0xff]
      %v2872 = vld [vmem:[%s14 + $0x58] sm:$0xff]
      %v2873 = vld [vmem:[%s14 + $0x60] sm:$0xff]
      %v2874 = vld [vmem:[%s14 + $0x68] sm:$0xff]
      %v2875 = vld [vmem:[%s14 + $0x70] sm:$0xff]
      %v2876 = vld [vmem:[%s14 + $0x78] sm:$0xff]
      %2877 = vmatprep.subr.mxu0 0.0
      %2878 = vmatpush1.msra.mxu0 %v2861
      %2879 = vmatprep.subr.mxu0 0.0
      %2880 = vmatpush1.msra.mxu0 %v2862
      %2881 = vmatprep.subr.mxu0 0.0
      %2882 = vmatpush1.msra.mxu0 %v2863
      %2883 = vmatprep.subr.mxu0 0.0
      %2884 = vmatpush1.msra.mxu0 %v2864
      %2885 = vmatprep.subr.mxu0 0.0
      %2886 = vmatpush1.msra.mxu0 %v2865
      %2887 = vmatprep.subr.mxu0 0.0
      %2888 = vmatpush1.msra.mxu0 %v2866
      %2889 = vmatprep.subr.mxu0 0.0
      %2890 = vmatpush1.msra.mxu0 %v2867
      %2891 = vmatprep.subr.mxu0 0.0
      %2892 = vmatpush1.msra.mxu0 %v2868
      %2893 = vmatprep.subr.mxu0 0.0
      %2894 = vmatpush1.msra.mxu0 %v2869
      %2895 = vmatprep.subr.mxu0 0.0
      %2896 = vmatpush1.msra.mxu0 %v2870
      %2897 = vmatprep.subr.mxu0 0.0
      %2898 = vmatpush1.msra.mxu0 %v2871
      %2899 = vmatprep.subr.mxu0 0.0
      %2900 = vmatpush1.msra.mxu0 %v2872
      %2901 = vmatprep.subr.mxu0 0.0
      %2902 = vmatpush1.msra.mxu0 %v2873
      %2903 = vmatprep.subr.mxu0 0.0
      %2904 = vmatpush1.msra.mxu0 %v2874
      %2905 = vmatprep.subr.mxu0 0.0
      %2906 = vmatpush1.msra.mxu0 %v2875
      %2907 = vmatprep.subr.mxu0 0.0
      %2908 = vmatpush1.msra.mxu0 %v2876
      %2909 = vmatprep.subr.mxu0 0.0
      %2910 = vmatpush1.msra.mxu0 0.0
      %2911 = vmatprep.subr.mxu0 0.0
      %2912 = vmatpush1.msra.mxu0 0.0
      %2913 = vmatprep.subr.mxu0 0.0
      %2914 = vmatpush1.msra.mxu0 0.0
      %2915 = vmatprep.subr.mxu0 0.0
      %2916 = vmatpush1.msra.mxu0 0.0
      %2917 = vmatprep.subr.mxu0 0.0
      %2918 = vmatpush1.msra.mxu0 0.0
      %2919 = vmatprep.subr.mxu0 0.0
      %2920 = vmatpush1.msra.mxu0 0.0
      %2921 = vmatprep.subr.mxu0 0.0
      %2922 = vmatpush1.msra.mxu0 0.0
      %2923 = vmatprep.subr.mxu0 0.0
      %2924 = vmatpush1.msra.mxu0 0.0
      %2925 = vmatprep.subr.mxu0 0.0
      %2926 = vmatpush1.msra.mxu0 0.0
      %2927 = vmatprep.subr.mxu0 0.0
      %2928 = vmatpush1.msra.mxu0 0.0
      %2929 = vmatprep.subr.mxu0 0.0
      %2930 = vmatpush1.msra.mxu0 0.0
      %2931 = vmatprep.subr.mxu0 0.0
      %2932 = vmatpush1.msra.mxu0 0.0
      %2933 = vmatprep.subr.mxu0 0.0
      %2934 = vmatpush1.msra.mxu0 0.0
      %2935 = vmatprep.subr.mxu0 0.0
      %2936 = vmatpush1.msra.mxu0 0.0
      %2937 = vmatprep.subr.mxu0 0.0
      %2938 = vmatpush1.msra.mxu0 0.0
      %2939 = vmatprep.subr.mxu0 0.0
      %2940 = vmatpush1.msra.mxu0 0.0
      %2941 = vmatprep.mubr.f32.mxu0 0.0
      %2942 = vmatmul.mubr.f32.gmra.mrb[0].mxu0 %v2853
      %v2943 = vpop.f32.mrb[0].mxu0
      %v2944 = vadd.f32 0.0, %v2943
      %v2945 = vpop.f32.mrb[0].mxu0
      %2946 = vmatprep.mubr.f32.mxu0 0.0
      %2947 = vmatmul.mubr.f32.gmra.mrb[0].mxu0 %v2854
      %v2948 = vpop.f32.mrb[0].mxu0
      %v2949 = vadd.f32 0.0, %v2948
      %v2950 = vpop.f32.mrb[0].mxu0
      %2951 = vmatprep.mubr.f32.mxu0 0.0
      %2952 = vmatmul.mubr.f32.gmra.mrb[0].mxu0 %v2855
      %v2953 = vpop.f32.mrb[0].mxu0
      %v2954 = vadd.f32 0.0, %v2953
      %v2955 = vpop.f32.mrb[0].mxu0
      %2956 = vmatprep.mubr.f32.mxu0 0.0
      %2957 = vmatmul.mubr.f32.gmra.mrb[0].mxu0 %v2856
      %v2958 = vpop.f32.mrb[0].mxu0
      %v2959 = vadd.f32 0.0, %v2958
      %v2960 = vpop.f32.mrb[0].mxu0
      %2961 = vmatprep.mubr.f32.mxu0 0.0
      %2962 = vmatmul.mubr.f32.gmra.mrb[0].mxu0 %v2857
      %v2963 = vpop.f32.mrb[0].mxu0
      %v2964 = vadd.f32 0.0, %v2963
      %v2965 = vpop.f32.mrb[0].mxu0
      %2966 = vmatprep.mubr.f32.mxu0 0.0
      %2967 = vmatmul.mubr.f32.gmra.mrb[0].mxu0 %v2858
      %v2968 = vpop.f32.mrb[0].mxu0
      %v2969 = vadd.f32 0.0, %v2968
      %v2970 = vpop.f32.mrb[0].mxu0
      %2971 = vmatprep.mubr.f32.mxu0 0.0
      %2972 = vmatmul.mubr.f32.gmra.mrb[0].mxu0 %v2859
      %v2973 = vpop.f32.mrb[0].mxu0
      %v2974 = vadd.f32 0.0, %v2973
      %v2975 = vpop.f32.mrb[0].mxu0
      %2976 = vmatprep.mubr.f32.mxu0 0.0
      %2977 = vmatmul.mubr.f32.gmra.mrb[0].mxu0 %v2860
      %v2978 = vpop.f32.mrb[0].mxu0
      %v2979 = vadd.f32 0.0, %v2978
      %v2980 = vpop.f32.mrb[0].mxu0
      %2981 = vdwg.mxu0
      %v2982 = vsub.f32 0.0, %v2944
      %v2983 = vsub.f32 0.0, %v2949
      %v2984 = vsub.f32 0.0, %v2954
      %v2985 = vsub.f32 0.0, %v2959
      %v2986 = vsub.f32 0.0, %v2964
      %v2987 = vsub.f32 0.0, %v2969
      %v2988 = vsub.f32 0.0, %v2974
      %v2989 = vsub.f32 0.0, %v2979
      %v2990 = vmul.f32 %v2982, 1.442695
      %v2991 = vpow.pop %v2990
      %v2992 = vmul.f32 %v2983, 1.442695
      %v2993 = vpow.pop %v2992
      %v2994 = vmul.f32 %v2984, 1.442695
      %v2995 = vpow.pop %v2994
      %v2996 = vmul.f32 %v2985, 1.442695
      %v2997 = vpow.pop %v2996
      %v2998 = vmul.f32 %v2986, 1.442695
      %v2999 = vpow.pop %v2998
      %v3000 = vmul.f32 %v2987, 1.442695
      %v3001 = vpow.pop %v3000
      %v3002 = vmul.f32 %v2988, 1.442695
      %v3003 = vpow.pop %v3002
      %v3004 = vmul.f32 %v2989, 1.442695
      %v3005 = vpow.pop %v3004
      %v3006 = vadd.f32 %v2991, 1.0
      %v3007 = vadd.f32 %v2993, 1.0
      %v3008 = vadd.f32 %v2995, 1.0
      %v3009 = vadd.f32 %v2997, 1.0
      %v3010 = vadd.f32 %v2999, 1.0
      %v3011 = vadd.f32 %v3001, 1.0
      %v3012 = vadd.f32 %v3003, 1.0
      %v3013 = vadd.f32 %v3005, 1.0
      %v3014 = vrcp.pop %v3006
      %v3015 = vrcp.pop %v3007
      %v3016 = vrcp.pop %v3008
      %v3017 = vrcp.pop %v3009
      %v3018 = vrcp.pop %v3010
      %v3019 = vrcp.pop %v3011
      %v3020 = vrcp.pop %v3012
      %v3021 = vrcp.pop %v3013
      %v3022 = vsel %vm539, 1, 0
      %vm3023 = vcmp.eq.s32.totalorder %v3022, 1
      %v3024 = vsel %vm3023, %v3014, %v2944
      %v3025 = vsel %vm3023, %v3015, %v2949
      %v3026 = vsel %vm3023, %v3016, %v2954
      %v3027 = vsel %vm3023, %v3017, %v2959
      %v3028 = vsel %vm3023, %v3018, %v2964
      %v3029 = vsel %vm3023, %v3019, %v2969
      %v3030 = vsel %vm3023, %v3020, %v2974
      %v3031 = vsel %vm3023, %v3021, %v2979
      %3032 = vst [vmem:[%s534] sm:$0xff] %v3024
      %3033 = vst [vmem:[%s534 + $0x8] sm:$0xff] %v3025
      %3034 = vst [vmem:[%s534 + $0x10] sm:$0xff] %v3026
      %3035 = vst [vmem:[%s534 + $0x18] sm:$0xff] %v3027
      %3036 = vst [vmem:[%s534 + $0x20] sm:$0xff] %v3028
      %3037 = vst [vmem:[%s534 + $0x28] sm:$0xff] %v3029
      %3038 = vst [vmem:[%s534 + $0x30] sm:$0xff] %v3030
      %3039 = vst [vmem:[%s534 + $0x38] sm:$0xff] %v3031
      %p3040 = scmp.lt.s32.totalorder %s28, 1
      %s3041 = scalar_select %p3040, %s28, 1
      %s3042 = smul.addr %s3041, 32
      %s3043 = smul.addr %s3042, 8
      %s3044 = scalar_lea.vmem %s15, %s3043
      %p3045 = scmp.lt.s32.totalorder %s28, 1
      %s3046 = scalar_select %p3045, %s28, 1
      %s3047 = smul.addr %s3046, 8
      %s3048 = smul.addr %s3047, 8
      %s3049 = scalar_lea.vmem %s16, %s3048
      // Predicated region
      $region81: #{hand_detection.1} parent=79 // pred_check
        %p3050 = pneg %p366
      $region82: #{hand_detection.1} parent=79 // pred_check_branch
        %3052 = sbr.rel (%p3050) target = $region84
      $region83: #{hand_detection.1} parent=79 // pred_region
        _
      $region84: #{hand_detection.1} parent=79 // pred_fallthru
        _
      // Predicated region
      $region85: #{hand_detection.1} parent=79 // pred_check
        %p3053 = pneg %p392
      $region86: #{hand_detection.1} parent=79 // pred_check_branch
        %3055 = sbr.rel (%p3053) target = $region88
      $region87: #{hand_detection.1} parent=79 // pred_region
        _
      $region88: #{hand_detection.1} parent=79 // pred_fallthru
        _
    $region80: #{hand_detection.1} parent=5 // pred_fallthru
      _
    %p3056 = scmp.le.s32.totalorder 2, %s23
    // Predicated region
    $region89: #{hand_detection.1} parent=5 // pred_check
      %p3057 = pneg %p3056
    $region90: #{hand_detection.1} parent=5 // pred_check_branch
      %3059 = sbr.rel (%p3057) target = $region92
    $region91: #{hand_detection.1} parent=5 // pred_region
      %s3060 = ssub.s32 %s23, 2
      // Predicated region
      $region93: #{hand_detection.1} parent=91 // pred_check
        %p3061 = pneg %p372
      $region94: #{hand_detection.1} parent=91 // pred_check_branch
        %3063 = sbr.rel (%p3061) target = $region96
      $region95: #{hand_detection.1} parent=91 // pred_region
        %p3064 = scmp.lt.s32.totalorder %s29, 1
        %s3065 = scalar_select %p3064, %s29, 1
        %s3066 = smul.addr %s3065, 32
        %s3067 = smul.addr %s3066, 8
        %s3068 = scalar_lea.vmem %s15, %s3067
      $region96: #{hand_detection.1} parent=91 // pred_fallthru
        _
      // Predicated region
      $region97: #{hand_detection.1} parent=91 // pred_check
        %p3069 = pneg %p398
      $region98: #{hand_detection.1} parent=91 // pred_check_branch
        %3071 = sbr.rel (%p3069) target = $region100
      $region99: #{hand_detection.1} parent=91 // pred_region
        %p3072 = scmp.lt.s32.totalorder %s29, 1
        %s3073 = scalar_select %p3072, %s29, 1
        %s3074 = smul.addr %s3073, 8
        %s3075 = smul.addr %s3074, 8
        %s3076 = scalar_lea.vmem %s16, %s3075
      $region100: #{hand_detection.1} parent=91 // pred_fallthru
        _
    $region92: #{hand_detection.1} parent=5 // pred_fallthru
      _
  $region6: #{hand_detection.1} parent=0 // loop_footer
    %s27 = sadd.s32 1, %s23
  $region7: #{hand_detection.1} parent=0 // loop_footer_branch
    %22 = sbr.rel target = $region3
  $region8: #{hand_detection.1} parent=0 // loop_exit
    _

</llo_original>
